<compile_context>
chip_gen: v6e
topology: v6e:2x2x1
jax: 0.10.0
libtpu: 0.0.40
codegen_flags: <defaults>
</compile_context>

<pallas_src>
import functools
import math

import jax
import jax.numpy as jnp
from jax.experimental import pallas as pl
from jax.experimental.pallas import tpu as pltpu  # noqa: F401  (TPU backend)


# ----------------------------------------------------------------------------
# Config (small, deterministic shapes consistent with the module's forward)
# ----------------------------------------------------------------------------
class Config:
    B = 2
    seq_len = 8          # L
    pred_len = 8         # must equal L for the torch code's Denormalization
    enc_in = 4           # D (n_vars)
    c_out = 4
    d_model = 32
    n_heads = 4
    d_ff = 64            # also used as d_keys in ReprogrammingLayer
    llm_dim = 128        # GPT-2 dim shrunk for the synthetic demo (real: 768)
    vocab_size = 512     # shrunk for the synthetic demo (real: 50257)
    num_tokens = 256     # shrunk for the synthetic demo (real: 1024)
    patch_len = 4
    stride = 2
    dropout = 0.1        # eval mode -> identity
    wo_ts = False
    dt = 56
    d_fusion = 168 - c_out * int(wo_ts)
    image_dim = d_fusion - 2 * dt - (0 if wo_ts else c_out)  # = 52


# ----------------------------------------------------------------------------
# Single fused kernel: full forward for the whole (batch-stacked) input
# ----------------------------------------------------------------------------
def _fused_forward_kernel(
        x_ref, prompt_ref, image_ref, kT_ref, v_ref, peT_ref, place_ref,
        rqT_ref, rqb_ref, roT_ref, rob_ref,
        wtv_ref, wpv_ref, vpi_ref, vpx_ref, vpb_ref,
        fqkvT_ref, fqkvb_ref, abias_ref, moT_ref, mob_ref,
        lng_ref, lnb_ref, phT_ref, phb_ref, y_ref,
        *, n_heads, d_keys, d_model, head_dim, batch, seq_len, patch_len):
    f32, bf16 = jnp.float32, jnp.bfloat16

    def softmax_rows(s):
        s = s - jnp.max(s, axis=-1, keepdims=True)
        p = jnp.exp(s)
        return p * pl.reciprocal(jnp.sum(p, axis=-1, keepdims=True), approx=True)

    # ---- Normalization (faithful to the reference's double-normalization) --
    x = x_ref[...]                                          # [B*L, D] f32
    xn_parts, mu_parts, std_parts = [], [], []
    for b in range(batch):
        xb = x[b * seq_len:(b + 1) * seq_len]               # [L, D]
        mu = jnp.mean(xb, axis=0, keepdims=True)
        xc = xb - mu
        std = jnp.sqrt(jnp.mean(xc * xc, axis=0, keepdims=True) + 1e-5)
        xn_parts.append((xc / std - mu) / std)
        mu_parts.append(jnp.broadcast_to(mu, xb.shape))
        std_parts.append(jnp.broadcast_to(std, xb.shape))
    x_norm = jnp.concatenate(xn_parts, axis=0)              # [B*L, D] f32
    mu_full = jnp.concatenate(mu_parts, axis=0)
    std_full = jnp.concatenate(std_parts, axis=0)
    x_norm_bf = x_norm.astype(bf16)

    # ---- Patch value embedding -----------------------------------------------
    # Only patches p in {0, 2} survive the downstream reshape(B, L, -1)[:,:,:dt]
    # slice; their windows tile [0, L) exactly, so each consecutive patch_len-row
    # chunk of x_norm is one surviving patch of one batch.  The (b, patch, var)
    # -> (b, l) row reorder is a host-prepared 0/1 placement matmul.
    peT = peT_ref[...]                                      # [patch_len, d_model]
    n_chunks = batch * (seq_len // patch_len)
    chunks = []
    for c in range(n_chunks):
        ch = x_norm_bf[c * patch_len:(c + 1) * patch_len]   # [patch_len, D]
        chunks.append(jax.lax.dot_general(
            ch, peT, (((0,), (0,)), ((), ())), preferred_element_type=f32))
    emb_perm = jnp.concatenate(chunks, axis=0).astype(bf16)  # [B*L, d_model]
    emb = jnp.dot(place_ref[...], emb_perm,
                  preferred_element_type=f32).astype(bf16)   # [B*L, d_model]

    # ---- ReprogrammingLayer: cross-attention onto prototypes ------------------
    # All-head query projection in one MXU-width matmul (scale folded in).
    q_all = (jnp.dot(emb, rqT_ref[...], preferred_element_type=f32)
             + rqb_ref[...]).astype(bf16)                   # [B*L, H*dk]
    o_parts = []
    for h in range(n_heads):
        q_h = q_all[:, h * d_keys:(h + 1) * d_keys]         # [B*L, dk]
        s = jnp.dot(q_h, kT_ref[h], preferred_element_type=f32)   # [B*L, S]
        a = softmax_rows(s).astype(bf16)
        o_parts.append(jnp.dot(a, v_ref[h], preferred_element_type=f32))
    o_cat = jnp.concatenate(o_parts, axis=-1).astype(bf16)  # [B*L, H*dk]
    reprog = (jnp.dot(o_cat, roT_ref[...], preferred_element_type=f32)
              + rob_ref[...]).astype(bf16)                  # [B*L, d_llm]

    # ---- multimodal fusion projection (text_proj o vilt_proj folded) ----------
    vilt = (jnp.dot(reprog, wtv_ref[...], preferred_element_type=f32)
            + jnp.dot(prompt_ref[...], wpv_ref[...], preferred_element_type=f32)
            + jnp.dot(image_ref[...], vpi_ref[...], preferred_element_type=f32)
            + jnp.dot(x_norm_bf, vpx_ref[...], preferred_element_type=f32)
            + vpb_ref[...])                                  # [B*L, d_model] f32
    vilt_bf = vilt.astype(bf16)

    # ---- FusionLayer: batch-fused MHA (block-diagonal bias) + residual + LN ---
    qkv = (jnp.dot(vilt_bf, fqkvT_ref[...], preferred_element_type=f32)
           + fqkvb_ref[...]).astype(bf16)                    # [B*L, 3*d_model]
    abias = abias_ref[...]                                   # [B*L, B*L]
    o_parts = []
    for h in range(n_heads):
        q_h = qkv[:, h * head_dim:(h + 1) * head_dim]
        k_h = qkv[:, d_model + h * head_dim:d_model + (h + 1) * head_dim]
        v_h = qkv[:, 2 * d_model + h * head_dim:2 * d_model + (h + 1) * head_dim]
        s = jax.lax.dot_general(q_h, k_h, (((1,), (1,)), ((), ())),
                                preferred_element_type=f32) + abias
        a = softmax_rows(s).astype(bf16)
        o_parts.append(jnp.dot(a, v_h, preferred_element_type=f32))
    o_cat = jnp.concatenate(o_parts, axis=-1).astype(bf16)   # [B*L, d_model]
    attn_out = (jnp.dot(o_cat, moT_ref[...], preferred_element_type=f32)
                + mob_ref[...])
    resid = vilt + attn_out                                  # dropout = identity (eval)
    m = jnp.mean(resid, axis=-1, keepdims=True)
    rc = resid - m
    var = jnp.mean(rc * rc, axis=-1, keepdims=True)
    fused = rc * jax.lax.rsqrt(var + 1e-5) * lng_ref[...] + lnb_ref[...]

    # ---- prediction head + de-normalization -----------------------------------
    pred = (jnp.dot(fused.astype(bf16), phT_ref[...], preferred_element_type=f32)
            + phb_ref[...])                                  # [B*L, c_out]
    y_ref[...] = (pred * std_full + mu_full).astype(y_ref.dtype)


# ----------------------------------------------------------------------------
# Parameters (deterministic synthetic init; torch Linear convention W:[out,in])
# ----------------------------------------------------------------------------
def init_params(key, cfg):
    ks = jax.random.split(key, 24)

    def w(k, shape, scale=0.02):
        return scale * jax.random.normal(k, shape, jnp.float32)

    H, dk = cfg.n_heads, cfg.d_ff
    p = {}
    p['map_w'] = w(ks[0], (cfg.num_tokens, cfg.vocab_size))
    p['map_b'] = w(ks[1], (cfg.num_tokens,))
    p['pe_w'] = w(ks[2], (cfg.d_model, cfg.patch_len))        # patch value emb (no bias)
    p['rq_w'] = w(ks[3], (dk * H, cfg.d_model)); p['rq_b'] = w(ks[4], (dk * H,))
    p['rk_w'] = w(ks[5], (dk * H, cfg.llm_dim)); p['rk_b'] = w(ks[6], (dk * H,))
    p['rv_w'] = w(ks[7], (dk * H, cfg.llm_dim)); p['rv_b'] = w(ks[8], (dk * H,))
    p['ro_w'] = w(ks[9], (cfg.llm_dim, dk * H)); p['ro_b'] = w(ks[10], (cfg.llm_dim,))
    p['tp_w'] = w(ks[11], (cfg.d_ff, cfg.llm_dim)); p['tp_b'] = w(ks[12], (cfg.d_ff,))
    p['vp_w'] = w(ks[13], (cfg.d_model, cfg.d_fusion)); p['vp_b'] = w(ks[14], (cfg.d_model,))
    p['in_proj_w'] = w(ks[15], (3 * cfg.d_model, cfg.d_model))
    p['in_proj_b'] = w(ks[16], (3 * cfg.d_model,))
    p['mha_out_w'] = w(ks[17], (cfg.d_model, cfg.d_model))
    p['mha_out_b'] = w(ks[18], (cfg.d_model,))
    p['ln_g'] = jnp.ones((cfg.d_model,), jnp.float32)
    p['ln_b'] = jnp.zeros((cfg.d_model,), jnp.float32)
    p['ph_w'] = w(ks[19], (cfg.c_out, cfg.d_model)); p['ph_b'] = w(ks[20], (cfg.c_out,))
    # TODO(synk): GPT-2 embedding table / prompt embeddings (TimeLLM) have no
    # Pallas equivalent; substituted with deterministic synthetic tensors.
    p['word_embedding'] = w(ks[21], (cfg.vocab_size, cfg.llm_dim), 1.0)
    p['prompt_embedding'] = w(ks[22], (cfg.B, cfg.seq_len, cfg.llm_dim), 1.0)
    # TODO(synk): VisionTS (pretrained MAE + torchvision Resize; its reference
    # forward returns undefined y1+y2+y3) -> deterministic synthetic embedding.
    p['image_embedding'] = w(ks[23], (cfg.B, cfg.seq_len, cfg.image_dim), 1.0)
    return p


def prepare_params(p, cfg):
    """One-time prep: hoist the prototype K/V computation out of the forward,
    transpose / fuse / scale-fold weights, fold the [:, :, :dt] slices and the
    patch placement into constants, cast matmul operands to bf16."""
    f32, bf16 = jnp.float32, jnp.bfloat16
    H, dk = cfg.n_heads, cfg.d_ff
    E, hd = cfg.d_model, cfg.d_model // cfg.n_heads
    dt, img = cfg.dt, cfg.image_dim
    B, L, D = cfg.B, cfg.seq_len, cfg.enc_in

    kp = {}
    # ---- prototypes + per-head K / V (weights-only; computed once, not per fwd)
    protos = p['map_w'] @ p['word_embedding'] + p['map_b'][:, None]   # [S, d_llm]
    k_full = protos @ p['rk_w'].T + p['rk_b']                         # [S, H*dk]
    v_full = protos @ p['rv_w'].T + p['rv_b']
    kp['kT'] = jnp.stack([k_full[:, h * dk:(h + 1) * dk].T for h in range(H)],
                         0).astype(bf16)                              # [H, dk, S]
    kp['v'] = jnp.stack([v_full[:, h * dk:(h + 1) * dk] for h in range(H)],
                        0).astype(bf16)                               # [H, S, dk]

    # ---- patch value embedding + row-placement matrix --------------------------
    kp['peT'] = p['pe_w'].T.astype(bf16)                              # [patch_len, E]
    place = jnp.zeros((B * L, B * L), f32)
    dst, src = [], []
    for b in range(B):
        for j in range(2):                 # surviving patches p=0 and p=2
            for d in range(D):
                src.append((2 * b + j) * D + d)
                dst.append(b * L + 2 * d + j)
    place = place.at[jnp.array(dst), jnp.array(src)].set(1.0)
    kp['place'] = place.astype(bf16)                                  # [B*L, B*L]

    # ---- reprogramming layer (1/sqrt(dk) folded into query proj) ---------------
    sr = 1.0 / math.sqrt(dk)
    kp['rqT'] = (sr * p['rq_w']).T.astype(bf16)                       # [E, H*dk]
    kp['rqb'] = (sr * p['rq_b']).reshape(1, -1).astype(f32)
    kp['roT'] = p['ro_w'].T.astype(bf16)                              # [H*dk, d_llm]
    kp['rob'] = p['ro_b'].reshape(1, -1).astype(f32)

    # ---- text_proj composed with vilt_proj (the [:, :dt] slice folded in) ------
    tpT = p['tp_w'].T                                                 # [d_llm, d_ff]
    vpT = p['vp_w'].T                                                 # [d_fusion, E]
    kp['wtv'] = (tpT[:, :dt] @ vpT[0:dt]).astype(bf16)                # [d_llm, E]
    kp['wpv'] = (tpT[:, :dt] @ vpT[dt:2 * dt]).astype(bf16)           # [d_llm, E]
    kp['vpi'] = vpT[2 * dt:2 * dt + img].astype(bf16)                 # [img, E]
    kp['vpx'] = vpT[2 * dt + img:].astype(bf16)                       # [c_out, E]
    vb = (p['vp_b'] + p['tp_b'][:dt] @ vpT[0:dt] + p['tp_b'][:dt] @ vpT[dt:2 * dt])
    kp['vpb'] = vb.reshape(1, -1).astype(f32)                         # [1, E]

    # ---- fusion layer (nn.MultiheadAttention): fused QKV, scale folded into q --
    sf = 1.0 / math.sqrt(hd)
    wq, wk, wv = p['in_proj_w'][0:E], p['in_proj_w'][E:2 * E], p['in_proj_w'][2 * E:]
    bq, bk, bv = p['in_proj_b'][0:E], p['in_proj_b'][E:2 * E], p['in_proj_b'][2 * E:]
    kp['fqkvT'] = jnp.concatenate([(sf * wq).T, wk.T, wv.T], axis=1).astype(bf16)
    kp['fqkvb'] = jnp.concatenate([sf * bq, bk, bv]).reshape(1, -1).astype(f32)
    kp['moT'] = p['mha_out_w'].T.astype(bf16)                         # [E, E]
    kp['mob'] = p['mha_out_b'].reshape(1, -1).astype(f32)
    kp['lng'] = p['ln_g'].reshape(1, -1).astype(f32)
    kp['lnb'] = p['ln_b'].reshape(1, -1).astype(f32)
    kp['phT'] = p['ph_w'].T.astype(bf16)                              # [E, c_out]
    kp['phb'] = p['ph_b'].reshape(1, -1).astype(f32)

    # ---- block-diagonal attention bias for the batch-fused self-attention ------
    bias = jnp.full((B * L, B * L), -1e9, f32)
    for b in range(B):
        bias = bias.at[b * L:(b + 1) * L, b * L:(b + 1) * L].set(0.0)
    kp['attn_bias'] = bias

    # TODO(synk): synthetic stand-ins for TimeLLM prompt embeddings / VisionTS
    kp['prompt'] = p['prompt_embedding'].reshape(B * L, -1).astype(bf16)
    kp['image'] = p['image_embedding'].reshape(B * L, -1).astype(bf16)
    return kp


# ----------------------------------------------------------------------------
# Model forward: one fused pallas_call (grid=(), whole problem VMEM-resident)
# ----------------------------------------------------------------------------
def model_forward(kp, x_enc, cfg):
    B, L, D = x_enc.shape
    x_flat = x_enc.reshape(B * L, D).astype(jnp.float32)

    kernel = functools.partial(
        _fused_forward_kernel,
        n_heads=cfg.n_heads, d_keys=cfg.d_ff, d_model=cfg.d_model,
        head_dim=cfg.d_model // cfg.n_heads,
        batch=B, seq_len=L, patch_len=cfg.patch_len)

    y_flat = pl.pallas_call(
        kernel,
        out_shape=jax.ShapeDtypeStruct((B * L, cfg.c_out), jnp.float32),
    )(x_flat, kp['prompt'], kp['image'], kp['kT'], kp['v'],
      kp['peT'], kp['place'], kp['rqT'], kp['rqb'], kp['roT'], kp['rob'],
      kp['wtv'], kp['wpv'], kp['vpi'], kp['vpx'], kp['vpb'],
      kp['fqkvT'], kp['fqkvb'], kp['attn_bias'], kp['moT'], kp['mob'],
      kp['lng'], kp['lnb'], kp['phT'], kp['phb'])
    return y_flat.reshape(B, L, cfg.c_out)


# ----------------------------------------------------------------------------
if __name__ == "__main__":
    cfg = Config()
    # static assumptions baked into the fused kernel's patch / slice folding
    assert cfg.patch_len == 2 * cfg.stride and cfg.seq_len == 2 * cfg.patch_len
    assert cfg.pred_len == cfg.seq_len and cfg.enc_in == cfg.c_out
    assert cfg.dt <= cfg.d_ff and 2 * cfg.enc_in == cfg.seq_len
    assert cfg.d_model % cfg.n_heads == 0
    assert cfg.image_dim > 0

    key = jax.random.PRNGKey(0)
    pkey, xkey = jax.random.split(key)
    params = init_params(pkey, cfg)
    kparams = prepare_params(params, cfg)
    x_enc = jax.random.normal(xkey, (cfg.B, cfg.seq_len, cfg.enc_in), jnp.float32)

    fwd = jax.jit(functools.partial(model_forward, cfg=cfg))
    y = fwd(kparams, x_enc)
    y = jax.block_until_ready(y)
    assert y.shape == (cfg.B, cfg.pred_len, cfg.c_out)
    assert bool(jnp.all(jnp.isfinite(y)))
    print("KERNEL_OK")
</pallas_src>

<mosaic_0001>
module attributes {stable_mosaic.version = 11 : i64} {
  func.func @_fused_forward_kernel(%arg0: memref<16x4xf32, #tpu.memory_space<vmem>>, %arg1: memref<16x128xbf16, #tpu.memory_space<vmem>>, %arg2: memref<16x52xbf16, #tpu.memory_space<vmem>>, %arg3: memref<4x64x256xbf16, #tpu.memory_space<vmem>>, %arg4: memref<4x256x64xbf16, #tpu.memory_space<vmem>>, %arg5: memref<4x32xbf16, #tpu.memory_space<vmem>>, %arg6: memref<16x16xbf16, #tpu.memory_space<vmem>>, %arg7: memref<32x256xbf16, #tpu.memory_space<vmem>>, %arg8: memref<1x256xf32, #tpu.memory_space<vmem>>, %arg9: memref<256x128xbf16, #tpu.memory_space<vmem>>, %arg10: memref<1x128xf32, #tpu.memory_space<vmem>>, %arg11: memref<128x32xbf16, #tpu.memory_space<vmem>>, %arg12: memref<128x32xbf16, #tpu.memory_space<vmem>>, %arg13: memref<52x32xbf16, #tpu.memory_space<vmem>>, %arg14: memref<4x32xbf16, #tpu.memory_space<vmem>>, %arg15: memref<1x32xf32, #tpu.memory_space<vmem>>, %arg16: memref<32x96xbf16, #tpu.memory_space<vmem>>, %arg17: memref<1x96xf32, #tpu.memory_space<vmem>>, %arg18: memref<16x16xf32, #tpu.memory_space<vmem>>, %arg19: memref<32x32xbf16, #tpu.memory_space<vmem>>, %arg20: memref<1x32xf32, #tpu.memory_space<vmem>>, %arg21: memref<1x32xf32, #tpu.memory_space<vmem>>, %arg22: memref<1x32xf32, #tpu.memory_space<vmem>>, %arg23: memref<32x4xbf16, #tpu.memory_space<vmem>>, %arg24: memref<1x4xf32, #tpu.memory_space<vmem>>, %arg25: memref<16x4xf32, #tpu.memory_space<vmem>>) attributes {dimension_semantics = [], scalar_prefetch = 0 : i64, scratch_operands = 0 : i64, tpu.core_type = #tpu.core_type<tc>} {
    %c0 = arith.constant 0 : index
    %c0_0 = arith.constant 0 : index
    %0 = vector.load %arg0[%c0, %c0_0] : memref<16x4xf32, #tpu.memory_space<vmem>>, vector<16x4xf32>
    %1 = vector.extract_strided_slice %0 {offsets = [0, 0], sizes = [8, 4], strides = [1, 1]} : vector<16x4xf32> to vector<8x4xf32>
    %cst = arith.constant dense<0.000000e+00> : vector<4xf32>
    %2 = vector.multi_reduction <add>, %1, %cst [0] : vector<8x4xf32> to vector<4xf32>
    %3 = vector.shape_cast %2 : vector<4xf32> to vector<1x4xf32>
    %cst_1 = arith.constant 8.000000e+00 : f32
    %4 = vector.broadcast %cst_1 : f32 to vector<1x4xf32>
    %5 = arith.divf %3, %4 : vector<1x4xf32>
    %6 = vector.broadcast %5 : vector<1x4xf32> to vector<8x4xf32>
    %7 = arith.subf %1, %6 : vector<8x4xf32>
    %8 = arith.mulf %7, %7 : vector<8x4xf32>
    %cst_2 = arith.constant dense<0.000000e+00> : vector<4xf32>
    %9 = vector.multi_reduction <add>, %8, %cst_2 [0] : vector<8x4xf32> to vector<4xf32>
    %10 = vector.shape_cast %9 : vector<4xf32> to vector<1x4xf32>
    %cst_3 = arith.constant 8.000000e+00 : f32
    %11 = vector.broadcast %cst_3 : f32 to vector<1x4xf32>
    %12 = arith.divf %10, %11 : vector<1x4xf32>
    %cst_4 = arith.constant 9.99999974E-6 : f32
    %13 = vector.broadcast %cst_4 : f32 to vector<1x4xf32>
    %14 = arith.addf %12, %13 : vector<1x4xf32>
    %15 = math.sqrt %14 : vector<1x4xf32>
    %16 = vector.broadcast %15 : vector<1x4xf32> to vector<8x4xf32>
    %17 = arith.divf %7, %16 : vector<8x4xf32>
    %18 = vector.broadcast %5 : vector<1x4xf32> to vector<8x4xf32>
    %19 = arith.subf %17, %18 : vector<8x4xf32>
    %20 = vector.broadcast %15 : vector<1x4xf32> to vector<8x4xf32>
    %21 = arith.divf %19, %20 : vector<8x4xf32>
    %22 = vector.shape_cast %5 : vector<1x4xf32> to vector<1x4xf32>
    %23 = vector.broadcast %22 : vector<1x4xf32> to vector<8x4xf32>
    %24 = vector.shape_cast %15 : vector<1x4xf32> to vector<1x4xf32>
    %25 = vector.broadcast %24 : vector<1x4xf32> to vector<8x4xf32>
    %26 = vector.extract_strided_slice %0 {offsets = [8, 0], sizes = [8, 4], strides = [1, 1]} : vector<16x4xf32> to vector<8x4xf32>
    %cst_5 = arith.constant dense<0.000000e+00> : vector<4xf32>
    %27 = vector.multi_reduction <add>, %26, %cst_5 [0] : vector<8x4xf32> to vector<4xf32>
    %28 = vector.shape_cast %27 : vector<4xf32> to vector<1x4xf32>
    %cst_6 = arith.constant 8.000000e+00 : f32
    %29 = vector.broadcast %cst_6 : f32 to vector<1x4xf32>
    %30 = arith.divf %28, %29 : vector<1x4xf32>
    %31 = vector.broadcast %30 : vector<1x4xf32> to vector<8x4xf32>
    %32 = arith.subf %26, %31 : vector<8x4xf32>
    %33 = arith.mulf %32, %32 : vector<8x4xf32>
    %cst_7 = arith.constant dense<0.000000e+00> : vector<4xf32>
    %34 = vector.multi_reduction <add>, %33, %cst_7 [0] : vector<8x4xf32> to vector<4xf32>
    %35 = vector.shape_cast %34 : vector<4xf32> to vector<1x4xf32>
    %cst_8 = arith.constant 8.000000e+00 : f32
    %36 = vector.broadcast %cst_8 : f32 to vector<1x4xf32>
    %37 = arith.divf %35, %36 : vector<1x4xf32>
    %cst_9 = arith.constant 9.99999974E-6 : f32
    %38 = vector.broadcast %cst_9 : f32 to vector<1x4xf32>
    %39 = arith.addf %37, %38 : vector<1x4xf32>
    %40 = math.sqrt %39 : vector<1x4xf32>
    %41 = vector.broadcast %40 : vector<1x4xf32> to vector<8x4xf32>
    %42 = arith.divf %32, %41 : vector<8x4xf32>
    %43 = vector.broadcast %30 : vector<1x4xf32> to vector<8x4xf32>
    %44 = arith.subf %42, %43 : vector<8x4xf32>
    %45 = vector.broadcast %40 : vector<1x4xf32> to vector<8x4xf32>
    %46 = arith.divf %44, %45 : vector<8x4xf32>
    %47 = vector.shape_cast %30 : vector<1x4xf32> to vector<1x4xf32>
    %48 = vector.broadcast %47 : vector<1x4xf32> to vector<8x4xf32>
    %49 = vector.shape_cast %40 : vector<1x4xf32> to vector<1x4xf32>
    %50 = vector.broadcast %49 : vector<1x4xf32> to vector<8x4xf32>
    %51 = tpu.concatenate %21, %46 in 0 : vector<8x4xf32>, vector<8x4xf32> -> vector<16x4xf32>
    %52 = tpu.concatenate %23, %48 in 0 : vector<8x4xf32>, vector<8x4xf32> -> vector<16x4xf32>
    %53 = tpu.concatenate %25, %50 in 0 : vector<8x4xf32>, vector<8x4xf32> -> vector<16x4xf32>
    %54 = arith.truncf %51 : vector<16x4xf32> to vector<16x4xbf16>
    %c0_10 = arith.constant 0 : index
    %c0_11 = arith.constant 0 : index
    %55 = vector.load %arg5[%c0_10, %c0_11] : memref<4x32xbf16, #tpu.memory_space<vmem>>, vector<4x32xbf16>
    %56 = vector.extract_strided_slice %54 {offsets = [0, 0], sizes = [4, 4], strides = [1, 1]} : vector<16x4xbf16> to vector<4x4xbf16>
    %cst_12 = arith.constant dense<0.000000e+00> : vector<4x32xf32>
    %57 = tpu.matmul %56, %55, %cst_12 {dimension_numbers = #tpu.dot_dimension_numbers<[0], [0], [1], [1], [0, 1, 1, 1], [], []>} : vector<4x4xbf16>, vector<4x32xbf16>, vector<4x32xf32> -> vector<4x32xf32>
    %58 = vector.extract_strided_slice %54 {offsets = [4, 0], sizes = [4, 4], strides = [1, 1]} : vector<16x4xbf16> to vector<4x4xbf16>
    %cst_13 = arith.constant dense<0.000000e+00> : vector<4x32xf32>
    %59 = tpu.matmul %58, %55, %cst_13 {dimension_numbers = #tpu.dot_dimension_numbers<[0], [0], [1], [1], [0, 1, 1, 1], [], []>} : vector<4x4xbf16>, vector<4x32xbf16>, vector<4x32xf32> -> vector<4x32xf32>
    %60 = vector.extract_strided_slice %54 {offsets = [8, 0], sizes = [4, 4], strides = [1, 1]} : vector<16x4xbf16> to vector<4x4xbf16>
    %cst_14 = arith.constant dense<0.000000e+00> : vector<4x32xf32>
    %61 = tpu.matmul %60, %55, %cst_14 {dimension_numbers = #tpu.dot_dimension_numbers<[0], [0], [1], [1], [0, 1, 1, 1], [], []>} : vector<4x4xbf16>, vector<4x32xbf16>, vector<4x32xf32> -> vector<4x32xf32>
    %62 = vector.extract_strided_slice %54 {offsets = [12, 0], sizes = [4, 4], strides = [1, 1]} : vector<16x4xbf16> to vector<4x4xbf16>
    %cst_15 = arith.constant dense<0.000000e+00> : vector<4x32xf32>
    %63 = tpu.matmul %62, %55, %cst_15 {dimension_numbers = #tpu.dot_dimension_numbers<[0], [0], [1], [1], [0, 1, 1, 1], [], []>} : vector<4x4xbf16>, vector<4x32xbf16>, vector<4x32xf32> -> vector<4x32xf32>
    %64 = tpu.concatenate %57, %59, %61, %63 in 0 : vector<4x32xf32>, vector<4x32xf32>, vector<4x32xf32>, vector<4x32xf32> -> vector<16x32xf32>
    %65 = arith.truncf %64 : vector<16x32xf32> to vector<16x32xbf16>
    %c0_16 = arith.constant 0 : index
    %c0_17 = arith.constant 0 : index
    %66 = vector.load %arg6[%c0_16, %c0_17] : memref<16x16xbf16, #tpu.memory_space<vmem>>, vector<16x16xbf16>
    %cst_18 = arith.constant dense<0.000000e+00> : vector<16x32xf32>
    %67 = tpu.matmul %66, %65, %cst_18 {dimension_numbers = #tpu.dot_dimension_numbers<[1], [0], [0], [1], [0, 0, 1, 1], [], []>} : vector<16x16xbf16>, vector<16x32xbf16>, vector<16x32xf32> -> vector<16x32xf32>
    %68 = arith.truncf %67 : vector<16x32xf32> to vector<16x32xbf16>
    %c0_19 = arith.constant 0 : index
    %c0_20 = arith.constant 0 : index
    %69 = vector.load %arg7[%c0_19, %c0_20] : memref<32x256xbf16, #tpu.memory_space<vmem>>, vector<32x256xbf16>
    %cst_21 = arith.constant dense<0.000000e+00> : vector<16x256xf32>
    %70 = tpu.matmul %68, %69, %cst_21 {dimension_numbers = #tpu.dot_dimension_numbers<[1], [0], [0], [1], [0, 0, 1, 1], [], []>} : vector<16x32xbf16>, vector<32x256xbf16>, vector<16x256xf32> -> vector<16x256xf32>
    %c0_22 = arith.constant 0 : index
    %c0_23 = arith.constant 0 : index
    %71 = vector.load %arg8[%c0_22, %c0_23] : memref<1x256xf32, #tpu.memory_space<vmem>>, vector<1x256xf32>
    %72 = vector.broadcast %71 : vector<1x256xf32> to vector<16x256xf32>
    %73 = arith.addf %70, %72 : vector<16x256xf32>
    %74 = arith.truncf %73 : vector<16x256xf32> to vector<16x256xbf16>
    %75 = vector.extract_strided_slice %74 {offsets = [0, 0], sizes = [16, 64], strides = [1, 1]} : vector<16x256xbf16> to vector<16x64xbf16>
    %c0_24 = arith.constant 0 : index
    %c0_25 = arith.constant 0 : index
    %c0_26 = arith.constant 0 : index
    %76 = vector.load %arg3[%c0_24, %c0_25, %c0_26] : memref<4x64x256xbf16, #tpu.memory_space<vmem>>, vector<1x64x256xbf16>
    %77 = vector.shape_cast %76 : vector<1x64x256xbf16> to vector<64x256xbf16>
    %cst_27 = arith.constant dense<0.000000e+00> : vector<16x256xf32>
    %78 = tpu.matmul %75, %77, %cst_27 {dimension_numbers = #tpu.dot_dimension_numbers<[1], [0], [0], [1], [0, 0, 1, 1], [], []>} : vector<16x64xbf16>, vector<64x256xbf16>, vector<16x256xf32> -> vector<16x256xf32>
    %cst_28 = arith.constant dense<0xFF800000> : vector<16xf32>
    %79 = vector.multi_reduction <maximumf>, %78, %cst_28 [1] : vector<16x256xf32> to vector<16xf32>
    %80 = vector.shape_cast %79 : vector<16xf32> to vector<16x1xf32>
    %81 = vector.broadcast %80 : vector<16x1xf32> to vector<16x256xf32>
    %82 = arith.subf %78, %81 : vector<16x256xf32>
    %83 = math.exp %82 : vector<16x256xf32>
    %cst_29 = arith.constant dense<0.000000e+00> : vector<16xf32>
    %84 = vector.multi_reduction <add>, %83, %cst_29 [1] : vector<16x256xf32> to vector<16xf32>
    %85 = vector.shape_cast %84 : vector<16xf32> to vector<16x1xf32>
    %86 = tpu.reciprocal %85 {approx = true} : vector<16x1xf32> -> vector<16x1xf32>
    %87 = vector.broadcast %86 : vector<16x1xf32> to vector<16x256xf32>
    %88 = arith.mulf %83, %87 : vector<16x256xf32>
    %89 = arith.truncf %88 : vector<16x256xf32> to vector<16x256xbf16>
    %c0_30 = arith.constant 0 : index
    %c0_31 = arith.constant 0 : index
    %c0_32 = arith.constant 0 : index
    %90 = vector.load %arg4[%c0_30, %c0_31, %c0_32] : memref<4x256x64xbf16, #tpu.memory_space<vmem>>, vector<1x256x64xbf16>
    %91 = vector.shape_cast %90 : vector<1x256x64xbf16> to vector<256x64xbf16>
    %cst_33 = arith.constant dense<0.000000e+00> : vector<16x64xf32>
    %92 = tpu.matmul %89, %91, %cst_33 {dimension_numbers = #tpu.dot_dimension_numbers<[1], [0], [0], [1], [0, 0, 1, 1], [], []>} : vector<16x256xbf16>, vector<256x64xbf16>, vector<16x64xf32> -> vector<16x64xf32>
    %93 = vector.extract_strided_slice %74 {offsets = [0, 64], sizes = [16, 64], strides = [1, 1]} : vector<16x256xbf16> to vector<16x64xbf16>
    %c1 = arith.constant 1 : index
    %c0_34 = arith.constant 0 : index
    %c0_35 = arith.constant 0 : index
    %94 = vector.load %arg3[%c1, %c0_34, %c0_35] : memref<4x64x256xbf16, #tpu.memory_space<vmem>>, vector<1x64x256xbf16>
    %95 = vector.shape_cast %94 : vector<1x64x256xbf16> to vector<64x256xbf16>
    %cst_36 = arith.constant dense<0.000000e+00> : vector<16x256xf32>
    %96 = tpu.matmul %93, %95, %cst_36 {dimension_numbers = #tpu.dot_dimension_numbers<[1], [0], [0], [1], [0, 0, 1, 1], [], []>} : vector<16x64xbf16>, vector<64x256xbf16>, vector<16x256xf32> -> vector<16x256xf32>
    %cst_37 = arith.constant dense<0xFF800000> : vector<16xf32>
    %97 = vector.multi_reduction <maximumf>, %96, %cst_37 [1] : vector<16x256xf32> to vector<16xf32>
    %98 = vector.shape_cast %97 : vector<16xf32> to vector<16x1xf32>
    %99 = vector.broadcast %98 : vector<16x1xf32> to vector<16x256xf32>
    %100 = arith.subf %96, %99 : vector<16x256xf32>
    %101 = math.exp %100 : vector<16x256xf32>
    %cst_38 = arith.constant dense<0.000000e+00> : vector<16xf32>
    %102 = vector.multi_reduction <add>, %101, %cst_38 [1] : vector<16x256xf32> to vector<16xf32>
    %103 = vector.shape_cast %102 : vector<16xf32> to vector<16x1xf32>
    %104 = tpu.reciprocal %103 {approx = true} : vector<16x1xf32> -> vector<16x1xf32>
    %105 = vector.broadcast %104 : vector<16x1xf32> to vector<16x256xf32>
    %106 = arith.mulf %101, %105 : vector<16x256xf32>
    %107 = arith.truncf %106 : vector<16x256xf32> to vector<16x256xbf16>
    %c1_39 = arith.constant 1 : index
    %c0_40 = arith.constant 0 : index
    %c0_41 = arith.constant 0 : index
    %108 = vector.load %arg4[%c1_39, %c0_40, %c0_41] : memref<4x256x64xbf16, #tpu.memory_space<vmem>>, vector<1x256x64xbf16>
    %109 = vector.shape_cast %108 : vector<1x256x64xbf16> to vector<256x64xbf16>
    %cst_42 = arith.constant dense<0.000000e+00> : vector<16x64xf32>
    %110 = tpu.matmul %107, %109, %cst_42 {dimension_numbers = #tpu.dot_dimension_numbers<[1], [0], [0], [1], [0, 0, 1, 1], [], []>} : vector<16x256xbf16>, vector<256x64xbf16>, vector<16x64xf32> -> vector<16x64xf32>
    %111 = vector.extract_strided_slice %74 {offsets = [0, 128], sizes = [16, 64], strides = [1, 1]} : vector<16x256xbf16> to vector<16x64xbf16>
    %c2 = arith.constant 2 : index
    %c0_43 = arith.constant 0 : index
    %c0_44 = arith.constant 0 : index
    %112 = vector.load %arg3[%c2, %c0_43, %c0_44] : memref<4x64x256xbf16, #tpu.memory_space<vmem>>, vector<1x64x256xbf16>
    %113 = vector.shape_cast %112 : vector<1x64x256xbf16> to vector<64x256xbf16>
    %cst_45 = arith.constant dense<0.000000e+00> : vector<16x256xf32>
    %114 = tpu.matmul %111, %113, %cst_45 {dimension_numbers = #tpu.dot_dimension_numbers<[1], [0], [0], [1], [0, 0, 1, 1], [], []>} : vector<16x64xbf16>, vector<64x256xbf16>, vector<16x256xf32> -> vector<16x256xf32>
    %cst_46 = arith.constant dense<0xFF800000> : vector<16xf32>
    %115 = vector.multi_reduction <maximumf>, %114, %cst_46 [1] : vector<16x256xf32> to vector<16xf32>
    %116 = vector.shape_cast %115 : vector<16xf32> to vector<16x1xf32>
    %117 = vector.broadcast %116 : vector<16x1xf32> to vector<16x256xf32>
    %118 = arith.subf %114, %117 : vector<16x256xf32>
    %119 = math.exp %118 : vector<16x256xf32>
    %cst_47 = arith.constant dense<0.000000e+00> : vector<16xf32>
    %120 = vector.multi_reduction <add>, %119, %cst_47 [1] : vector<16x256xf32> to vector<16xf32>
    %121 = vector.shape_cast %120 : vector<16xf32> to vector<16x1xf32>
    %122 = tpu.reciprocal %121 {approx = true} : vector<16x1xf32> -> vector<16x1xf32>
    %123 = vector.broadcast %122 : vector<16x1xf32> to vector<16x256xf32>
    %124 = arith.mulf %119, %123 : vector<16x256xf32>
    %125 = arith.truncf %124 : vector<16x256xf32> to vector<16x256xbf16>
    %c2_48 = arith.constant 2 : index
    %c0_49 = arith.constant 0 : index
    %c0_50 = arith.constant 0 : index
    %126 = vector.load %arg4[%c2_48, %c0_49, %c0_50] : memref<4x256x64xbf16, #tpu.memory_space<vmem>>, vector<1x256x64xbf16>
    %127 = vector.shape_cast %126 : vector<1x256x64xbf16> to vector<256x64xbf16>
    %cst_51 = arith.constant dense<0.000000e+00> : vector<16x64xf32>
    %128 = tpu.matmul %125, %127, %cst_51 {dimension_numbers = #tpu.dot_dimension_numbers<[1], [0], [0], [1], [0, 0, 1, 1], [], []>} : vector<16x256xbf16>, vector<256x64xbf16>, vector<16x64xf32> -> vector<16x64xf32>
    %129 = vector.extract_strided_slice %74 {offsets = [0, 192], sizes = [16, 64], strides = [1, 1]} : vector<16x256xbf16> to vector<16x64xbf16>
    %c3 = arith.constant 3 : index
    %c0_52 = arith.constant 0 : index
    %c0_53 = arith.constant 0 : index
    %130 = vector.load %arg3[%c3, %c0_52, %c0_53] : memref<4x64x256xbf16, #tpu.memory_space<vmem>>, vector<1x64x256xbf16>
    %131 = vector.shape_cast %130 : vector<1x64x256xbf16> to vector<64x256xbf16>
    %cst_54 = arith.constant dense<0.000000e+00> : vector<16x256xf32>
    %132 = tpu.matmul %129, %131, %cst_54 {dimension_numbers = #tpu.dot_dimension_numbers<[1], [0], [0], [1], [0, 0, 1, 1], [], []>} : vector<16x64xbf16>, vector<64x256xbf16>, vector<16x256xf32> -> vector<16x256xf32>
    %cst_55 = arith.constant dense<0xFF800000> : vector<16xf32>
    %133 = vector.multi_reduction <maximumf>, %132, %cst_55 [1] : vector<16x256xf32> to vector<16xf32>
    %134 = vector.shape_cast %133 : vector<16xf32> to vector<16x1xf32>
    %135 = vector.broadcast %134 : vector<16x1xf32> to vector<16x256xf32>
    %136 = arith.subf %132, %135 : vector<16x256xf32>
    %137 = math.exp %136 : vector<16x256xf32>
    %cst_56 = arith.constant dense<0.000000e+00> : vector<16xf32>
    %138 = vector.multi_reduction <add>, %137, %cst_56 [1] : vector<16x256xf32> to vector<16xf32>
    %139 = vector.shape_cast %138 : vector<16xf32> to vector<16x1xf32>
    %140 = tpu.reciprocal %139 {approx = true} : vector<16x1xf32> -> vector<16x1xf32>
    %141 = vector.broadcast %140 : vector<16x1xf32> to vector<16x256xf32>
    %142 = arith.mulf %137, %141 : vector<16x256xf32>
    %143 = arith.truncf %142 : vector<16x256xf32> to vector<16x256xbf16>
    %c3_57 = arith.constant 3 : index
    %c0_58 = arith.constant 0 : index
    %c0_59 = arith.constant 0 : index
    %144 = vector.load %arg4[%c3_57, %c0_58, %c0_59] : memref<4x256x64xbf16, #tpu.memory_space<vmem>>, vector<1x256x64xbf16>
    %145 = vector.shape_cast %144 : vector<1x256x64xbf16> to vector<256x64xbf16>
    %cst_60 = arith.constant dense<0.000000e+00> : vector<16x64xf32>
    %146 = tpu.matmul %143, %145, %cst_60 {dimension_numbers = #tpu.dot_dimension_numbers<[1], [0], [0], [1], [0, 0, 1, 1], [], []>} : vector<16x256xbf16>, vector<256x64xbf16>, vector<16x64xf32> -> vector<16x64xf32>
    %147 = tpu.concatenate %92, %110, %128, %146 in 1 : vector<16x64xf32>, vector<16x64xf32>, vector<16x64xf32>, vector<16x64xf32> -> vector<16x256xf32>
    %148 = arith.truncf %147 : vector<16x256xf32> to vector<16x256xbf16>
    %c0_61 = arith.constant 0 : index
    %c0_62 = arith.constant 0 : index
    %149 = vector.load %arg9[%c0_61, %c0_62] : memref<256x128xbf16, #tpu.memory_space<vmem>>, vector<256x128xbf16>
    %cst_63 = arith.constant dense<0.000000e+00> : vector<16x128xf32>
    %150 = tpu.matmul %148, %149, %cst_63 {dimension_numbers = #tpu.dot_dimension_numbers<[1], [0], [0], [1], [0, 0, 1, 1], [], []>} : vector<16x256xbf16>, vector<256x128xbf16>, vector<16x128xf32> -> vector<16x128xf32>
    %c0_64 = arith.constant 0 : index
    %c0_65 = arith.constant 0 : index
    %151 = vector.load %arg10[%c0_64, %c0_65] : memref<1x128xf32, #tpu.memory_space<vmem>>, vector<1x128xf32>
    %152 = vector.broadcast %151 : vector<1x128xf32> to vector<16x128xf32>
    %153 = arith.addf %150, %152 : vector<16x128xf32>
    %154 = arith.truncf %153 : vector<16x128xf32> to vector<16x128xbf16>
    %c0_66 = arith.constant 0 : index
    %c0_67 = arith.constant 0 : index
    %155 = vector.load %arg11[%c0_66, %c0_67] : memref<128x32xbf16, #tpu.memory_space<vmem>>, vector<128x32xbf16>
    %cst_68 = arith.constant dense<0.000000e+00> : vector<16x32xf32>
    %156 = tpu.matmul %154, %155, %cst_68 {dimension_numbers = #tpu.dot_dimension_numbers<[1], [0], [0], [1], [0, 0, 1, 1], [], []>} : vector<16x128xbf16>, vector<128x32xbf16>, vector<16x32xf32> -> vector<16x32xf32>
    %c0_69 = arith.constant 0 : index
    %c0_70 = arith.constant 0 : index
    %157 = vector.load %arg1[%c0_69, %c0_70] : memref<16x128xbf16, #tpu.memory_space<vmem>>, vector<16x128xbf16>
    %c0_71 = arith.constant 0 : index
    %c0_72 = arith.constant 0 : index
    %158 = vector.load %arg12[%c0_71, %c0_72] : memref<128x32xbf16, #tpu.memory_space<vmem>>, vector<128x32xbf16>
    %cst_73 = arith.constant dense<0.000000e+00> : vector<16x32xf32>
    %159 = tpu.matmul %157, %158, %cst_73 {dimension_numbers = #tpu.dot_dimension_numbers<[1], [0], [0], [1], [0, 0, 1, 1], [], []>} : vector<16x128xbf16>, vector<128x32xbf16>, vector<16x32xf32> -> vector<16x32xf32>
    %160 = arith.addf %156, %159 : vector<16x32xf32>
    %c0_74 = arith.constant 0 : index
    %c0_75 = arith.constant 0 : index
    %161 = vector.load %arg2[%c0_74, %c0_75] : memref<16x52xbf16, #tpu.memory_space<vmem>>, vector<16x52xbf16>
    %c0_76 = arith.constant 0 : index
    %c0_77 = arith.constant 0 : index
    %162 = vector.load %arg13[%c0_76, %c0_77] : memref<52x32xbf16, #tpu.memory_space<vmem>>, vector<52x32xbf16>
    %cst_78 = arith.constant dense<0.000000e+00> : vector<16x32xf32>
    %163 = tpu.matmul %161, %162, %cst_78 {dimension_numbers = #tpu.dot_dimension_numbers<[1], [0], [0], [1], [0, 0, 1, 1], [], []>} : vector<16x52xbf16>, vector<52x32xbf16>, vector<16x32xf32> -> vector<16x32xf32>
    %164 = arith.addf %160, %163 : vector<16x32xf32>
    %c0_79 = arith.constant 0 : index
    %c0_80 = arith.constant 0 : index
    %165 = vector.load %arg14[%c0_79, %c0_80] : memref<4x32xbf16, #tpu.memory_space<vmem>>, vector<4x32xbf16>
    %cst_81 = arith.constant dense<0.000000e+00> : vector<16x32xf32>
    %166 = tpu.matmul %54, %165, %cst_81 {dimension_numbers = #tpu.dot_dimension_numbers<[1], [0], [0], [1], [0, 0, 1, 1], [], []>} : vector<16x4xbf16>, vector<4x32xbf16>, vector<16x32xf32> -> vector<16x32xf32>
    %167 = arith.addf %164, %166 : vector<16x32xf32>
    %c0_82 = arith.constant 0 : index
    %c0_83 = arith.constant 0 : index
    %168 = vector.load %arg15[%c0_82, %c0_83] : memref<1x32xf32, #tpu.memory_space<vmem>>, vector<1x32xf32>
    %169 = vector.broadcast %168 : vector<1x32xf32> to vector<16x32xf32>
    %170 = arith.addf %167, %169 : vector<16x32xf32>
    %171 = arith.truncf %170 : vector<16x32xf32> to vector<16x32xbf16>
    %c0_84 = arith.constant 0 : index
    %c0_85 = arith.constant 0 : index
    %172 = vector.load %arg16[%c0_84, %c0_85] : memref<32x96xbf16, #tpu.memory_space<vmem>>, vector<32x96xbf16>
    %cst_86 = arith.constant dense<0.000000e+00> : vector<16x96xf32>
    %173 = tpu.matmul %171, %172, %cst_86 {dimension_numbers = #tpu.dot_dimension_numbers<[1], [0], [0], [1], [0, 0, 1, 1], [], []>} : vector<16x32xbf16>, vector<32x96xbf16>, vector<16x96xf32> -> vector<16x96xf32>
    %c0_87 = arith.constant 0 : index
    %c0_88 = arith.constant 0 : index
    %174 = vector.load %arg17[%c0_87, %c0_88] : memref<1x96xf32, #tpu.memory_space<vmem>>, vector<1x96xf32>
    %175 = vector.broadcast %174 : vector<1x96xf32> to vector<16x96xf32>
    %176 = arith.addf %173, %175 : vector<16x96xf32>
    %177 = arith.truncf %176 : vector<16x96xf32> to vector<16x96xbf16>
    %c0_89 = arith.constant 0 : index
    %c0_90 = arith.constant 0 : index
    %178 = vector.load %arg18[%c0_89, %c0_90] : memref<16x16xf32, #tpu.memory_space<vmem>>, vector<16x16xf32>
    %179 = vector.extract_strided_slice %177 {offsets = [0, 0], sizes = [16, 8], strides = [1, 1]} : vector<16x96xbf16> to vector<16x8xbf16>
    %180 = vector.extract_strided_slice %177 {offsets = [0, 32], sizes = [16, 8], strides = [1, 1]} : vector<16x96xbf16> to vector<16x8xbf16>
    %181 = vector.extract_strided_slice %177 {offsets = [0, 64], sizes = [16, 8], strides = [1, 1]} : vector<16x96xbf16> to vector<16x8xbf16>
    %cst_91 = arith.constant dense<0.000000e+00> : vector<16x16xf32>
    %182 = tpu.matmul %179, %180, %cst_91 {dimension_numbers = #tpu.dot_dimension_numbers<[1], [1], [0], [0], [0, 0, 1, 0], [], []>} : vector<16x8xbf16>, vector<16x8xbf16>, vector<16x16xf32> -> vector<16x16xf32>
    %183 = arith.addf %182, %178 : vector<16x16xf32>
    %cst_92 = arith.constant dense<0xFF800000> : vector<16xf32>
    %184 = vector.multi_reduction <maximumf>, %183, %cst_92 [1] : vector<16x16xf32> to vector<16xf32>
    %185 = vector.shape_cast %184 : vector<16xf32> to vector<16x1xf32>
    %186 = vector.broadcast %185 : vector<16x1xf32> to vector<16x16xf32>
    %187 = arith.subf %183, %186 : vector<16x16xf32>
    %188 = math.exp %187 : vector<16x16xf32>
    %cst_93 = arith.constant dense<0.000000e+00> : vector<16xf32>
    %189 = vector.multi_reduction <add>, %188, %cst_93 [1] : vector<16x16xf32> to vector<16xf32>
    %190 = vector.shape_cast %189 : vector<16xf32> to vector<16x1xf32>
    %191 = tpu.reciprocal %190 {approx = true} : vector<16x1xf32> -> vector<16x1xf32>
    %192 = vector.broadcast %191 : vector<16x1xf32> to vector<16x16xf32>
    %193 = arith.mulf %188, %192 : vector<16x16xf32>
    %194 = arith.truncf %193 : vector<16x16xf32> to vector<16x16xbf16>
    %cst_94 = arith.constant dense<0.000000e+00> : vector<16x8xf32>
    %195 = tpu.matmul %194, %181, %cst_94 {dimension_numbers = #tpu.dot_dimension_numbers<[1], [0], [0], [1], [0, 0, 1, 1], [], []>} : vector<16x16xbf16>, vector<16x8xbf16>, vector<16x8xf32> -> vector<16x8xf32>
    %196 = vector.extract_strided_slice %177 {offsets = [0, 8], sizes = [16, 8], strides = [1, 1]} : vector<16x96xbf16> to vector<16x8xbf16>
    %197 = vector.extract_strided_slice %177 {offsets = [0, 40], sizes = [16, 8], strides = [1, 1]} : vector<16x96xbf16> to vector<16x8xbf16>
    %198 = vector.extract_strided_slice %177 {offsets = [0, 72], sizes = [16, 8], strides = [1, 1]} : vector<16x96xbf16> to vector<16x8xbf16>
    %cst_95 = arith.constant dense<0.000000e+00> : vector<16x16xf32>
    %199 = tpu.matmul %196, %197, %cst_95 {dimension_numbers = #tpu.dot_dimension_numbers<[1], [1], [0], [0], [0, 0, 1, 0], [], []>} : vector<16x8xbf16>, vector<16x8xbf16>, vector<16x16xf32> -> vector<16x16xf32>
    %200 = arith.addf %199, %178 : vector<16x16xf32>
    %cst_96 = arith.constant dense<0xFF800000> : vector<16xf32>
    %201 = vector.multi_reduction <maximumf>, %200, %cst_96 [1] : vector<16x16xf32> to vector<16xf32>
    %202 = vector.shape_cast %201 : vector<16xf32> to vector<16x1xf32>
    %203 = vector.broadcast %202 : vector<16x1xf32> to vector<16x16xf32>
    %204 = arith.subf %200, %203 : vector<16x16xf32>
    %205 = math.exp %204 : vector<16x16xf32>
    %cst_97 = arith.constant dense<0.000000e+00> : vector<16xf32>
    %206 = vector.multi_reduction <add>, %205, %cst_97 [1] : vector<16x16xf32> to vector<16xf32>
    %207 = vector.shape_cast %206 : vector<16xf32> to vector<16x1xf32>
    %208 = tpu.reciprocal %207 {approx = true} : vector<16x1xf32> -> vector<16x1xf32>
    %209 = vector.broadcast %208 : vector<16x1xf32> to vector<16x16xf32>
    %210 = arith.mulf %205, %209 : vector<16x16xf32>
    %211 = arith.truncf %210 : vector<16x16xf32> to vector<16x16xbf16>
    %cst_98 = arith.constant dense<0.000000e+00> : vector<16x8xf32>
    %212 = tpu.matmul %211, %198, %cst_98 {dimension_numbers = #tpu.dot_dimension_numbers<[1], [0], [0], [1], [0, 0, 1, 1], [], []>} : vector<16x16xbf16>, vector<16x8xbf16>, vector<16x8xf32> -> vector<16x8xf32>
    %213 = vector.extract_strided_slice %177 {offsets = [0, 16], sizes = [16, 8], strides = [1, 1]} : vector<16x96xbf16> to vector<16x8xbf16>
    %214 = vector.extract_strided_slice %177 {offsets = [0, 48], sizes = [16, 8], strides = [1, 1]} : vector<16x96xbf16> to vector<16x8xbf16>
    %215 = vector.extract_strided_slice %177 {offsets = [0, 80], sizes = [16, 8], strides = [1, 1]} : vector<16x96xbf16> to vector<16x8xbf16>
    %cst_99 = arith.constant dense<0.000000e+00> : vector<16x16xf32>
    %216 = tpu.matmul %213, %214, %cst_99 {dimension_numbers = #tpu.dot_dimension_numbers<[1], [1], [0], [0], [0, 0, 1, 0], [], []>} : vector<16x8xbf16>, vector<16x8xbf16>, vector<16x16xf32> -> vector<16x16xf32>
    %217 = arith.addf %216, %178 : vector<16x16xf32>
    %cst_100 = arith.constant dense<0xFF800000> : vector<16xf32>
    %218 = vector.multi_reduction <maximumf>, %217, %cst_100 [1] : vector<16x16xf32> to vector<16xf32>
    %219 = vector.shape_cast %218 : vector<16xf32> to vector<16x1xf32>
    %220 = vector.broadcast %219 : vector<16x1xf32> to vector<16x16xf32>
    %221 = arith.subf %217, %220 : vector<16x16xf32>
    %222 = math.exp %221 : vector<16x16xf32>
    %cst_101 = arith.constant dense<0.000000e+00> : vector<16xf32>
    %223 = vector.multi_reduction <add>, %222, %cst_101 [1] : vector<16x16xf32> to vector<16xf32>
    %224 = vector.shape_cast %223 : vector<16xf32> to vector<16x1xf32>
    %225 = tpu.reciprocal %224 {approx = true} : vector<16x1xf32> -> vector<16x1xf32>
    %226 = vector.broadcast %225 : vector<16x1xf32> to vector<16x16xf32>
    %227 = arith.mulf %222, %226 : vector<16x16xf32>
    %228 = arith.truncf %227 : vector<16x16xf32> to vector<16x16xbf16>
    %cst_102 = arith.constant dense<0.000000e+00> : vector<16x8xf32>
    %229 = tpu.matmul %228, %215, %cst_102 {dimension_numbers = #tpu.dot_dimension_numbers<[1], [0], [0], [1], [0, 0, 1, 1], [], []>} : vector<16x16xbf16>, vector<16x8xbf16>, vector<16x8xf32> -> vector<16x8xf32>
    %230 = vector.extract_strided_slice %177 {offsets = [0, 24], sizes = [16, 8], strides = [1, 1]} : vector<16x96xbf16> to vector<16x8xbf16>
    %231 = vector.extract_strided_slice %177 {offsets = [0, 56], sizes = [16, 8], strides = [1, 1]} : vector<16x96xbf16> to vector<16x8xbf16>
    %232 = vector.extract_strided_slice %177 {offsets = [0, 88], sizes = [16, 8], strides = [1, 1]} : vector<16x96xbf16> to vector<16x8xbf16>
    %cst_103 = arith.constant dense<0.000000e+00> : vector<16x16xf32>
    %233 = tpu.matmul %230, %231, %cst_103 {dimension_numbers = #tpu.dot_dimension_numbers<[1], [1], [0], [0], [0, 0, 1, 0], [], []>} : vector<16x8xbf16>, vector<16x8xbf16>, vector<16x16xf32> -> vector<16x16xf32>
    %234 = arith.addf %233, %178 : vector<16x16xf32>
    %cst_104 = arith.constant dense<0xFF800000> : vector<16xf32>
    %235 = vector.multi_reduction <maximumf>, %234, %cst_104 [1] : vector<16x16xf32> to vector<16xf32>
    %236 = vector.shape_cast %235 : vector<16xf32> to vector<16x1xf32>
    %237 = vector.broadcast %236 : vector<16x1xf32> to vector<16x16xf32>
    %238 = arith.subf %234, %237 : vector<16x16xf32>
    %239 = math.exp %238 : vector<16x16xf32>
    %cst_105 = arith.constant dense<0.000000e+00> : vector<16xf32>
    %240 = vector.multi_reduction <add>, %239, %cst_105 [1] : vector<16x16xf32> to vector<16xf32>
    %241 = vector.shape_cast %240 : vector<16xf32> to vector<16x1xf32>
    %242 = tpu.reciprocal %241 {approx = true} : vector<16x1xf32> -> vector<16x1xf32>
    %243 = vector.broadcast %242 : vector<16x1xf32> to vector<16x16xf32>
    %244 = arith.mulf %239, %243 : vector<16x16xf32>
    %245 = arith.truncf %244 : vector<16x16xf32> to vector<16x16xbf16>
    %cst_106 = arith.constant dense<0.000000e+00> : vector<16x8xf32>
    %246 = tpu.matmul %245, %232, %cst_106 {dimension_numbers = #tpu.dot_dimension_numbers<[1], [0], [0], [1], [0, 0, 1, 1], [], []>} : vector<16x16xbf16>, vector<16x8xbf16>, vector<16x8xf32> -> vector<16x8xf32>
    %247 = tpu.concatenate %195, %212, %229, %246 in 1 : vector<16x8xf32>, vector<16x8xf32>, vector<16x8xf32>, vector<16x8xf32> -> vector<16x32xf32>
    %248 = arith.truncf %247 : vector<16x32xf32> to vector<16x32xbf16>
    %c0_107 = arith.constant 0 : index
    %c0_108 = arith.constant 0 : index
    %249 = vector.load %arg19[%c0_107, %c0_108] : memref<32x32xbf16, #tpu.memory_space<vmem>>, vector<32x32xbf16>
    %cst_109 = arith.constant dense<0.000000e+00> : vector<16x32xf32>
    %250 = tpu.matmul %248, %249, %cst_109 {dimension_numbers = #tpu.dot_dimension_numbers<[1], [0], [0], [1], [0, 0, 1, 1], [], []>} : vector<16x32xbf16>, vector<32x32xbf16>, vector<16x32xf32> -> vector<16x32xf32>
    %c0_110 = arith.constant 0 : index
    %c0_111 = arith.constant 0 : index
    %251 = vector.load %arg20[%c0_110, %c0_111] : memref<1x32xf32, #tpu.memory_space<vmem>>, vector<1x32xf32>
    %252 = vector.broadcast %251 : vector<1x32xf32> to vector<16x32xf32>
    %253 = arith.addf %250, %252 : vector<16x32xf32>
    %254 = arith.addf %170, %253 : vector<16x32xf32>
    %cst_112 = arith.constant dense<0.000000e+00> : vector<16xf32>
    %255 = vector.multi_reduction <add>, %254, %cst_112 [1] : vector<16x32xf32> to vector<16xf32>
    %256 = vector.shape_cast %255 : vector<16xf32> to vector<16x1xf32>
    %cst_113 = arith.constant 3.200000e+01 : f32
    %257 = vector.broadcast %cst_113 : f32 to vector<16x1xf32>
    %258 = arith.divf %256, %257 : vector<16x1xf32>
    %259 = vector.broadcast %258 : vector<16x1xf32> to vector<16x32xf32>
    %260 = arith.subf %254, %259 : vector<16x32xf32>
    %261 = arith.mulf %260, %260 : vector<16x32xf32>
    %cst_114 = arith.constant dense<0.000000e+00> : vector<16xf32>
    %262 = vector.multi_reduction <add>, %261, %cst_114 [1] : vector<16x32xf32> to vector<16xf32>
    %263 = vector.shape_cast %262 : vector<16xf32> to vector<16x1xf32>
    %cst_115 = arith.constant 3.200000e+01 : f32
    %264 = vector.broadcast %cst_115 : f32 to vector<16x1xf32>
    %265 = arith.divf %263, %264 : vector<16x1xf32>
    %cst_116 = arith.constant 9.99999974E-6 : f32
    %266 = vector.broadcast %cst_116 : f32 to vector<16x1xf32>
    %267 = arith.addf %265, %266 : vector<16x1xf32>
    %268 = math.rsqrt %267 : vector<16x1xf32>
    %269 = vector.broadcast %268 : vector<16x1xf32> to vector<16x32xf32>
    %270 = arith.mulf %260, %269 : vector<16x32xf32>
    %c0_117 = arith.constant 0 : index
    %c0_118 = arith.constant 0 : index
    %271 = vector.load %arg21[%c0_117, %c0_118] : memref<1x32xf32, #tpu.memory_space<vmem>>, vector<1x32xf32>
    %272 = vector.broadcast %271 : vector<1x32xf32> to vector<16x32xf32>
    %273 = arith.mulf %270, %272 : vector<16x32xf32>
    %c0_119 = arith.constant 0 : index
    %c0_120 = arith.constant 0 : index
    %274 = vector.load %arg22[%c0_119, %c0_120] : memref<1x32xf32, #tpu.memory_space<vmem>>, vector<1x32xf32>
    %275 = vector.broadcast %274 : vector<1x32xf32> to vector<16x32xf32>
    %276 = arith.addf %273, %275 : vector<16x32xf32>
    %277 = arith.truncf %276 : vector<16x32xf32> to vector<16x32xbf16>
    %c0_121 = arith.constant 0 : index
    %c0_122 = arith.constant 0 : index
    %278 = vector.load %arg23[%c0_121, %c0_122] : memref<32x4xbf16, #tpu.memory_space<vmem>>, vector<32x4xbf16>
    %cst_123 = arith.constant dense<0.000000e+00> : vector<16x4xf32>
    %279 = tpu.matmul %277, %278, %cst_123 {dimension_numbers = #tpu.dot_dimension_numbers<[1], [0], [0], [1], [0, 0, 1, 1], [], []>} : vector<16x32xbf16>, vector<32x4xbf16>, vector<16x4xf32> -> vector<16x4xf32>
    %c0_124 = arith.constant 0 : index
    %c0_125 = arith.constant 0 : index
    %280 = vector.load %arg24[%c0_124, %c0_125] : memref<1x4xf32, #tpu.memory_space<vmem>>, vector<1x4xf32>
    %281 = vector.broadcast %280 : vector<1x4xf32> to vector<16x4xf32>
    %282 = arith.addf %279, %281 : vector<16x4xf32>
    %283 = arith.mulf %282, %53 : vector<16x4xf32>
    %284 = arith.addf %283, %52 : vector<16x4xf32>
    %c0_126 = arith.constant 0 : index
    %c0_127 = arith.constant 0 : index
    %285 = vector.load %arg25[%c0_126, %c0_127] : memref<16x4xf32, #tpu.memory_space<vmem>>, vector<16x4xf32>
    tpu.vector_store %arg25[%c0_126, %c0_127], %284 {strides = array<i32>} : memref<16x4xf32, #tpu.memory_space<vmem>>, vector<16x4xf32>,
    return
  }
}

</mosaic_0001>

<llo_original>
// kernel: model_forward.1
$region0: #{model_forward.1}
  #allocation0 [shape = 'u32[]', space=smem, size = 0x4, offset = 0x4, fixed_abs, tag = 'smem constant byte address 0x4 - core index']
  #allocation1 [shape = 'u32[144,128]{1,0:T(1,128)}', space=vmem, size = 0x12000, scoped, tag = 'internal scratch']
  %s0 = inlined_call_operand.vmem [shape: f32[16,4], index: 0, kind: input, shape index: {}]
  %s1 = inlined_call_operand.vmem [shape: bf16[16,128], index: 1, kind: input, shape index: {}]
  %s2 = inlined_call_operand.vmem [shape: bf16[16,52], index: 2, kind: input, shape index: {}]
  %s3 = inlined_call_operand.vmem [shape: bf16[4,64,256], index: 3, kind: input, shape index: {}]
  %s4 = inlined_call_operand.vmem [shape: bf16[4,256,64], index: 4, kind: input, shape index: {}]
  %s5 = inlined_call_operand.vmem [shape: bf16[4,32], index: 5, kind: input, shape index: {}]
  %s6 = inlined_call_operand.vmem [shape: bf16[16,16], index: 6, kind: input, shape index: {}]
  %s7 = inlined_call_operand.vmem [shape: bf16[32,256], index: 7, kind: input, shape index: {}]
  %s8 = inlined_call_operand.vmem [shape: f32[1,256], index: 8, kind: input, shape index: {}]
  %s9 = inlined_call_operand.vmem [shape: bf16[256,128], index: 9, kind: input, shape index: {}]
  %s10 = inlined_call_operand.vmem [shape: f32[1,128], index: 10, kind: input, shape index: {}]
  %s11 = inlined_call_operand.vmem [shape: bf16[128,32], index: 11, kind: input, shape index: {}]
  %s12 = inlined_call_operand.vmem [shape: bf16[128,32], index: 12, kind: input, shape index: {}]
  %s13 = inlined_call_operand.vmem [shape: bf16[52,32], index: 13, kind: input, shape index: {}]
  %s14 = inlined_call_operand.vmem [shape: bf16[4,32], index: 14, kind: input, shape index: {}]
  %s15 = inlined_call_operand.vmem [shape: f32[1,32], index: 15, kind: input, shape index: {}]
  %s16 = inlined_call_operand.vmem [shape: bf16[32,96], index: 16, kind: input, shape index: {}]
  %s17 = inlined_call_operand.vmem [shape: f32[1,96], index: 17, kind: input, shape index: {}]
  %s18 = inlined_call_operand.vmem [shape: f32[16,16], index: 18, kind: input, shape index: {}]
  %s19 = inlined_call_operand.vmem [shape: bf16[32,32], index: 19, kind: input, shape index: {}]
  %s20 = inlined_call_operand.vmem [shape: f32[1,32], index: 20, kind: input, shape index: {}]
  %s21 = inlined_call_operand.vmem [shape: f32[1,32], index: 21, kind: input, shape index: {}]
  %s22 = inlined_call_operand.vmem [shape: f32[1,32], index: 22, kind: input, shape index: {}]
  %s23 = inlined_call_operand.vmem [shape: bf16[32,4], index: 23, kind: input, shape index: {}]
  %s24 = inlined_call_operand.vmem [shape: f32[1,4], index: 24, kind: input, shape index: {}]
  %s25 = inlined_call_operand.vmem [shape: f32[16,4], index: 25, kind: output, shape index: {}]
  %s26 = sld [smem:[#allocation0]]
  $region110: #{model_forward.1} parent=0
    _
  %s28 = ssub.s32 1, %s26
  %s29 = scalar_select 0, %s28, %s26
  // Predicated region
  $region2: #{model_forward.1} parent=0 // pred_check
    _
  $region3: #{model_forward.1} parent=0 // pred_check_branch
    %31 = sbr.rel (0) target = $region5
  $region4: #{model_forward.1} parent=0 // pred_region
    _
  $region5: #{model_forward.1} parent=0 // pred_fallthru
    _
  // Predicated region
  $region6: #{model_forward.1} parent=0 // pred_check
    _
  $region7: #{model_forward.1} parent=0 // pred_check_branch
    %33 = sbr.rel (0) target = $region9
  $region8: #{model_forward.1} parent=0 // pred_region
    _
  $region9: #{model_forward.1} parent=0 // pred_fallthru
    _
  // Predicated region
  $region10: #{model_forward.1} parent=0 // pred_check
    _
  $region11: #{model_forward.1} parent=0 // pred_check_branch
    %35 = sbr.rel (0) target = $region13
  $region12: #{model_forward.1} parent=0 // pred_region
    _
  $region13: #{model_forward.1} parent=0 // pred_fallthru
    _
  // Predicated region
  $region14: #{model_forward.1} parent=0 // pred_check
    _
  $region15: #{model_forward.1} parent=0 // pred_check_branch
    %37 = sbr.rel (0) target = $region17
  $region16: #{model_forward.1} parent=0 // pred_region
    _
  $region17: #{model_forward.1} parent=0 // pred_fallthru
    _
  // Predicated region
  $region18: #{model_forward.1} parent=0 // pred_check
    _
  $region19: #{model_forward.1} parent=0 // pred_check_branch
    %39 = sbr.rel (0) target = $region21
  $region20: #{model_forward.1} parent=0 // pred_region
    _
  $region21: #{model_forward.1} parent=0 // pred_fallthru
    _
  // Predicated region
  $region22: #{model_forward.1} parent=0 // pred_check
    _
  $region23: #{model_forward.1} parent=0 // pred_check_branch
    %41 = sbr.rel (0) target = $region25
  $region24: #{model_forward.1} parent=0 // pred_region
    _
  $region25: #{model_forward.1} parent=0 // pred_fallthru
    _
  // Predicated region
  $region26: #{model_forward.1} parent=0 // pred_check
    _
  $region27: #{model_forward.1} parent=0 // pred_check_branch
    %43 = sbr.rel (0) target = $region29
  $region28: #{model_forward.1} parent=0 // pred_region
    _
  $region29: #{model_forward.1} parent=0 // pred_fallthru
    _
  // Predicated region
  $region30: #{model_forward.1} parent=0 // pred_check
    _
  $region31: #{model_forward.1} parent=0 // pred_check_branch
    %45 = sbr.rel (0) target = $region33
  $region32: #{model_forward.1} parent=0 // pred_region
    _
  $region33: #{model_forward.1} parent=0 // pred_fallthru
    _
  // Predicated region
  $region34: #{model_forward.1} parent=0 // pred_check
    _
  $region35: #{model_forward.1} parent=0 // pred_check_branch
    %47 = sbr.rel (0) target = $region37
  $region36: #{model_forward.1} parent=0 // pred_region
    _
  $region37: #{model_forward.1} parent=0 // pred_fallthru
    _
  // Predicated region
  $region38: #{model_forward.1} parent=0 // pred_check
    _
  $region39: #{model_forward.1} parent=0 // pred_check_branch
    %49 = sbr.rel (0) target = $region41
  $region40: #{model_forward.1} parent=0 // pred_region
    _
  $region41: #{model_forward.1} parent=0 // pred_fallthru
    _
  // Predicated region
  $region42: #{model_forward.1} parent=0 // pred_check
    _
  $region43: #{model_forward.1} parent=0 // pred_check_branch
    %51 = sbr.rel (0) target = $region45
  $region44: #{model_forward.1} parent=0 // pred_region
    _
  $region45: #{model_forward.1} parent=0 // pred_fallthru
    _
  // Predicated region
  $region46: #{model_forward.1} parent=0 // pred_check
    _
  $region47: #{model_forward.1} parent=0 // pred_check_branch
    %53 = sbr.rel (0) target = $region49
  $region48: #{model_forward.1} parent=0 // pred_region
    _
  $region49: #{model_forward.1} parent=0 // pred_fallthru
    _
  // Predicated region
  $region50: #{model_forward.1} parent=0 // pred_check
    _
  $region51: #{model_forward.1} parent=0 // pred_check_branch
    %55 = sbr.rel (0) target = $region53
  $region52: #{model_forward.1} parent=0 // pred_region
    _
  $region53: #{model_forward.1} parent=0 // pred_fallthru
    _
  // Predicated region
  $region54: #{model_forward.1} parent=0 // pred_check
    _
  $region55: #{model_forward.1} parent=0 // pred_check_branch
    %57 = sbr.rel (0) target = $region57
  $region56: #{model_forward.1} parent=0 // pred_region
    _
  $region57: #{model_forward.1} parent=0 // pred_fallthru
    _
  // Predicated region
  $region58: #{model_forward.1} parent=0 // pred_check
    _
  $region59: #{model_forward.1} parent=0 // pred_check_branch
    %59 = sbr.rel (0) target = $region61
  $region60: #{model_forward.1} parent=0 // pred_region
    _
  $region61: #{model_forward.1} parent=0 // pred_fallthru
    _
  // Predicated region
  $region62: #{model_forward.1} parent=0 // pred_check
    _
  $region63: #{model_forward.1} parent=0 // pred_check_branch
    %61 = sbr.rel (0) target = $region65
  $region64: #{model_forward.1} parent=0 // pred_region
    _
  $region65: #{model_forward.1} parent=0 // pred_fallthru
    _
  // Predicated region
  $region66: #{model_forward.1} parent=0 // pred_check
    _
  $region67: #{model_forward.1} parent=0 // pred_check_branch
    %63 = sbr.rel (0) target = $region69
  $region68: #{model_forward.1} parent=0 // pred_region
    _
  $region69: #{model_forward.1} parent=0 // pred_fallthru
    _
  // Predicated region
  $region70: #{model_forward.1} parent=0 // pred_check
    _
  $region71: #{model_forward.1} parent=0 // pred_check_branch
    %65 = sbr.rel (0) target = $region73
  $region72: #{model_forward.1} parent=0 // pred_region
    _
  $region73: #{model_forward.1} parent=0 // pred_fallthru
    _
  // Predicated region
  $region74: #{model_forward.1} parent=0 // pred_check
    _
  $region75: #{model_forward.1} parent=0 // pred_check_branch
    %67 = sbr.rel (0) target = $region77
  $region76: #{model_forward.1} parent=0 // pred_region
    _
  $region77: #{model_forward.1} parent=0 // pred_fallthru
    _
  // Predicated region
  $region78: #{model_forward.1} parent=0 // pred_check
    _
  $region79: #{model_forward.1} parent=0 // pred_check_branch
    %69 = sbr.rel (0) target = $region81
  $region80: #{model_forward.1} parent=0 // pred_region
    _
  $region81: #{model_forward.1} parent=0 // pred_fallthru
    _
  // Predicated region
  $region82: #{model_forward.1} parent=0 // pred_check
    _
  $region83: #{model_forward.1} parent=0 // pred_check_branch
    %71 = sbr.rel (0) target = $region85
  $region84: #{model_forward.1} parent=0 // pred_region
    _
  $region85: #{model_forward.1} parent=0 // pred_fallthru
    _
  // Predicated region
  $region86: #{model_forward.1} parent=0 // pred_check
    _
  $region87: #{model_forward.1} parent=0 // pred_check_branch
    %73 = sbr.rel (0) target = $region89
  $region88: #{model_forward.1} parent=0 // pred_region
    _
  $region89: #{model_forward.1} parent=0 // pred_fallthru
    _
  // Predicated region
  $region90: #{model_forward.1} parent=0 // pred_check
    _
  $region91: #{model_forward.1} parent=0 // pred_check_branch
    %75 = sbr.rel (0) target = $region93
  $region92: #{model_forward.1} parent=0 // pred_region
    _
  $region93: #{model_forward.1} parent=0 // pred_fallthru
    _
  // Predicated region
  $region94: #{model_forward.1} parent=0 // pred_check
    _
  $region95: #{model_forward.1} parent=0 // pred_check_branch
    %77 = sbr.rel (0) target = $region97
  $region96: #{model_forward.1} parent=0 // pred_region
    _
  $region97: #{model_forward.1} parent=0 // pred_fallthru
    _
  // Predicated region
  $region98: #{model_forward.1} parent=0 // pred_check
    _
  $region99: #{model_forward.1} parent=0 // pred_check_branch
    %79 = sbr.rel (0) target = $region101
  $region100: #{model_forward.1} parent=0 // pred_region
    _
  $region101: #{model_forward.1} parent=0 // pred_fallthru
    _
  %v81 = vld [vmem:[%s0] sm:$0xff]
  %v82 = vld [vmem:[%s0 + $0x8] sm:$0xff]
  %vm83 = vcmask 31744
  %v84 = vsel %vm83, %v81, 0.0
  %v85 = vrot.slane %v84, 4
  %v86 = vadd.f32 %v84, %v85
  %v87 = vrot.slane %v86, 2
  %v88 = vadd.f32 %v86, %v87
  %v89 = vrot.slane %v88, 1
  %v90 = vadd.f32 %v88, %v89
  %v91 = vrcp.pop 8.0
  %v92 = vmul.f32 %v90, %v91
  %v93 = vsub.f32 %v81, %v92
  %v94 = vmul.f32 %v93, %v93
  %v95 = vsel %vm83, %v94, 0.0
  %v96 = vrot.slane %v95, 4
  %v97 = vadd.f32 %v95, %v96
  %v98 = vrot.slane %v97, 2
  %v99 = vadd.f32 %v97, %v98
  %v100 = vrot.slane %v99, 1
  %v101 = vadd.f32 %v99, %v100
  %v102 = vmul.f32 %v101, %v91
  %v103 = vadd.f32 %v102, 1e-05
  %v104 = vrsqrt.pop %v103
  %v105 = vmul.f32 %v103, %v104
  %vm106 = vcmp.eq.f32.partialorder %v103, inf
  %v107 = vsel %vm106, %v103, %v105
  %vm108 = vcmp.eq.f32.partialorder %v103, 0.0
  %v109 = vand.u32 %v103, 2147483648
  %v110 = vsel %vm108, %v109, %v107
  %v111 = vrcp.pop %v110
  %v112 = vmul.f32 %v93, %v111
  %v113 = vsub.f32 %v112, %v92
  %v114 = vmul.f32 %v113, %v111
  %v115 = vsel %vm83, %v82, 0.0
  %v116 = vrot.slane %v115, 4
  %v117 = vadd.f32 %v115, %v116
  %v118 = vrot.slane %v117, 2
  %v119 = vadd.f32 %v117, %v118
  %v120 = vrot.slane %v119, 1
  %v121 = vadd.f32 %v119, %v120
  %v122 = vmul.f32 %v121, %v91
  %v123 = vsub.f32 %v82, %v122
  %v124 = vmul.f32 %v123, %v123
  %v125 = vsel %vm83, %v124, 0.0
  %v126 = vrot.slane %v125, 4
  %v127 = vadd.f32 %v125, %v126
  %v128 = vrot.slane %v127, 2
  %v129 = vadd.f32 %v127, %v128
  %v130 = vrot.slane %v129, 1
  %v131 = vadd.f32 %v129, %v130
  %v132 = vmul.f32 %v131, %v91
  %v133 = vadd.f32 %v132, 1e-05
  %v134 = vrsqrt.pop %v133
  %v135 = vmul.f32 %v133, %v134
  %vm136 = vcmp.eq.f32.partialorder %v133, inf
  %v137 = vsel %vm136, %v133, %v135
  %vm138 = vcmp.eq.f32.partialorder %v133, 0.0
  %v139 = vand.u32 %v133, 2147483648
  %v140 = vsel %vm138, %v139, %v137
  %v141 = vrcp.pop %v140
  %v142 = vmul.f32 %v123, %v141
  %v143 = vsub.f32 %v142, %v122
  %v144 = vmul.f32 %v143, %v141
  %v145 = vpack.c.bf16 %v144, %v114
  %v146 = vld [vmem:[%s5] sm:$0x3]
  %147 = vxpose.xlu0.c.b16.start [1/8] %v145, 128
  %148 = vxpose.xlu0.c.b16.cont [2/8] 0, 128
  %149 = vxpose.xlu0.c.b16.cont [3/8] 0, 128
  %150 = vxpose.xlu0.c.b16.cont [4/8] 0, 128
  %151 = vxpose.xlu0.c.b16.cont [5/8] 0, 128
  %152 = vxpose.xlu0.c.b16.cont [6/8] 0, 128
  %153 = vxpose.xlu0.c.b16.cont [7/8] 0, 128
  %154 = vxpose.xlu0.c.b16.end [8/8] 0, 128
  %v155 = vpop.trf.xlu0
  %v156 = vpop.trf.xlu0
  %v157 = vpop.trf.xlu0
  %v158 = vpop.trf.xlu0
  %v159 = vpop.trf.xlu0
  %v160 = vpop.trf.xlu0
  %v161 = vpop.trf.xlu0
  %v162 = vpop.trf.xlu0
  %v164 = vsel %vm83, %v155, 0
  %vm166 = vcmask 1041408
  %v168 = vsel %vm166, %v146, 0
  %170 = vmatprep.subr.bf16.mxu0 0
  %171 = vmatpush1.bf16.msra.mxu0 0
  %172 = vmatprep.subr.bf16.mxu0 0
  %173 = vmatpush1.bf16.msra.mxu0 0
  %174 = vmatprep.subr.bf16.mxu0 0
  %175 = vmatpush1.bf16.msra.mxu0 0
  %176 = vmatprep.subr.bf16.mxu0 0
  %177 = vmatpush1.bf16.msra.mxu0 0
  %178 = vmatprep.subr.bf16.mxu0 0
  %179 = vmatpush1.bf16.msra.mxu0 0
  %180 = vmatprep.subr.bf16.mxu0 0
  %181 = vmatpush1.bf16.msra.mxu0 0
  %182 = vmatprep.subr.bf16.mxu0 0
  %183 = vmatpush1.bf16.msra.mxu0 0
  %184 = vmatprep.subr.bf16.mxu0 0
  %185 = vmatpush1.bf16.msra.mxu0 %v168
  %186 = vmatprep.subr.bf16.mxu0 0
  %187 = vmatpush2.bf16.msra.mxu0 0
  %188 = vmatprep.subr.bf16.mxu0 0
  %189 = vmatpush2.bf16.msra.mxu0 0
  %190 = vmatprep.subr.bf16.mxu0 0
  %191 = vmatpush2.bf16.msra.mxu0 0
  %192 = vmatprep.subr.bf16.mxu0 0
  %193 = vmatpush2.bf16.msra.mxu0 0
  %194 = vmatprep.subr.bf16.mxu0 0
  %195 = vmatpush2.bf16.msra.mxu0 0
  %196 = vmatprep.subr.bf16.mxu0 0
  %197 = vmatpush2.bf16.msra.mxu0 0
  %198 = vmatprep.subr.bf16.mxu0 0
  %199 = vmatpush2.bf16.msra.mxu0 0
  %200 = vmatprep.subr.bf16.mxu0 0
  %201 = vmatpush2.bf16.msra.mxu0 0
  %202 = vmatprep.mubr.bf16.mxu0 0
  %203 = vmatmul.mubr.bf16.gmra.mxu0 %v164
  %v204 = vpop.f32.mrf.mxu0
  %v205 = vadd.f32 0.0, %v204
  %v206 = vpop.f32.mrf.mxu0
  %v207 = vpop.f32.mrf.mxu0
  %v208 = vpop.f32.mrf.mxu0
  %209 = vdwg.mxu0
  %v211 = vrot.slane %v145, 2
  %213 = vxpose.xlu0.c.b16.start [1/8] %v211, 128
  %214 = vxpose.xlu0.c.b16.cont [2/8] 0, 128
  %215 = vxpose.xlu0.c.b16.cont [3/8] 0, 128
  %216 = vxpose.xlu0.c.b16.cont [4/8] 0, 128
  %217 = vxpose.xlu0.c.b16.cont [5/8] 0, 128
  %218 = vxpose.xlu0.c.b16.cont [6/8] 0, 128
  %219 = vxpose.xlu0.c.b16.cont [7/8] 0, 128
  %220 = vxpose.xlu0.c.b16.end [8/8] 0, 128
  %v221 = vpop.trf.xlu0
  %v222 = vpop.trf.xlu0
  %v223 = vpop.trf.xlu0
  %v224 = vpop.trf.xlu0
  %v225 = vpop.trf.xlu0
  %v226 = vpop.trf.xlu0
  %v227 = vpop.trf.xlu0
  %v228 = vpop.trf.xlu0
  %v230 = vsel %vm83, %v221, 0
  %232 = vmatprep.subr.bf16.mxu0 0
  %233 = vmatpush1.bf16.msra.mxu0 0
  %234 = vmatprep.subr.bf16.mxu0 0
  %235 = vmatpush1.bf16.msra.mxu0 0
  %236 = vmatprep.subr.bf16.mxu0 0
  %237 = vmatpush1.bf16.msra.mxu0 0
  %238 = vmatprep.subr.bf16.mxu0 0
  %239 = vmatpush1.bf16.msra.mxu0 0
  %240 = vmatprep.subr.bf16.mxu0 0
  %241 = vmatpush1.bf16.msra.mxu0 0
  %242 = vmatprep.subr.bf16.mxu0 0
  %243 = vmatpush1.bf16.msra.mxu0 0
  %244 = vmatprep.subr.bf16.mxu0 0
  %245 = vmatpush1.bf16.msra.mxu0 0
  %246 = vmatprep.subr.bf16.mxu0 0
  %247 = vmatpush1.bf16.msra.mxu0 %v168
  %248 = vmatprep.subr.bf16.mxu0 0
  %249 = vmatpush2.bf16.msra.mxu0 0
  %250 = vmatprep.subr.bf16.mxu0 0
  %251 = vmatpush2.bf16.msra.mxu0 0
  %252 = vmatprep.subr.bf16.mxu0 0
  %253 = vmatpush2.bf16.msra.mxu0 0
  %254 = vmatprep.subr.bf16.mxu0 0
  %255 = vmatpush2.bf16.msra.mxu0 0
  %256 = vmatprep.subr.bf16.mxu0 0
  %257 = vmatpush2.bf16.msra.mxu0 0
  %258 = vmatprep.subr.bf16.mxu0 0
  %259 = vmatpush2.bf16.msra.mxu0 0
  %260 = vmatprep.subr.bf16.mxu0 0
  %261 = vmatpush2.bf16.msra.mxu0 0
  %262 = vmatprep.subr.bf16.mxu0 0
  %263 = vmatpush2.bf16.msra.mxu0 0
  %264 = vmatprep.mubr.bf16.mxu0 0
  %265 = vmatmul.mubr.bf16.gmra.mxu0 %v230
  %v266 = vpop.f32.mrf.mxu0
  %v267 = vadd.f32 0.0, %v266
  %v268 = vpop.f32.mrf.mxu0
  %v269 = vpop.f32.mrf.mxu0
  %v270 = vpop.f32.mrf.mxu0
  %271 = vdwg.mxu0
  %v272 = vrot.slane %v145, 4
  %274 = vxpose.xlu0.c.b16.start [1/8] %v272, 128
  %275 = vxpose.xlu0.c.b16.cont [2/8] 0, 128
  %276 = vxpose.xlu0.c.b16.cont [3/8] 0, 128
  %277 = vxpose.xlu0.c.b16.cont [4/8] 0, 128
  %278 = vxpose.xlu0.c.b16.cont [5/8] 0, 128
  %279 = vxpose.xlu0.c.b16.cont [6/8] 0, 128
  %280 = vxpose.xlu0.c.b16.cont [7/8] 0, 128
  %281 = vxpose.xlu0.c.b16.end [8/8] 0, 128
  %v282 = vpop.trf.xlu0
  %v283 = vpop.trf.xlu0
  %v284 = vpop.trf.xlu0
  %v285 = vpop.trf.xlu0
  %v286 = vpop.trf.xlu0
  %v287 = vpop.trf.xlu0
  %v288 = vpop.trf.xlu0
  %v289 = vpop.trf.xlu0
  %v291 = vsel %vm83, %v282, 0
  %293 = vmatprep.subr.bf16.mxu0 0
  %294 = vmatpush1.bf16.msra.mxu0 0
  %295 = vmatprep.subr.bf16.mxu0 0
  %296 = vmatpush1.bf16.msra.mxu0 0
  %297 = vmatprep.subr.bf16.mxu0 0
  %298 = vmatpush1.bf16.msra.mxu0 0
  %299 = vmatprep.subr.bf16.mxu0 0
  %300 = vmatpush1.bf16.msra.mxu0 0
  %301 = vmatprep.subr.bf16.mxu0 0
  %302 = vmatpush1.bf16.msra.mxu0 0
  %303 = vmatprep.subr.bf16.mxu0 0
  %304 = vmatpush1.bf16.msra.mxu0 0
  %305 = vmatprep.subr.bf16.mxu0 0
  %306 = vmatpush1.bf16.msra.mxu0 0
  %307 = vmatprep.subr.bf16.mxu0 0
  %308 = vmatpush1.bf16.msra.mxu0 %v168
  %309 = vmatprep.subr.bf16.mxu0 0
  %310 = vmatpush2.bf16.msra.mxu0 0
  %311 = vmatprep.subr.bf16.mxu0 0
  %312 = vmatpush2.bf16.msra.mxu0 0
  %313 = vmatprep.subr.bf16.mxu0 0
  %314 = vmatpush2.bf16.msra.mxu0 0
  %315 = vmatprep.subr.bf16.mxu0 0
  %316 = vmatpush2.bf16.msra.mxu0 0
  %317 = vmatprep.subr.bf16.mxu0 0
  %318 = vmatpush2.bf16.msra.mxu0 0
  %319 = vmatprep.subr.bf16.mxu0 0
  %320 = vmatpush2.bf16.msra.mxu0 0
  %321 = vmatprep.subr.bf16.mxu0 0
  %322 = vmatpush2.bf16.msra.mxu0 0
  %323 = vmatprep.subr.bf16.mxu0 0
  %324 = vmatpush2.bf16.msra.mxu0 0
  %325 = vmatprep.mubr.bf16.mxu0 0
  %326 = vmatmul.mubr.bf16.gmra.mxu0 %v291
  %v327 = vpop.f32.mrf.mxu0
  %v328 = vadd.f32 0.0, %v327
  %v329 = vpop.f32.mrf.mxu0
  %v330 = vpop.f32.mrf.mxu0
  %v331 = vpop.f32.mrf.mxu0
  %332 = vdwg.mxu0
  %v333 = vrot.slane %v145, 6
  %335 = vxpose.xlu0.c.b16.start [1/8] %v333, 128
  %336 = vxpose.xlu0.c.b16.cont [2/8] 0, 128
  %337 = vxpose.xlu0.c.b16.cont [3/8] 0, 128
  %338 = vxpose.xlu0.c.b16.cont [4/8] 0, 128
  %339 = vxpose.xlu0.c.b16.cont [5/8] 0, 128
  %340 = vxpose.xlu0.c.b16.cont [6/8] 0, 128
  %341 = vxpose.xlu0.c.b16.cont [7/8] 0, 128
  %342 = vxpose.xlu0.c.b16.end [8/8] 0, 128
  %v343 = vpop.trf.xlu0
  %v344 = vpop.trf.xlu0
  %v345 = vpop.trf.xlu0
  %v346 = vpop.trf.xlu0
  %v347 = vpop.trf.xlu0
  %v348 = vpop.trf.xlu0
  %v349 = vpop.trf.xlu0
  %v350 = vpop.trf.xlu0
  %v352 = vsel %vm83, %v343, 0
  %354 = vmatprep.subr.bf16.mxu0 0
  %355 = vmatpush1.bf16.msra.mxu0 0
  %356 = vmatprep.subr.bf16.mxu0 0
  %357 = vmatpush1.bf16.msra.mxu0 0
  %358 = vmatprep.subr.bf16.mxu0 0
  %359 = vmatpush1.bf16.msra.mxu0 0
  %360 = vmatprep.subr.bf16.mxu0 0
  %361 = vmatpush1.bf16.msra.mxu0 0
  %362 = vmatprep.subr.bf16.mxu0 0
  %363 = vmatpush1.bf16.msra.mxu0 0
  %364 = vmatprep.subr.bf16.mxu0 0
  %365 = vmatpush1.bf16.msra.mxu0 0
  %366 = vmatprep.subr.bf16.mxu0 0
  %367 = vmatpush1.bf16.msra.mxu0 0
  %368 = vmatprep.subr.bf16.mxu0 0
  %369 = vmatpush1.bf16.msra.mxu0 %v168
  %370 = vmatprep.subr.bf16.mxu0 0
  %371 = vmatpush2.bf16.msra.mxu0 0
  %372 = vmatprep.subr.bf16.mxu0 0
  %373 = vmatpush2.bf16.msra.mxu0 0
  %374 = vmatprep.subr.bf16.mxu0 0
  %375 = vmatpush2.bf16.msra.mxu0 0
  %376 = vmatprep.subr.bf16.mxu0 0
  %377 = vmatpush2.bf16.msra.mxu0 0
  %378 = vmatprep.subr.bf16.mxu0 0
  %379 = vmatpush2.bf16.msra.mxu0 0
  %380 = vmatprep.subr.bf16.mxu0 0
  %381 = vmatpush2.bf16.msra.mxu0 0
  %382 = vmatprep.subr.bf16.mxu0 0
  %383 = vmatpush2.bf16.msra.mxu0 0
  %384 = vmatprep.subr.bf16.mxu0 0
  %385 = vmatpush2.bf16.msra.mxu0 0
  %386 = vmatprep.mubr.bf16.mxu0 0
  %387 = vmatmul.mubr.bf16.gmra.mxu0 %v352
  %v388 = vpop.f32.mrf.mxu0
  %v389 = vadd.f32 0.0, %v388
  %v390 = vpop.f32.mrf.mxu0
  %v391 = vpop.f32.mrf.mxu0
  %v392 = vpop.f32.mrf.mxu0
  %393 = vdwg.mxu0
  %v395 = vrot.slane %v267, 4
  %v398 = vrot.slane %v389, 4
  %vm400 = vcmask 1043456
  %v401 = vsel %vm400, %v205, %v395
  %v402 = vsel %vm400, %v328, %v398
  %v403 = vpack.c.bf16 %v402, %v401
  %v404 = vld [vmem:[%s6] sm:$0xf]
  %v405 = vld [vmem:[%s6 + $0x4] sm:$0xf]
  %v408 = vunpack.c.l.b16 %v404
  %v409 = vunpack.c.l.b16 %v405
  %v410 = vpack.c.b16 %v409, %v408
  %vm411 = vcmask 130048
  %v413 = vsel %vm411, %v410, 0
  %415 = vmatprep.subr.bf16.mxu0 0
  %416 = vmatpush1.bf16.msra.mxu0 0
  %417 = vmatprep.subr.bf16.mxu0 0
  %418 = vmatpush1.bf16.msra.mxu0 0
  %419 = vmatprep.subr.bf16.mxu0 0
  %420 = vmatpush1.bf16.msra.mxu0 0
  %421 = vmatprep.subr.bf16.mxu0 0
  %422 = vmatpush1.bf16.msra.mxu0 0
  %423 = vmatprep.subr.bf16.mxu0 0
  %424 = vmatpush1.bf16.msra.mxu0 0
  %425 = vmatprep.subr.bf16.mxu0 0
  %426 = vmatpush1.bf16.msra.mxu0 0
  %427 = vmatprep.subr.bf16.mxu0 0
  %428 = vmatpush1.bf16.msra.mxu0 0
  %429 = vmatprep.subr.bf16.mxu0 0
  %430 = vmatpush1.bf16.msra.mxu0 %v403
  %431 = vmatprep.subr.bf16.mxu0 0
  %432 = vmatpush2.bf16.msra.mxu0 0
  %433 = vmatprep.subr.bf16.mxu0 0
  %434 = vmatpush2.bf16.msra.mxu0 0
  %435 = vmatprep.subr.bf16.mxu0 0
  %436 = vmatpush2.bf16.msra.mxu0 0
  %437 = vmatprep.subr.bf16.mxu0 0
  %438 = vmatpush2.bf16.msra.mxu0 0
  %439 = vmatprep.subr.bf16.mxu0 0
  %440 = vmatpush2.bf16.msra.mxu0 0
  %441 = vmatprep.subr.bf16.mxu0 0
  %442 = vmatpush2.bf16.msra.mxu0 0
  %443 = vmatprep.subr.bf16.mxu0 0
  %444 = vmatpush2.bf16.msra.mxu0 0
  %445 = vmatprep.subr.bf16.mxu0 0
  %446 = vmatpush2.bf16.msra.mxu0 0
  %447 = vmatprep.mubr.bf16.mxu0 0
  %448 = vmatmul.mubr.bf16.gmra.mxu0 %v413
  %v449 = vpop.f32.mrf.mxu0
  %v450 = vadd.f32 0.0, %v449
  %v451 = vpop.f32.mrf.mxu0
  %v452 = vpop.f32.mrf.mxu0
  %v453 = vadd.f32 0.0, %v452
  %v454 = vpop.f32.mrf.mxu0
  %455 = vdwg.mxu0
  %v456 = vpack.c.bf16 %v453, %v450
  %v457 = vld [vmem:[%s7] sm:$0xff]
  %v458 = vld [vmem:[%s7 + $0x8] sm:$0xff]
  %v459 = vld [vmem:[%s7 + $0x10] sm:$0xff]
  %v460 = vld [vmem:[%s7 + $0x18] sm:$0xff]
  %v461 = vld [vmem:[%s8] sm:$0x3]
  %v463 = vlaneseq
  %v464 = vshrl.u32 %v463, 7
  %v465 = vsub.s32 0, %v464
  %v466 = vrot.slane %v461, %v465
  %v467 = vlaneseq
  %v468 = vshrl.u32 %v467, 7
  %v469 = vsub.s32 1, %v468
  %v470 = vrot.slane %v461, %v469
  %v477 = vunpack.c.l.b16 %v457
  %v478 = vunpack.c.h.b16 %v457
  %v479 = vunpack.c.l.b16 %v458
  %v480 = vunpack.c.h.b16 %v458
  %v481 = vunpack.c.l.b16 %v459
  %v482 = vunpack.c.h.b16 %v459
  %v483 = vunpack.c.l.b16 %v460
  %v484 = vunpack.c.h.b16 %v460
  %v485 = vpack.c.b16 %v479, %v477
  %v486 = vpack.c.b16 %v480, %v478
  %v487 = vpack.c.b16 %v483, %v481
  %v488 = vpack.c.b16 %v484, %v482
  %vm493 = vcmask 261120
  %v495 = vsel %vm493, %v456, 0
  %497 = vmatprep.subr.bf16.mxu0 0
  %498 = vmatpush1.bf16.msra.mxu0 0
  %499 = vmatprep.subr.bf16.mxu0 0
  %500 = vmatpush1.bf16.msra.mxu0 0
  %501 = vmatprep.subr.bf16.mxu0 0
  %502 = vmatpush1.bf16.msra.mxu0 0
  %503 = vmatprep.subr.bf16.mxu0 0
  %504 = vmatpush1.bf16.msra.mxu0 0
  %505 = vmatprep.subr.bf16.mxu0 0
  %506 = vmatpush1.bf16.msra.mxu0 0
  %507 = vmatprep.subr.bf16.mxu0 0
  %508 = vmatpush1.bf16.msra.mxu0 0
  %509 = vmatprep.subr.bf16.mxu0 %v488
  %510 = vmatpush1.bf16.msra.mxu0 %v487
  %511 = vmatprep.subr.bf16.mxu0 %v486
  %512 = vmatpush1.bf16.msra.mxu0 %v485
  %513 = vmatprep.subr.bf16.mxu0 0
  %514 = vmatpush2.bf16.msra.mxu0 0
  %515 = vmatprep.subr.bf16.mxu0 0
  %516 = vmatpush2.bf16.msra.mxu0 0
  %517 = vmatprep.subr.bf16.mxu0 0
  %518 = vmatpush2.bf16.msra.mxu0 0
  %519 = vmatprep.subr.bf16.mxu0 0
  %520 = vmatpush2.bf16.msra.mxu0 0
  %521 = vmatprep.subr.bf16.mxu0 0
  %522 = vmatpush2.bf16.msra.mxu0 0
  %523 = vmatprep.subr.bf16.mxu0 0
  %524 = vmatpush2.bf16.msra.mxu0 0
  %525 = vmatprep.subr.bf16.mxu0 0
  %526 = vmatpush2.bf16.msra.mxu0 0
  %527 = vmatprep.subr.bf16.mxu0 0
  %528 = vmatpush2.bf16.msra.mxu0 0
  %529 = vmatprep.mubr.bf16.mxu0 0
  %530 = vmatmul.mubr.bf16.gmra.mxu0 %v495
  %v531 = vpop.f32.mrf.mxu0
  %v532 = vadd.f32 %v466, %v531
  %v533 = vpop.f32.mrf.mxu0
  %v534 = vadd.f32 %v470, %v533
  %v535 = vpop.f32.mrf.mxu0
  %v536 = vadd.f32 %v466, %v535
  %v537 = vpop.f32.mrf.mxu0
  %v538 = vadd.f32 %v470, %v537
  %539 = vdwg.mxu0
  %v540 = vpack.c.bf16 %v536, %v532
  %v541 = vpack.c.bf16 %v538, %v534
  %v542 = vld [vmem:[%s3] sm:$0xff]
  %v543 = vld [vmem:[%s3 + $0x8] sm:$0xff]
  %v544 = vld [vmem:[%s3 + $0x10] sm:$0xff]
  %v545 = vld [vmem:[%s3 + $0x18] sm:$0xff]
  %v546 = vld [vmem:[%s3 + $0x20] sm:$0xff]
  %v547 = vld [vmem:[%s3 + $0x28] sm:$0xff]
  %v548 = vld [vmem:[%s3 + $0x30] sm:$0xff]
  %v549 = vld [vmem:[%s3 + $0x38] sm:$0xff]
  %v558 = vunpack.c.l.b16 %v542
  %v559 = vunpack.c.h.b16 %v542
  %v560 = vunpack.c.l.b16 %v543
  %v561 = vunpack.c.h.b16 %v543
  %v562 = vunpack.c.l.b16 %v544
  %v563 = vunpack.c.h.b16 %v544
  %v564 = vunpack.c.l.b16 %v545
  %v565 = vunpack.c.h.b16 %v545
  %v566 = vunpack.c.l.b16 %v546
  %v567 = vunpack.c.h.b16 %v546
  %v568 = vunpack.c.l.b16 %v547
  %v569 = vunpack.c.h.b16 %v547
  %v570 = vunpack.c.l.b16 %v548
  %v571 = vunpack.c.h.b16 %v548
  %v572 = vunpack.c.l.b16 %v549
  %v573 = vunpack.c.h.b16 %v549
  %v574 = vpack.c.b16 %v560, %v558
  %v575 = vpack.c.b16 %v561, %v559
  %v576 = vpack.c.b16 %v564, %v562
  %v577 = vpack.c.b16 %v565, %v563
  %v578 = vpack.c.b16 %v568, %v566
  %v579 = vpack.c.b16 %v569, %v567
  %v580 = vpack.c.b16 %v572, %v570
  %v581 = vpack.c.b16 %v573, %v571
  %vm590 = vcmask 523264
  %v592 = vsel %vm590, %v540, 0
  %594 = vmatprep.subr.bf16.mxu0 0
  %595 = vmatpush1.bf16.msra.mxu0 0
  %596 = vmatprep.subr.bf16.mxu0 0
  %597 = vmatpush1.bf16.msra.mxu0 0
  %598 = vmatprep.subr.bf16.mxu0 0
  %599 = vmatpush1.bf16.msra.mxu0 0
  %600 = vmatprep.subr.bf16.mxu0 0
  %601 = vmatpush1.bf16.msra.mxu0 0
  %602 = vmatprep.subr.bf16.mxu0 %v581
  %603 = vmatpush1.bf16.msra.mxu0 %v580
  %604 = vmatprep.subr.bf16.mxu0 %v579
  %605 = vmatpush1.bf16.msra.mxu0 %v578
  %606 = vmatprep.subr.bf16.mxu0 %v577
  %607 = vmatpush1.bf16.msra.mxu0 %v576
  %608 = vmatprep.subr.bf16.mxu0 %v575
  %609 = vmatpush1.bf16.msra.mxu0 %v574
  %610 = vmatprep.subr.bf16.mxu0 0
  %611 = vmatpush2.bf16.msra.mxu0 0
  %612 = vmatprep.subr.bf16.mxu0 0
  %613 = vmatpush2.bf16.msra.mxu0 0
  %614 = vmatprep.subr.bf16.mxu0 0
  %615 = vmatpush2.bf16.msra.mxu0 0
  %616 = vmatprep.subr.bf16.mxu0 0
  %617 = vmatpush2.bf16.msra.mxu0 0
  %618 = vmatprep.subr.bf16.mxu0 0
  %619 = vmatpush2.bf16.msra.mxu0 0
  %620 = vmatprep.subr.bf16.mxu0 0
  %621 = vmatpush2.bf16.msra.mxu0 0
  %622 = vmatprep.subr.bf16.mxu0 0
  %623 = vmatpush2.bf16.msra.mxu0 0
  %624 = vmatprep.subr.bf16.mxu0 0
  %625 = vmatpush2.bf16.msra.mxu0 0
  %626 = vmatprep.mubr.bf16.mxu0 0
  %627 = vmatmul.mubr.bf16.gmra.mxu0 %v592
  %v628 = vpop.f32.mrf.mxu0
  %v629 = vadd.f32 0.0, %v628
  %v630 = vpop.f32.mrf.mxu0
  %v631 = vadd.f32 0.0, %v630
  %v632 = vpop.f32.mrf.mxu0
  %v633 = vadd.f32 0.0, %v632
  %v634 = vpop.f32.mrf.mxu0
  %v635 = vadd.f32 0.0, %v634
  %636 = vdwg.mxu0
  %v637 = vmax.f32 %v629, %v631
  %638 = vmax.xlane.f32.xlu0 %v637
  %v639 = vpop.xlane.xlu0 %638
  %v640 = vmax.f32 %v633, %v635
  %641 = vmax.xlane.f32.xlu0 %v640
  %v642 = vpop.xlane.xlu0 %641
  %v643 = vsub.f32 %v629, %v639
  %v644 = vsub.f32 %v631, %v639
  %v645 = vsub.f32 %v633, %v642
  %v646 = vsub.f32 %v635, %v642
  %v647 = vmul.f32 %v643, 1.442695
  %v648 = vpow.pop %v647
  %v649 = vmul.f32 %v644, 1.442695
  %v650 = vpow.pop %v649
  %v651 = vmul.f32 %v645, 1.442695
  %v652 = vpow.pop %v651
  %v653 = vmul.f32 %v646, 1.442695
  %v654 = vpow.pop %v653
  %v655 = vadd.f32 %v648, %v650
  %656 = vadd.xlane.f32.xlu0 %v655
  %v657 = vpop.xlane.xlu0 %656
  %v658 = vadd.f32 %v652, %v654
  %659 = vadd.xlane.f32.xlu0 %v658
  %v660 = vpop.xlane.xlu0 %659
  %v661 = vrcp.pop %v657
  %v662 = vrcp.pop %v660
  %v663 = vmul.f32 %v648, %v661
  %v664 = vmul.f32 %v650, %v661
  %v665 = vmul.f32 %v652, %v662
  %v666 = vmul.f32 %v654, %v662
  %v667 = vpack.c.bf16 %v665, %v663
  %v668 = vpack.c.bf16 %v666, %v664
  %v669 = vld [vmem:[%s4] sm:$0xf]
  %v670 = vld [vmem:[%s4 + $0x4] sm:$0xf]
  %v671 = vld [vmem:[%s4 + $0x8] sm:$0xf]
  %v672 = vld [vmem:[%s4 + $0xc] sm:$0xf]
  %v673 = vld [vmem:[%s4 + $0x10] sm:$0xf]
  %v674 = vld [vmem:[%s4 + $0x14] sm:$0xf]
  %v675 = vld [vmem:[%s4 + $0x18] sm:$0xf]
  %v676 = vld [vmem:[%s4 + $0x1c] sm:$0xf]
  %v677 = vld [vmem:[%s4 + $0x20] sm:$0xf]
  %v678 = vld [vmem:[%s4 + $0x24] sm:$0xf]
  %v679 = vld [vmem:[%s4 + $0x28] sm:$0xf]
  %v680 = vld [vmem:[%s4 + $0x2c] sm:$0xf]
  %v681 = vld [vmem:[%s4 + $0x30] sm:$0xf]
  %v682 = vld [vmem:[%s4 + $0x34] sm:$0xf]
  %v683 = vld [vmem:[%s4 + $0x38] sm:$0xf]
  %v684 = vld [vmem:[%s4 + $0x3c] sm:$0xf]
  %v685 = vld [vmem:[%s4 + $0x40] sm:$0xf]
  %v686 = vld [vmem:[%s4 + $0x44] sm:$0xf]
  %v687 = vld [vmem:[%s4 + $0x48] sm:$0xf]
  %v688 = vld [vmem:[%s4 + $0x4c] sm:$0xf]
  %v689 = vld [vmem:[%s4 + $0x50] sm:$0xf]
  %v690 = vld [vmem:[%s4 + $0x54] sm:$0xf]
  %v691 = vld [vmem:[%s4 + $0x58] sm:$0xf]
  %v692 = vld [vmem:[%s4 + $0x5c] sm:$0xf]
  %v693 = vld [vmem:[%s4 + $0x60] sm:$0xf]
  %v694 = vld [vmem:[%s4 + $0x64] sm:$0xf]
  %v695 = vld [vmem:[%s4 + $0x68] sm:$0xf]
  %v696 = vld [vmem:[%s4 + $0x6c] sm:$0xf]
  %v697 = vld [vmem:[%s4 + $0x70] sm:$0xf]
  %v698 = vld [vmem:[%s4 + $0x74] sm:$0xf]
  %v699 = vld [vmem:[%s4 + $0x78] sm:$0xf]
  %v700 = vld [vmem:[%s4 + $0x7c] sm:$0xf]
  %v733 = vunpack.c.l.b16 %v669
  %v734 = vunpack.c.l.b16 %v670
  %v735 = vunpack.c.l.b16 %v671
  %v736 = vunpack.c.l.b16 %v672
  %v737 = vunpack.c.l.b16 %v673
  %v738 = vunpack.c.l.b16 %v674
  %v739 = vunpack.c.l.b16 %v675
  %v740 = vunpack.c.l.b16 %v676
  %v741 = vunpack.c.l.b16 %v677
  %v742 = vunpack.c.l.b16 %v678
  %v743 = vunpack.c.l.b16 %v679
  %v744 = vunpack.c.l.b16 %v680
  %v745 = vunpack.c.l.b16 %v681
  %v746 = vunpack.c.l.b16 %v682
  %v747 = vunpack.c.l.b16 %v683
  %v748 = vunpack.c.l.b16 %v684
  %v749 = vunpack.c.l.b16 %v685
  %v750 = vunpack.c.l.b16 %v686
  %v751 = vunpack.c.l.b16 %v687
  %v752 = vunpack.c.l.b16 %v688
  %v753 = vunpack.c.l.b16 %v689
  %v754 = vunpack.c.l.b16 %v690
  %v755 = vunpack.c.l.b16 %v691
  %v756 = vunpack.c.l.b16 %v692
  %v757 = vunpack.c.l.b16 %v693
  %v758 = vunpack.c.l.b16 %v694
  %v759 = vunpack.c.l.b16 %v695
  %v760 = vunpack.c.l.b16 %v696
  %v761 = vunpack.c.l.b16 %v697
  %v762 = vunpack.c.l.b16 %v698
  %v763 = vunpack.c.l.b16 %v699
  %v764 = vunpack.c.l.b16 %v700
  %v765 = vpack.c.b16 %v734, %v733
  %v766 = vpack.c.b16 %v736, %v735
  %v767 = vpack.c.b16 %v738, %v737
  %v768 = vpack.c.b16 %v740, %v739
  %v769 = vpack.c.b16 %v742, %v741
  %v770 = vpack.c.b16 %v744, %v743
  %v771 = vpack.c.b16 %v746, %v745
  %v772 = vpack.c.b16 %v748, %v747
  %v773 = vpack.c.b16 %v750, %v749
  %v774 = vpack.c.b16 %v752, %v751
  %v775 = vpack.c.b16 %v754, %v753
  %v776 = vpack.c.b16 %v756, %v755
  %v777 = vpack.c.b16 %v758, %v757
  %v778 = vpack.c.b16 %v760, %v759
  %v779 = vpack.c.b16 %v762, %v761
  %v780 = vpack.c.b16 %v764, %v763
  %797 = vmatprep.subr.bf16.mxu0 0
  %798 = vmatpush1.bf16.msra.mxu0 %v772
  %799 = vmatprep.subr.bf16.mxu0 0
  %800 = vmatpush1.bf16.msra.mxu0 %v771
  %801 = vmatprep.subr.bf16.mxu0 0
  %802 = vmatpush1.bf16.msra.mxu0 %v770
  %803 = vmatprep.subr.bf16.mxu0 0
  %804 = vmatpush1.bf16.msra.mxu0 %v769
  %805 = vmatprep.subr.bf16.mxu0 0
  %806 = vmatpush1.bf16.msra.mxu0 %v768
  %807 = vmatprep.subr.bf16.mxu0 0
  %808 = vmatpush1.bf16.msra.mxu0 %v767
  %809 = vmatprep.subr.bf16.mxu0 0
  %810 = vmatpush1.bf16.msra.mxu0 %v766
  %811 = vmatprep.subr.bf16.mxu0 0
  %812 = vmatpush1.bf16.msra.mxu0 %v765
  %813 = vmatprep.subr.bf16.mxu0 0
  %814 = vmatpush2.bf16.msra.mxu0 %v780
  %815 = vmatprep.subr.bf16.mxu0 0
  %816 = vmatpush2.bf16.msra.mxu0 %v779
  %817 = vmatprep.subr.bf16.mxu0 0
  %818 = vmatpush2.bf16.msra.mxu0 %v778
  %819 = vmatprep.subr.bf16.mxu0 0
  %820 = vmatpush2.bf16.msra.mxu0 %v777
  %821 = vmatprep.subr.bf16.mxu0 0
  %822 = vmatpush2.bf16.msra.mxu0 %v776
  %823 = vmatprep.subr.bf16.mxu0 0
  %824 = vmatpush2.bf16.msra.mxu0 %v775
  %825 = vmatprep.subr.bf16.mxu0 0
  %826 = vmatpush2.bf16.msra.mxu0 %v774
  %827 = vmatprep.subr.bf16.mxu0 0
  %828 = vmatpush2.bf16.msra.mxu0 %v773
  %829 = vmatprep.mubr.bf16.mxu0 %v668
  %830 = vmatmul.mubr.bf16.gmra.mxu0 %v667
  %v831 = vpop.f32.mrf.mxu0
  %v832 = vadd.f32 0.0, %v831
  %v833 = vpop.f32.mrf.mxu0
  %v834 = vpop.f32.mrf.mxu0
  %v835 = vadd.f32 0.0, %v834
  %v836 = vpop.f32.mrf.mxu0
  %837 = vdwg.mxu0
  %s838 = scalar_lea.vmem %s3, 64
  %v839 = vld [vmem:[%s838] sm:$0xff]
  %v840 = vld [vmem:[%s838 + $0x8] sm:$0xff]
  %v841 = vld [vmem:[%s838 + $0x10] sm:$0xff]
  %v842 = vld [vmem:[%s838 + $0x18] sm:$0xff]
  %v843 = vld [vmem:[%s838 + $0x20] sm:$0xff]
  %v844 = vld [vmem:[%s838 + $0x28] sm:$0xff]
  %v845 = vld [vmem:[%s838 + $0x30] sm:$0xff]
  %v846 = vld [vmem:[%s838 + $0x38] sm:$0xff]
  %848 = vrot.lane.b32.xlu0 %v540, 64
  %v849 = vpop.permute.xlu0 %848
  %v858 = vunpack.c.l.b16 %v839
  %v859 = vunpack.c.h.b16 %v839
  %v860 = vunpack.c.l.b16 %v840
  %v861 = vunpack.c.h.b16 %v840
  %v862 = vunpack.c.l.b16 %v841
  %v863 = vunpack.c.h.b16 %v841
  %v864 = vunpack.c.l.b16 %v842
  %v865 = vunpack.c.h.b16 %v842
  %v866 = vunpack.c.l.b16 %v843
  %v867 = vunpack.c.h.b16 %v843
  %v868 = vunpack.c.l.b16 %v844
  %v869 = vunpack.c.h.b16 %v844
  %v870 = vunpack.c.l.b16 %v845
  %v871 = vunpack.c.h.b16 %v845
  %v872 = vunpack.c.l.b16 %v846
  %v873 = vunpack.c.h.b16 %v846
  %v874 = vpack.c.b16 %v860, %v858
  %v875 = vpack.c.b16 %v861, %v859
  %v876 = vpack.c.b16 %v864, %v862
  %v877 = vpack.c.b16 %v865, %v863
  %v878 = vpack.c.b16 %v868, %v866
  %v879 = vpack.c.b16 %v869, %v867
  %v880 = vpack.c.b16 %v872, %v870
  %v881 = vpack.c.b16 %v873, %v871
  %v891 = vsel %vm590, %v849, 0
  %893 = vmatprep.subr.bf16.mxu0 0
  %894 = vmatpush1.bf16.msra.mxu0 0
  %895 = vmatprep.subr.bf16.mxu0 0
  %896 = vmatpush1.bf16.msra.mxu0 0
  %897 = vmatprep.subr.bf16.mxu0 0
  %898 = vmatpush1.bf16.msra.mxu0 0
  %899 = vmatprep.subr.bf16.mxu0 0
  %900 = vmatpush1.bf16.msra.mxu0 0
  %901 = vmatprep.subr.bf16.mxu0 %v881
  %902 = vmatpush1.bf16.msra.mxu0 %v880
  %903 = vmatprep.subr.bf16.mxu0 %v879
  %904 = vmatpush1.bf16.msra.mxu0 %v878
  %905 = vmatprep.subr.bf16.mxu0 %v877
  %906 = vmatpush1.bf16.msra.mxu0 %v876
  %907 = vmatprep.subr.bf16.mxu0 %v875
  %908 = vmatpush1.bf16.msra.mxu0 %v874
  %909 = vmatprep.subr.bf16.mxu0 0
  %910 = vmatpush2.bf16.msra.mxu0 0
  %911 = vmatprep.subr.bf16.mxu0 0
  %912 = vmatpush2.bf16.msra.mxu0 0
  %913 = vmatprep.subr.bf16.mxu0 0
  %914 = vmatpush2.bf16.msra.mxu0 0
  %915 = vmatprep.subr.bf16.mxu0 0
  %916 = vmatpush2.bf16.msra.mxu0 0
  %917 = vmatprep.subr.bf16.mxu0 0
  %918 = vmatpush2.bf16.msra.mxu0 0
  %919 = vmatprep.subr.bf16.mxu0 0
  %920 = vmatpush2.bf16.msra.mxu0 0
  %921 = vmatprep.subr.bf16.mxu0 0
  %922 = vmatpush2.bf16.msra.mxu0 0
  %923 = vmatprep.subr.bf16.mxu0 0
  %924 = vmatpush2.bf16.msra.mxu0 0
  %925 = vmatprep.mubr.bf16.mxu0 0
  %926 = vmatmul.mubr.bf16.gmra.mxu0 %v891
  %v927 = vpop.f32.mrf.mxu0
  %v928 = vadd.f32 0.0, %v927
  %v929 = vpop.f32.mrf.mxu0
  %v930 = vadd.f32 0.0, %v929
  %v931 = vpop.f32.mrf.mxu0
  %v932 = vadd.f32 0.0, %v931
  %v933 = vpop.f32.mrf.mxu0
  %v934 = vadd.f32 0.0, %v933
  %935 = vdwg.mxu0
  %v936 = vmax.f32 %v928, %v930
  %937 = vmax.xlane.f32.xlu0 %v936
  %v938 = vpop.xlane.xlu0 %937
  %v939 = vmax.f32 %v932, %v934
  %940 = vmax.xlane.f32.xlu0 %v939
  %v941 = vpop.xlane.xlu0 %940
  %v942 = vsub.f32 %v928, %v938
  %v943 = vsub.f32 %v930, %v938
  %v944 = vsub.f32 %v932, %v941
  %v945 = vsub.f32 %v934, %v941
  %v946 = vmul.f32 %v942, 1.442695
  %v947 = vpow.pop %v946
  %v948 = vmul.f32 %v943, 1.442695
  %v949 = vpow.pop %v948
  %v950 = vmul.f32 %v944, 1.442695
  %v951 = vpow.pop %v950
  %v952 = vmul.f32 %v945, 1.442695
  %v953 = vpow.pop %v952
  %v954 = vadd.f32 %v947, %v949
  %955 = vadd.xlane.f32.xlu0 %v954
  %v956 = vpop.xlane.xlu0 %955
  %v957 = vadd.f32 %v951, %v953
  %958 = vadd.xlane.f32.xlu0 %v957
  %v959 = vpop.xlane.xlu0 %958
  %v960 = vrcp.pop %v956
  %v961 = vrcp.pop %v959
  %v962 = vmul.f32 %v947, %v960
  %v963 = vmul.f32 %v949, %v960
  %v964 = vmul.f32 %v951, %v961
  %v965 = vmul.f32 %v953, %v961
  %v966 = vpack.c.bf16 %v964, %v962
  %v967 = vpack.c.bf16 %v965, %v963
  %s968 = scalar_lea.vmem %s4, 128
  %v969 = vld [vmem:[%s968] sm:$0xf]
  %v970 = vld [vmem:[%s968 + $0x4] sm:$0xf]
  %v971 = vld [vmem:[%s968 + $0x8] sm:$0xf]
  %v972 = vld [vmem:[%s968 + $0xc] sm:$0xf]
  %v973 = vld [vmem:[%s968 + $0x10] sm:$0xf]
  %v974 = vld [vmem:[%s968 + $0x14] sm:$0xf]
  %v975 = vld [vmem:[%s968 + $0x18] sm:$0xf]
  %v976 = vld [vmem:[%s968 + $0x1c] sm:$0xf]
  %v977 = vld [vmem:[%s968 + $0x20] sm:$0xf]
  %v978 = vld [vmem:[%s968 + $0x24] sm:$0xf]
  %v979 = vld [vmem:[%s968 + $0x28] sm:$0xf]
  %v980 = vld [vmem:[%s968 + $0x2c] sm:$0xf]
  %v981 = vld [vmem:[%s968 + $0x30] sm:$0xf]
  %v982 = vld [vmem:[%s968 + $0x34] sm:$0xf]
  %v983 = vld [vmem:[%s968 + $0x38] sm:$0xf]
  %v984 = vld [vmem:[%s968 + $0x3c] sm:$0xf]
  %v985 = vld [vmem:[%s968 + $0x40] sm:$0xf]
  %v986 = vld [vmem:[%s968 + $0x44] sm:$0xf]
  %v987 = vld [vmem:[%s968 + $0x48] sm:$0xf]
  %v988 = vld [vmem:[%s968 + $0x4c] sm:$0xf]
  %v989 = vld [vmem:[%s968 + $0x50] sm:$0xf]
  %v990 = vld [vmem:[%s968 + $0x54] sm:$0xf]
  %v991 = vld [vmem:[%s968 + $0x58] sm:$0xf]
  %v992 = vld [vmem:[%s968 + $0x5c] sm:$0xf]
  %v993 = vld [vmem:[%s968 + $0x60] sm:$0xf]
  %v994 = vld [vmem:[%s968 + $0x64] sm:$0xf]
  %v995 = vld [vmem:[%s968 + $0x68] sm:$0xf]
  %v996 = vld [vmem:[%s968 + $0x6c] sm:$0xf]
  %v997 = vld [vmem:[%s968 + $0x70] sm:$0xf]
  %v998 = vld [vmem:[%s968 + $0x74] sm:$0xf]
  %v999 = vld [vmem:[%s968 + $0x78] sm:$0xf]
  %v1000 = vld [vmem:[%s968 + $0x7c] sm:$0xf]
  %v1033 = vunpack.c.l.b16 %v969
  %v1034 = vunpack.c.l.b16 %v970
  %v1035 = vunpack.c.l.b16 %v971
  %v1036 = vunpack.c.l.b16 %v972
  %v1037 = vunpack.c.l.b16 %v973
  %v1038 = vunpack.c.l.b16 %v974
  %v1039 = vunpack.c.l.b16 %v975
  %v1040 = vunpack.c.l.b16 %v976
  %v1041 = vunpack.c.l.b16 %v977
  %v1042 = vunpack.c.l.b16 %v978
  %v1043 = vunpack.c.l.b16 %v979
  %v1044 = vunpack.c.l.b16 %v980
  %v1045 = vunpack.c.l.b16 %v981
  %v1046 = vunpack.c.l.b16 %v982
  %v1047 = vunpack.c.l.b16 %v983
  %v1048 = vunpack.c.l.b16 %v984
  %v1049 = vunpack.c.l.b16 %v985
  %v1050 = vunpack.c.l.b16 %v986
  %v1051 = vunpack.c.l.b16 %v987
  %v1052 = vunpack.c.l.b16 %v988
  %v1053 = vunpack.c.l.b16 %v989
  %v1054 = vunpack.c.l.b16 %v990
  %v1055 = vunpack.c.l.b16 %v991
  %v1056 = vunpack.c.l.b16 %v992
  %v1057 = vunpack.c.l.b16 %v993
  %v1058 = vunpack.c.l.b16 %v994
  %v1059 = vunpack.c.l.b16 %v995
  %v1060 = vunpack.c.l.b16 %v996
  %v1061 = vunpack.c.l.b16 %v997
  %v1062 = vunpack.c.l.b16 %v998
  %v1063 = vunpack.c.l.b16 %v999
  %v1064 = vunpack.c.l.b16 %v1000
  %v1065 = vpack.c.b16 %v1034, %v1033
  %v1066 = vpack.c.b16 %v1036, %v1035
  %v1067 = vpack.c.b16 %v1038, %v1037
  %v1068 = vpack.c.b16 %v1040, %v1039
  %v1069 = vpack.c.b16 %v1042, %v1041
  %v1070 = vpack.c.b16 %v1044, %v1043
  %v1071 = vpack.c.b16 %v1046, %v1045
  %v1072 = vpack.c.b16 %v1048, %v1047
  %v1073 = vpack.c.b16 %v1050, %v1049
  %v1074 = vpack.c.b16 %v1052, %v1051
  %v1075 = vpack.c.b16 %v1054, %v1053
  %v1076 = vpack.c.b16 %v1056, %v1055
  %v1077 = vpack.c.b16 %v1058, %v1057
  %v1078 = vpack.c.b16 %v1060, %v1059
  %v1079 = vpack.c.b16 %v1062, %v1061
  %v1080 = vpack.c.b16 %v1064, %v1063
  %1097 = vmatprep.subr.bf16.mxu0 0
  %1098 = vmatpush1.bf16.msra.mxu0 %v1072
  %1099 = vmatprep.subr.bf16.mxu0 0
  %1100 = vmatpush1.bf16.msra.mxu0 %v1071
  %1101 = vmatprep.subr.bf16.mxu0 0
  %1102 = vmatpush1.bf16.msra.mxu0 %v1070
  %1103 = vmatprep.subr.bf16.mxu0 0
  %1104 = vmatpush1.bf16.msra.mxu0 %v1069
  %1105 = vmatprep.subr.bf16.mxu0 0
  %1106 = vmatpush1.bf16.msra.mxu0 %v1068
  %1107 = vmatprep.subr.bf16.mxu0 0
  %1108 = vmatpush1.bf16.msra.mxu0 %v1067
  %1109 = vmatprep.subr.bf16.mxu0 0
  %1110 = vmatpush1.bf16.msra.mxu0 %v1066
  %1111 = vmatprep.subr.bf16.mxu0 0
  %1112 = vmatpush1.bf16.msra.mxu0 %v1065
  %1113 = vmatprep.subr.bf16.mxu0 0
  %1114 = vmatpush2.bf16.msra.mxu0 %v1080
  %1115 = vmatprep.subr.bf16.mxu0 0
  %1116 = vmatpush2.bf16.msra.mxu0 %v1079
  %1117 = vmatprep.subr.bf16.mxu0 0
  %1118 = vmatpush2.bf16.msra.mxu0 %v1078
  %1119 = vmatprep.subr.bf16.mxu0 0
  %1120 = vmatpush2.bf16.msra.mxu0 %v1077
  %1121 = vmatprep.subr.bf16.mxu0 0
  %1122 = vmatpush2.bf16.msra.mxu0 %v1076
  %1123 = vmatprep.subr.bf16.mxu0 0
  %1124 = vmatpush2.bf16.msra.mxu0 %v1075
  %1125 = vmatprep.subr.bf16.mxu0 0
  %1126 = vmatpush2.bf16.msra.mxu0 %v1074
  %1127 = vmatprep.subr.bf16.mxu0 0
  %1128 = vmatpush2.bf16.msra.mxu0 %v1073
  %1129 = vmatprep.mubr.bf16.mxu0 %v967
  %1130 = vmatmul.mubr.bf16.gmra.mxu0 %v966
  %v1131 = vpop.f32.mrf.mxu0
  %v1132 = vadd.f32 0.0, %v1131
  %v1133 = vpop.f32.mrf.mxu0
  %v1134 = vpop.f32.mrf.mxu0
  %v1135 = vadd.f32 0.0, %v1134
  %v1136 = vpop.f32.mrf.mxu0
  %1137 = vdwg.mxu0
  %s1138 = scalar_lea.vmem %s3, 128
  %v1139 = vld [vmem:[%s1138] sm:$0xff]
  %v1140 = vld [vmem:[%s1138 + $0x8] sm:$0xff]
  %v1141 = vld [vmem:[%s1138 + $0x10] sm:$0xff]
  %v1142 = vld [vmem:[%s1138 + $0x18] sm:$0xff]
  %v1143 = vld [vmem:[%s1138 + $0x20] sm:$0xff]
  %v1144 = vld [vmem:[%s1138 + $0x28] sm:$0xff]
  %v1145 = vld [vmem:[%s1138 + $0x30] sm:$0xff]
  %v1146 = vld [vmem:[%s1138 + $0x38] sm:$0xff]
  %v1155 = vunpack.c.l.b16 %v1139
  %v1156 = vunpack.c.h.b16 %v1139
  %v1157 = vunpack.c.l.b16 %v1140
  %v1158 = vunpack.c.h.b16 %v1140
  %v1159 = vunpack.c.l.b16 %v1141
  %v1160 = vunpack.c.h.b16 %v1141
  %v1161 = vunpack.c.l.b16 %v1142
  %v1162 = vunpack.c.h.b16 %v1142
  %v1163 = vunpack.c.l.b16 %v1143
  %v1164 = vunpack.c.h.b16 %v1143
  %v1165 = vunpack.c.l.b16 %v1144
  %v1166 = vunpack.c.h.b16 %v1144
  %v1167 = vunpack.c.l.b16 %v1145
  %v1168 = vunpack.c.h.b16 %v1145
  %v1169 = vunpack.c.l.b16 %v1146
  %v1170 = vunpack.c.h.b16 %v1146
  %v1171 = vpack.c.b16 %v1157, %v1155
  %v1172 = vpack.c.b16 %v1158, %v1156
  %v1173 = vpack.c.b16 %v1161, %v1159
  %v1174 = vpack.c.b16 %v1162, %v1160
  %v1175 = vpack.c.b16 %v1165, %v1163
  %v1176 = vpack.c.b16 %v1166, %v1164
  %v1177 = vpack.c.b16 %v1169, %v1167
  %v1178 = vpack.c.b16 %v1170, %v1168
  %v1188 = vsel %vm590, %v541, 0
  %1190 = vmatprep.subr.bf16.mxu0 0
  %1191 = vmatpush1.bf16.msra.mxu0 0
  %1192 = vmatprep.subr.bf16.mxu0 0
  %1193 = vmatpush1.bf16.msra.mxu0 0
  %1194 = vmatprep.subr.bf16.mxu0 0
  %1195 = vmatpush1.bf16.msra.mxu0 0
  %1196 = vmatprep.subr.bf16.mxu0 0
  %1197 = vmatpush1.bf16.msra.mxu0 0
  %1198 = vmatprep.subr.bf16.mxu0 %v1178
  %1199 = vmatpush1.bf16.msra.mxu0 %v1177
  %1200 = vmatprep.subr.bf16.mxu0 %v1176
  %1201 = vmatpush1.bf16.msra.mxu0 %v1175
  %1202 = vmatprep.subr.bf16.mxu0 %v1174
  %1203 = vmatpush1.bf16.msra.mxu0 %v1173
  %1204 = vmatprep.subr.bf16.mxu0 %v1172
  %1205 = vmatpush1.bf16.msra.mxu0 %v1171
  %1206 = vmatprep.subr.bf16.mxu0 0
  %1207 = vmatpush2.bf16.msra.mxu0 0
  %1208 = vmatprep.subr.bf16.mxu0 0
  %1209 = vmatpush2.bf16.msra.mxu0 0
  %1210 = vmatprep.subr.bf16.mxu0 0
  %1211 = vmatpush2.bf16.msra.mxu0 0
  %1212 = vmatprep.subr.bf16.mxu0 0
  %1213 = vmatpush2.bf16.msra.mxu0 0
  %1214 = vmatprep.subr.bf16.mxu0 0
  %1215 = vmatpush2.bf16.msra.mxu0 0
  %1216 = vmatprep.subr.bf16.mxu0 0
  %1217 = vmatpush2.bf16.msra.mxu0 0
  %1218 = vmatprep.subr.bf16.mxu0 0
  %1219 = vmatpush2.bf16.msra.mxu0 0
  %1220 = vmatprep.subr.bf16.mxu0 0
  %1221 = vmatpush2.bf16.msra.mxu0 0
  %1222 = vmatprep.mubr.bf16.mxu0 0
  %1223 = vmatmul.mubr.bf16.gmra.mxu0 %v1188
  %v1224 = vpop.f32.mrf.mxu0
  %v1225 = vadd.f32 0.0, %v1224
  %v1226 = vpop.f32.mrf.mxu0
  %v1227 = vadd.f32 0.0, %v1226
  %v1228 = vpop.f32.mrf.mxu0
  %v1229 = vadd.f32 0.0, %v1228
  %v1230 = vpop.f32.mrf.mxu0
  %v1231 = vadd.f32 0.0, %v1230
  %1232 = vdwg.mxu0
  %v1233 = vmax.f32 %v1225, %v1227
  %1234 = vmax.xlane.f32.xlu0 %v1233
  %v1235 = vpop.xlane.xlu0 %1234
  %v1236 = vmax.f32 %v1229, %v1231
  %1237 = vmax.xlane.f32.xlu0 %v1236
  %v1238 = vpop.xlane.xlu0 %1237
  %v1239 = vsub.f32 %v1225, %v1235
  %v1240 = vsub.f32 %v1227, %v1235
  %v1241 = vsub.f32 %v1229, %v1238
  %v1242 = vsub.f32 %v1231, %v1238
  %v1243 = vmul.f32 %v1239, 1.442695
  %v1244 = vpow.pop %v1243
  %v1245 = vmul.f32 %v1240, 1.442695
  %v1246 = vpow.pop %v1245
  %v1247 = vmul.f32 %v1241, 1.442695
  %v1248 = vpow.pop %v1247
  %v1249 = vmul.f32 %v1242, 1.442695
  %v1250 = vpow.pop %v1249
  %v1251 = vadd.f32 %v1244, %v1246
  %1252 = vadd.xlane.f32.xlu0 %v1251
  %v1253 = vpop.xlane.xlu0 %1252
  %v1254 = vadd.f32 %v1248, %v1250
  %1255 = vadd.xlane.f32.xlu0 %v1254
  %v1256 = vpop.xlane.xlu0 %1255
  %v1257 = vrcp.pop %v1253
  %v1258 = vrcp.pop %v1256
  %v1259 = vmul.f32 %v1244, %v1257
  %v1260 = vmul.f32 %v1246, %v1257
  %v1261 = vmul.f32 %v1248, %v1258
  %v1262 = vmul.f32 %v1250, %v1258
  %v1263 = vpack.c.bf16 %v1261, %v1259
  %v1264 = vpack.c.bf16 %v1262, %v1260
  %s1265 = scalar_lea.vmem %s4, 256
  %v1266 = vld [vmem:[%s1265] sm:$0xf]
  %v1267 = vld [vmem:[%s1265 + $0x4] sm:$0xf]
  %v1268 = vld [vmem:[%s1265 + $0x8] sm:$0xf]
  %v1269 = vld [vmem:[%s1265 + $0xc] sm:$0xf]
  %v1270 = vld [vmem:[%s1265 + $0x10] sm:$0xf]
  %v1271 = vld [vmem:[%s1265 + $0x14] sm:$0xf]
  %v1272 = vld [vmem:[%s1265 + $0x18] sm:$0xf]
  %v1273 = vld [vmem:[%s1265 + $0x1c] sm:$0xf]
  %v1274 = vld [vmem:[%s1265 + $0x20] sm:$0xf]
  %v1275 = vld [vmem:[%s1265 + $0x24] sm:$0xf]
  %v1276 = vld [vmem:[%s1265 + $0x28] sm:$0xf]
  %v1277 = vld [vmem:[%s1265 + $0x2c] sm:$0xf]
  %v1278 = vld [vmem:[%s1265 + $0x30] sm:$0xf]
  %v1279 = vld [vmem:[%s1265 + $0x34] sm:$0xf]
  %v1280 = vld [vmem:[%s1265 + $0x38] sm:$0xf]
  %v1281 = vld [vmem:[%s1265 + $0x3c] sm:$0xf]
  %v1282 = vld [vmem:[%s1265 + $0x40] sm:$0xf]
  %v1283 = vld [vmem:[%s1265 + $0x44] sm:$0xf]
  %v1284 = vld [vmem:[%s1265 + $0x48] sm:$0xf]
  %v1285 = vld [vmem:[%s1265 + $0x4c] sm:$0xf]
  %v1286 = vld [vmem:[%s1265 + $0x50] sm:$0xf]
  %v1287 = vld [vmem:[%s1265 + $0x54] sm:$0xf]
  %v1288 = vld [vmem:[%s1265 + $0x58] sm:$0xf]
  %v1289 = vld [vmem:[%s1265 + $0x5c] sm:$0xf]
  %v1290 = vld [vmem:[%s1265 + $0x60] sm:$0xf]
  %v1291 = vld [vmem:[%s1265 + $0x64] sm:$0xf]
  %v1292 = vld [vmem:[%s1265 + $0x68] sm:$0xf]
  %v1293 = vld [vmem:[%s1265 + $0x6c] sm:$0xf]
  %v1294 = vld [vmem:[%s1265 + $0x70] sm:$0xf]
  %v1295 = vld [vmem:[%s1265 + $0x74] sm:$0xf]
  %v1296 = vld [vmem:[%s1265 + $0x78] sm:$0xf]
  %v1297 = vld [vmem:[%s1265 + $0x7c] sm:$0xf]
  %v1330 = vunpack.c.l.b16 %v1266
  %v1331 = vunpack.c.l.b16 %v1267
  %v1332 = vunpack.c.l.b16 %v1268
  %v1333 = vunpack.c.l.b16 %v1269
  %v1334 = vunpack.c.l.b16 %v1270
  %v1335 = vunpack.c.l.b16 %v1271
  %v1336 = vunpack.c.l.b16 %v1272
  %v1337 = vunpack.c.l.b16 %v1273
  %v1338 = vunpack.c.l.b16 %v1274
  %v1339 = vunpack.c.l.b16 %v1275
  %v1340 = vunpack.c.l.b16 %v1276
  %v1341 = vunpack.c.l.b16 %v1277
  %v1342 = vunpack.c.l.b16 %v1278
  %v1343 = vunpack.c.l.b16 %v1279
  %v1344 = vunpack.c.l.b16 %v1280
  %v1345 = vunpack.c.l.b16 %v1281
  %v1346 = vunpack.c.l.b16 %v1282
  %v1347 = vunpack.c.l.b16 %v1283
  %v1348 = vunpack.c.l.b16 %v1284
  %v1349 = vunpack.c.l.b16 %v1285
  %v1350 = vunpack.c.l.b16 %v1286
  %v1351 = vunpack.c.l.b16 %v1287
  %v1352 = vunpack.c.l.b16 %v1288
  %v1353 = vunpack.c.l.b16 %v1289
  %v1354 = vunpack.c.l.b16 %v1290
  %v1355 = vunpack.c.l.b16 %v1291
  %v1356 = vunpack.c.l.b16 %v1292
  %v1357 = vunpack.c.l.b16 %v1293
  %v1358 = vunpack.c.l.b16 %v1294
  %v1359 = vunpack.c.l.b16 %v1295
  %v1360 = vunpack.c.l.b16 %v1296
  %v1361 = vunpack.c.l.b16 %v1297
  %v1362 = vpack.c.b16 %v1331, %v1330
  %v1363 = vpack.c.b16 %v1333, %v1332
  %v1364 = vpack.c.b16 %v1335, %v1334
  %v1365 = vpack.c.b16 %v1337, %v1336
  %v1366 = vpack.c.b16 %v1339, %v1338
  %v1367 = vpack.c.b16 %v1341, %v1340
  %v1368 = vpack.c.b16 %v1343, %v1342
  %v1369 = vpack.c.b16 %v1345, %v1344
  %v1370 = vpack.c.b16 %v1347, %v1346
  %v1371 = vpack.c.b16 %v1349, %v1348
  %v1372 = vpack.c.b16 %v1351, %v1350
  %v1373 = vpack.c.b16 %v1353, %v1352
  %v1374 = vpack.c.b16 %v1355, %v1354
  %v1375 = vpack.c.b16 %v1357, %v1356
  %v1376 = vpack.c.b16 %v1359, %v1358
  %v1377 = vpack.c.b16 %v1361, %v1360
  %1394 = vmatprep.subr.bf16.mxu0 0
  %1395 = vmatpush1.bf16.msra.mxu0 %v1369
  %1396 = vmatprep.subr.bf16.mxu0 0
  %1397 = vmatpush1.bf16.msra.mxu0 %v1368
  %1398 = vmatprep.subr.bf16.mxu0 0
  %1399 = vmatpush1.bf16.msra.mxu0 %v1367
  %1400 = vmatprep.subr.bf16.mxu0 0
  %1401 = vmatpush1.bf16.msra.mxu0 %v1366
  %1402 = vmatprep.subr.bf16.mxu0 0
  %1403 = vmatpush1.bf16.msra.mxu0 %v1365
  %1404 = vmatprep.subr.bf16.mxu0 0
  %1405 = vmatpush1.bf16.msra.mxu0 %v1364
  %1406 = vmatprep.subr.bf16.mxu0 0
  %1407 = vmatpush1.bf16.msra.mxu0 %v1363
  %1408 = vmatprep.subr.bf16.mxu0 0
  %1409 = vmatpush1.bf16.msra.mxu0 %v1362
  %1410 = vmatprep.subr.bf16.mxu0 0
  %1411 = vmatpush2.bf16.msra.mxu0 %v1377
  %1412 = vmatprep.subr.bf16.mxu0 0
  %1413 = vmatpush2.bf16.msra.mxu0 %v1376
  %1414 = vmatprep.subr.bf16.mxu0 0
  %1415 = vmatpush2.bf16.msra.mxu0 %v1375
  %1416 = vmatprep.subr.bf16.mxu0 0
  %1417 = vmatpush2.bf16.msra.mxu0 %v1374
  %1418 = vmatprep.subr.bf16.mxu0 0
  %1419 = vmatpush2.bf16.msra.mxu0 %v1373
  %1420 = vmatprep.subr.bf16.mxu0 0
  %1421 = vmatpush2.bf16.msra.mxu0 %v1372
  %1422 = vmatprep.subr.bf16.mxu0 0
  %1423 = vmatpush2.bf16.msra.mxu0 %v1371
  %1424 = vmatprep.subr.bf16.mxu0 0
  %1425 = vmatpush2.bf16.msra.mxu0 %v1370
  %1426 = vmatprep.mubr.bf16.mxu0 %v1264
  %1427 = vmatmul.mubr.bf16.gmra.mxu0 %v1263
  %v1428 = vpop.f32.mrf.mxu0
  %v1429 = vadd.f32 0.0, %v1428
  %v1430 = vpop.f32.mrf.mxu0
  %v1431 = vpop.f32.mrf.mxu0
  %v1432 = vadd.f32 0.0, %v1431
  %v1433 = vpop.f32.mrf.mxu0
  %1434 = vdwg.mxu0
  %s1435 = scalar_lea.vmem %s3, 192
  %v1436 = vld [vmem:[%s1435] sm:$0xff]
  %v1437 = vld [vmem:[%s1435 + $0x8] sm:$0xff]
  %v1438 = vld [vmem:[%s1435 + $0x10] sm:$0xff]
  %v1439 = vld [vmem:[%s1435 + $0x18] sm:$0xff]
  %v1440 = vld [vmem:[%s1435 + $0x20] sm:$0xff]
  %v1441 = vld [vmem:[%s1435 + $0x28] sm:$0xff]
  %v1442 = vld [vmem:[%s1435 + $0x30] sm:$0xff]
  %v1443 = vld [vmem:[%s1435 + $0x38] sm:$0xff]
  %1445 = vrot.lane.b32.xlu0 %v541, 64
  %v1446 = vpop.permute.xlu0 %1445
  %v1455 = vunpack.c.l.b16 %v1436
  %v1456 = vunpack.c.h.b16 %v1436
  %v1457 = vunpack.c.l.b16 %v1437
  %v1458 = vunpack.c.h.b16 %v1437
  %v1459 = vunpack.c.l.b16 %v1438
  %v1460 = vunpack.c.h.b16 %v1438
  %v1461 = vunpack.c.l.b16 %v1439
  %v1462 = vunpack.c.h.b16 %v1439
  %v1463 = vunpack.c.l.b16 %v1440
  %v1464 = vunpack.c.h.b16 %v1440
  %v1465 = vunpack.c.l.b16 %v1441
  %v1466 = vunpack.c.h.b16 %v1441
  %v1467 = vunpack.c.l.b16 %v1442
  %v1468 = vunpack.c.h.b16 %v1442
  %v1469 = vunpack.c.l.b16 %v1443
  %v1470 = vunpack.c.h.b16 %v1443
  %v1471 = vpack.c.b16 %v1457, %v1455
  %v1472 = vpack.c.b16 %v1458, %v1456
  %v1473 = vpack.c.b16 %v1461, %v1459
  %v1474 = vpack.c.b16 %v1462, %v1460
  %v1475 = vpack.c.b16 %v1465, %v1463
  %v1476 = vpack.c.b16 %v1466, %v1464
  %v1477 = vpack.c.b16 %v1469, %v1467
  %v1478 = vpack.c.b16 %v1470, %v1468
  %v1488 = vsel %vm590, %v1446, 0
  %1490 = vmatprep.subr.bf16.mxu0 0
  %1491 = vmatpush1.bf16.msra.mxu0 0
  %1492 = vmatprep.subr.bf16.mxu0 0
  %1493 = vmatpush1.bf16.msra.mxu0 0
  %1494 = vmatprep.subr.bf16.mxu0 0
  %1495 = vmatpush1.bf16.msra.mxu0 0
  %1496 = vmatprep.subr.bf16.mxu0 0
  %1497 = vmatpush1.bf16.msra.mxu0 0
  %1498 = vmatprep.subr.bf16.mxu0 %v1478
  %1499 = vmatpush1.bf16.msra.mxu0 %v1477
  %1500 = vmatprep.subr.bf16.mxu0 %v1476
  %1501 = vmatpush1.bf16.msra.mxu0 %v1475
  %1502 = vmatprep.subr.bf16.mxu0 %v1474
  %1503 = vmatpush1.bf16.msra.mxu0 %v1473
  %1504 = vmatprep.subr.bf16.mxu0 %v1472
  %1505 = vmatpush1.bf16.msra.mxu0 %v1471
  %1506 = vmatprep.subr.bf16.mxu0 0
  %1507 = vmatpush2.bf16.msra.mxu0 0
  %1508 = vmatprep.subr.bf16.mxu0 0
  %1509 = vmatpush2.bf16.msra.mxu0 0
  %1510 = vmatprep.subr.bf16.mxu0 0
  %1511 = vmatpush2.bf16.msra.mxu0 0
  %1512 = vmatprep.subr.bf16.mxu0 0
  %1513 = vmatpush2.bf16.msra.mxu0 0
  %1514 = vmatprep.subr.bf16.mxu0 0
  %1515 = vmatpush2.bf16.msra.mxu0 0
  %1516 = vmatprep.subr.bf16.mxu0 0
  %1517 = vmatpush2.bf16.msra.mxu0 0
  %1518 = vmatprep.subr.bf16.mxu0 0
  %1519 = vmatpush2.bf16.msra.mxu0 0
  %1520 = vmatprep.subr.bf16.mxu0 0
  %1521 = vmatpush2.bf16.msra.mxu0 0
  %1522 = vmatprep.mubr.bf16.mxu0 0
  %1523 = vmatmul.mubr.bf16.gmra.mxu0 %v1488
  %v1524 = vpop.f32.mrf.mxu0
  %v1525 = vadd.f32 0.0, %v1524
  %v1526 = vpop.f32.mrf.mxu0
  %v1527 = vadd.f32 0.0, %v1526
  %v1528 = vpop.f32.mrf.mxu0
  %v1529 = vadd.f32 0.0, %v1528
  %v1530 = vpop.f32.mrf.mxu0
  %v1531 = vadd.f32 0.0, %v1530
  %1532 = vdwg.mxu0
  %v1533 = vmax.f32 %v1525, %v1527
  %1534 = vmax.xlane.f32.xlu0 %v1533
  %v1535 = vpop.xlane.xlu0 %1534
  %v1536 = vmax.f32 %v1529, %v1531
  %1537 = vmax.xlane.f32.xlu0 %v1536
  %v1538 = vpop.xlane.xlu0 %1537
  %v1539 = vsub.f32 %v1525, %v1535
  %v1540 = vsub.f32 %v1527, %v1535
  %v1541 = vsub.f32 %v1529, %v1538
  %v1542 = vsub.f32 %v1531, %v1538
  %v1543 = vmul.f32 %v1539, 1.442695
  %v1544 = vpow.pop %v1543
  %v1545 = vmul.f32 %v1540, 1.442695
  %v1546 = vpow.pop %v1545
  %v1547 = vmul.f32 %v1541, 1.442695
  %v1548 = vpow.pop %v1547
  %v1549 = vmul.f32 %v1542, 1.442695
  %v1550 = vpow.pop %v1549
  %v1551 = vadd.f32 %v1544, %v1546
  %1552 = vadd.xlane.f32.xlu0 %v1551
  %v1553 = vpop.xlane.xlu0 %1552
  %v1554 = vadd.f32 %v1548, %v1550
  %1555 = vadd.xlane.f32.xlu0 %v1554
  %v1556 = vpop.xlane.xlu0 %1555
  %v1557 = vrcp.pop %v1553
  %v1558 = vrcp.pop %v1556
  %v1559 = vmul.f32 %v1544, %v1557
  %v1560 = vmul.f32 %v1546, %v1557
  %v1561 = vmul.f32 %v1548, %v1558
  %v1562 = vmul.f32 %v1550, %v1558
  %v1563 = vpack.c.bf16 %v1561, %v1559
  %v1564 = vpack.c.bf16 %v1562, %v1560
  %s1565 = scalar_lea.vmem %s4, 384
  %v1566 = vld [vmem:[%s1565] sm:$0xf]
  %v1567 = vld [vmem:[%s1565 + $0x4] sm:$0xf]
  %v1568 = vld [vmem:[%s1565 + $0x8] sm:$0xf]
  %v1569 = vld [vmem:[%s1565 + $0xc] sm:$0xf]
  %v1570 = vld [vmem:[%s1565 + $0x10] sm:$0xf]
  %v1571 = vld [vmem:[%s1565 + $0x14] sm:$0xf]
  %v1572 = vld [vmem:[%s1565 + $0x18] sm:$0xf]
  %v1573 = vld [vmem:[%s1565 + $0x1c] sm:$0xf]
  %v1574 = vld [vmem:[%s1565 + $0x20] sm:$0xf]
  %v1575 = vld [vmem:[%s1565 + $0x24] sm:$0xf]
  %v1576 = vld [vmem:[%s1565 + $0x28] sm:$0xf]
  %v1577 = vld [vmem:[%s1565 + $0x2c] sm:$0xf]
  %v1578 = vld [vmem:[%s1565 + $0x30] sm:$0xf]
  %v1579 = vld [vmem:[%s1565 + $0x34] sm:$0xf]
  %v1580 = vld [vmem:[%s1565 + $0x38] sm:$0xf]
  %v1581 = vld [vmem:[%s1565 + $0x3c] sm:$0xf]
  %v1582 = vld [vmem:[%s1565 + $0x40] sm:$0xf]
  %v1583 = vld [vmem:[%s1565 + $0x44] sm:$0xf]
  %v1584 = vld [vmem:[%s1565 + $0x48] sm:$0xf]
  %v1585 = vld [vmem:[%s1565 + $0x4c] sm:$0xf]
  %v1586 = vld [vmem:[%s1565 + $0x50] sm:$0xf]
  %v1587 = vld [vmem:[%s1565 + $0x54] sm:$0xf]
  %v1588 = vld [vmem:[%s1565 + $0x58] sm:$0xf]
  %v1589 = vld [vmem:[%s1565 + $0x5c] sm:$0xf]
  %v1590 = vld [vmem:[%s1565 + $0x60] sm:$0xf]
  %v1591 = vld [vmem:[%s1565 + $0x64] sm:$0xf]
  %v1592 = vld [vmem:[%s1565 + $0x68] sm:$0xf]
  %v1593 = vld [vmem:[%s1565 + $0x6c] sm:$0xf]
  %v1594 = vld [vmem:[%s1565 + $0x70] sm:$0xf]
  %v1595 = vld [vmem:[%s1565 + $0x74] sm:$0xf]
  %v1596 = vld [vmem:[%s1565 + $0x78] sm:$0xf]
  %v1597 = vld [vmem:[%s1565 + $0x7c] sm:$0xf]
  %v1630 = vunpack.c.l.b16 %v1566
  %v1631 = vunpack.c.l.b16 %v1567
  %v1632 = vunpack.c.l.b16 %v1568
  %v1633 = vunpack.c.l.b16 %v1569
  %v1634 = vunpack.c.l.b16 %v1570
  %v1635 = vunpack.c.l.b16 %v1571
  %v1636 = vunpack.c.l.b16 %v1572
  %v1637 = vunpack.c.l.b16 %v1573
  %v1638 = vunpack.c.l.b16 %v1574
  %v1639 = vunpack.c.l.b16 %v1575
  %v1640 = vunpack.c.l.b16 %v1576
  %v1641 = vunpack.c.l.b16 %v1577
  %v1642 = vunpack.c.l.b16 %v1578
  %v1643 = vunpack.c.l.b16 %v1579
  %v1644 = vunpack.c.l.b16 %v1580
  %v1645 = vunpack.c.l.b16 %v1581
  %v1646 = vunpack.c.l.b16 %v1582
  %v1647 = vunpack.c.l.b16 %v1583
  %v1648 = vunpack.c.l.b16 %v1584
  %v1649 = vunpack.c.l.b16 %v1585
  %v1650 = vunpack.c.l.b16 %v1586
  %v1651 = vunpack.c.l.b16 %v1587
  %v1652 = vunpack.c.l.b16 %v1588
  %v1653 = vunpack.c.l.b16 %v1589
  %v1654 = vunpack.c.l.b16 %v1590
  %v1655 = vunpack.c.l.b16 %v1591
  %v1656 = vunpack.c.l.b16 %v1592
  %v1657 = vunpack.c.l.b16 %v1593
  %v1658 = vunpack.c.l.b16 %v1594
  %v1659 = vunpack.c.l.b16 %v1595
  %v1660 = vunpack.c.l.b16 %v1596
  %v1661 = vunpack.c.l.b16 %v1597
  %v1662 = vpack.c.b16 %v1631, %v1630
  %v1663 = vpack.c.b16 %v1633, %v1632
  %v1664 = vpack.c.b16 %v1635, %v1634
  %v1665 = vpack.c.b16 %v1637, %v1636
  %v1666 = vpack.c.b16 %v1639, %v1638
  %v1667 = vpack.c.b16 %v1641, %v1640
  %v1668 = vpack.c.b16 %v1643, %v1642
  %v1669 = vpack.c.b16 %v1645, %v1644
  %v1670 = vpack.c.b16 %v1647, %v1646
  %v1671 = vpack.c.b16 %v1649, %v1648
  %v1672 = vpack.c.b16 %v1651, %v1650
  %v1673 = vpack.c.b16 %v1653, %v1652
  %v1674 = vpack.c.b16 %v1655, %v1654
  %v1675 = vpack.c.b16 %v1657, %v1656
  %v1676 = vpack.c.b16 %v1659, %v1658
  %v1677 = vpack.c.b16 %v1661, %v1660
  %1694 = vmatprep.subr.bf16.mxu0 0
  %1695 = vmatpush1.bf16.msra.mxu0 %v1669
  %1696 = vmatprep.subr.bf16.mxu0 0
  %1697 = vmatpush1.bf16.msra.mxu0 %v1668
  %1698 = vmatprep.subr.bf16.mxu0 0
  %1699 = vmatpush1.bf16.msra.mxu0 %v1667
  %1700 = vmatprep.subr.bf16.mxu0 0
  %1701 = vmatpush1.bf16.msra.mxu0 %v1666
  %1702 = vmatprep.subr.bf16.mxu0 0
  %1703 = vmatpush1.bf16.msra.mxu0 %v1665
  %1704 = vmatprep.subr.bf16.mxu0 0
  %1705 = vmatpush1.bf16.msra.mxu0 %v1664
  %1706 = vmatprep.subr.bf16.mxu0 0
  %1707 = vmatpush1.bf16.msra.mxu0 %v1663
  %1708 = vmatprep.subr.bf16.mxu0 0
  %1709 = vmatpush1.bf16.msra.mxu0 %v1662
  %1710 = vmatprep.subr.bf16.mxu0 0
  %1711 = vmatpush2.bf16.msra.mxu0 %v1677
  %1712 = vmatprep.subr.bf16.mxu0 0
  %1713 = vmatpush2.bf16.msra.mxu0 %v1676
  %1714 = vmatprep.subr.bf16.mxu0 0
  %1715 = vmatpush2.bf16.msra.mxu0 %v1675
  %1716 = vmatprep.subr.bf16.mxu0 0
  %1717 = vmatpush2.bf16.msra.mxu0 %v1674
  %1718 = vmatprep.subr.bf16.mxu0 0
  %1719 = vmatpush2.bf16.msra.mxu0 %v1673
  %1720 = vmatprep.subr.bf16.mxu0 0
  %1721 = vmatpush2.bf16.msra.mxu0 %v1672
  %1722 = vmatprep.subr.bf16.mxu0 0
  %1723 = vmatpush2.bf16.msra.mxu0 %v1671
  %1724 = vmatprep.subr.bf16.mxu0 0
  %1725 = vmatpush2.bf16.msra.mxu0 %v1670
  %1726 = vmatprep.mubr.bf16.mxu0 %v1564
  %1727 = vmatmul.mubr.bf16.gmra.mxu0 %v1563
  %v1728 = vpop.f32.mrf.mxu0
  %v1729 = vadd.f32 0.0, %v1728
  %v1730 = vpop.f32.mrf.mxu0
  %v1731 = vpop.f32.mrf.mxu0
  %v1732 = vadd.f32 0.0, %v1731
  %v1733 = vpop.f32.mrf.mxu0
  %1734 = vdwg.mxu0
  %1737 = vrot.lane.b32.xlu0 %v1132, 64
  %v1738 = vpop.permute.xlu0 %1737
  %1739 = vrot.lane.b32.xlu0 %v1135, 64
  %v1740 = vpop.permute.xlu0 %1739
  %1745 = vrot.lane.b32.xlu0 %v1729, 64
  %v1746 = vpop.permute.xlu0 %1745
  %1747 = vrot.lane.b32.xlu0 %v1732, 64
  %v1748 = vpop.permute.xlu0 %1747
  %v1751 = vsel %vm590, %v832, %v1738
  %v1752 = vsel %vm590, %v835, %v1740
  %v1753 = vsel %vm590, %v1429, %v1746
  %v1754 = vsel %vm590, %v1432, %v1748
  %v1755 = vpack.c.bf16 %v1752, %v1751
  %v1756 = vpack.c.bf16 %v1754, %v1753
  %v1757 = vld [vmem:[%s9] sm:$0xf]
  %v1758 = vld [vmem:[%s9 + $0x4] sm:$0xf]
  %v1759 = vld [vmem:[%s9 + $0x8] sm:$0xf]
  %v1760 = vld [vmem:[%s9 + $0xc] sm:$0xf]
  %v1761 = vld [vmem:[%s9 + $0x10] sm:$0xf]
  %v1762 = vld [vmem:[%s9 + $0x14] sm:$0xf]
  %v1763 = vld [vmem:[%s9 + $0x18] sm:$0xf]
  %v1764 = vld [vmem:[%s9 + $0x1c] sm:$0xf]
  %v1765 = vld [vmem:[%s9 + $0x20] sm:$0xf]
  %v1766 = vld [vmem:[%s9 + $0x24] sm:$0xf]
  %v1767 = vld [vmem:[%s9 + $0x28] sm:$0xf]
  %v1768 = vld [vmem:[%s9 + $0x2c] sm:$0xf]
  %v1769 = vld [vmem:[%s9 + $0x30] sm:$0xf]
  %v1770 = vld [vmem:[%s9 + $0x34] sm:$0xf]
  %v1771 = vld [vmem:[%s9 + $0x38] sm:$0xf]
  %v1772 = vld [vmem:[%s9 + $0x3c] sm:$0xf]
  %v1773 = vld [vmem:[%s9 + $0x40] sm:$0xf]
  %v1774 = vld [vmem:[%s9 + $0x44] sm:$0xf]
  %v1775 = vld [vmem:[%s9 + $0x48] sm:$0xf]
  %v1776 = vld [vmem:[%s9 + $0x4c] sm:$0xf]
  %v1777 = vld [vmem:[%s9 + $0x50] sm:$0xf]
  %v1778 = vld [vmem:[%s9 + $0x54] sm:$0xf]
  %v1779 = vld [vmem:[%s9 + $0x58] sm:$0xf]
  %v1780 = vld [vmem:[%s9 + $0x5c] sm:$0xf]
  %v1781 = vld [vmem:[%s9 + $0x60] sm:$0xf]
  %v1782 = vld [vmem:[%s9 + $0x64] sm:$0xf]
  %v1783 = vld [vmem:[%s9 + $0x68] sm:$0xf]
  %v1784 = vld [vmem:[%s9 + $0x6c] sm:$0xf]
  %v1785 = vld [vmem:[%s9 + $0x70] sm:$0xf]
  %v1786 = vld [vmem:[%s9 + $0x74] sm:$0xf]
  %v1787 = vld [vmem:[%s9 + $0x78] sm:$0xf]
  %v1788 = vld [vmem:[%s9 + $0x7c] sm:$0xf]
  %v1789 = vld [vmem:[%s10] sm:$0x1]
  %v1791 = vlaneseq
  %v1792 = vshrl.u32 %v1791, 7
  %v1793 = vsub.s32 0, %v1792
  %v1794 = vrot.slane %v1789, %v1793
  %v1828 = vunpack.c.l.b16 %v1757
  %v1829 = vunpack.c.l.b16 %v1758
  %v1830 = vunpack.c.l.b16 %v1759
  %v1831 = vunpack.c.l.b16 %v1760
  %v1832 = vunpack.c.l.b16 %v1761
  %v1833 = vunpack.c.l.b16 %v1762
  %v1834 = vunpack.c.l.b16 %v1763
  %v1835 = vunpack.c.l.b16 %v1764
  %v1836 = vunpack.c.l.b16 %v1765
  %v1837 = vunpack.c.l.b16 %v1766
  %v1838 = vunpack.c.l.b16 %v1767
  %v1839 = vunpack.c.l.b16 %v1768
  %v1840 = vunpack.c.l.b16 %v1769
  %v1841 = vunpack.c.l.b16 %v1770
  %v1842 = vunpack.c.l.b16 %v1771
  %v1843 = vunpack.c.l.b16 %v1772
  %v1844 = vunpack.c.l.b16 %v1773
  %v1845 = vunpack.c.l.b16 %v1774
  %v1846 = vunpack.c.l.b16 %v1775
  %v1847 = vunpack.c.l.b16 %v1776
  %v1848 = vunpack.c.l.b16 %v1777
  %v1849 = vunpack.c.l.b16 %v1778
  %v1850 = vunpack.c.l.b16 %v1779
  %v1851 = vunpack.c.l.b16 %v1780
  %v1852 = vunpack.c.l.b16 %v1781
  %v1853 = vunpack.c.l.b16 %v1782
  %v1854 = vunpack.c.l.b16 %v1783
  %v1855 = vunpack.c.l.b16 %v1784
  %v1856 = vunpack.c.l.b16 %v1785
  %v1857 = vunpack.c.l.b16 %v1786
  %v1858 = vunpack.c.l.b16 %v1787
  %v1859 = vunpack.c.l.b16 %v1788
  %v1860 = vpack.c.b16 %v1829, %v1828
  %v1861 = vpack.c.b16 %v1831, %v1830
  %v1862 = vpack.c.b16 %v1833, %v1832
  %v1863 = vpack.c.b16 %v1835, %v1834
  %v1864 = vpack.c.b16 %v1837, %v1836
  %v1865 = vpack.c.b16 %v1839, %v1838
  %v1866 = vpack.c.b16 %v1841, %v1840
  %v1867 = vpack.c.b16 %v1843, %v1842
  %v1868 = vpack.c.b16 %v1845, %v1844
  %v1869 = vpack.c.b16 %v1847, %v1846
  %v1870 = vpack.c.b16 %v1849, %v1848
  %v1871 = vpack.c.b16 %v1851, %v1850
  %v1872 = vpack.c.b16 %v1853, %v1852
  %v1873 = vpack.c.b16 %v1855, %v1854
  %v1874 = vpack.c.b16 %v1857, %v1856
  %v1875 = vpack.c.b16 %v1859, %v1858
  %1892 = vmatprep.subr.bf16.mxu0 0
  %1893 = vmatpush1.bf16.msra.mxu0 %v1867
  %1894 = vmatprep.subr.bf16.mxu0 0
  %1895 = vmatpush1.bf16.msra.mxu0 %v1866
  %1896 = vmatprep.subr.bf16.mxu0 0
  %1897 = vmatpush1.bf16.msra.mxu0 %v1865
  %1898 = vmatprep.subr.bf16.mxu0 0
  %1899 = vmatpush1.bf16.msra.mxu0 %v1864
  %1900 = vmatprep.subr.bf16.mxu0 0
  %1901 = vmatpush1.bf16.msra.mxu0 %v1863
  %1902 = vmatprep.subr.bf16.mxu0 0
  %1903 = vmatpush1.bf16.msra.mxu0 %v1862
  %1904 = vmatprep.subr.bf16.mxu0 0
  %1905 = vmatpush1.bf16.msra.mxu0 %v1861
  %1906 = vmatprep.subr.bf16.mxu0 0
  %1907 = vmatpush1.bf16.msra.mxu0 %v1860
  %1908 = vmatprep.subr.bf16.mxu0 0
  %1909 = vmatpush2.bf16.msra.mxu0 %v1875
  %1910 = vmatprep.subr.bf16.mxu0 0
  %1911 = vmatpush2.bf16.msra.mxu0 %v1874
  %1912 = vmatprep.subr.bf16.mxu0 0
  %1913 = vmatpush2.bf16.msra.mxu0 %v1873
  %1914 = vmatprep.subr.bf16.mxu0 0
  %1915 = vmatpush2.bf16.msra.mxu0 %v1872
  %1916 = vmatprep.subr.bf16.mxu0 0
  %1917 = vmatpush2.bf16.msra.mxu0 %v1871
  %1918 = vmatprep.subr.bf16.mxu0 0
  %1919 = vmatpush2.bf16.msra.mxu0 %v1870
  %1920 = vmatprep.subr.bf16.mxu0 0
  %1921 = vmatpush2.bf16.msra.mxu0 %v1869
  %1922 = vmatprep.subr.bf16.mxu0 0
  %1923 = vmatpush2.bf16.msra.mxu0 %v1868
  %1924 = vmatprep.mubr.bf16.mxu0 %v1756
  %1925 = vmatmul.mubr.bf16.gmra.mxu0 %v1755
  %v1926 = vpop.f32.mrf.mxu0
  %v1927 = vadd.f32 %v1794, %v1926
  %v1928 = vpop.f32.mrf.mxu0
  %v1929 = vpop.f32.mrf.mxu0
  %v1930 = vadd.f32 %v1794, %v1929
  %v1931 = vpop.f32.mrf.mxu0
  %1932 = vdwg.mxu0
  %v1933 = vpack.c.bf16 %v1930, %v1927
  %v1934 = vld [vmem:[%s11] sm:$0xf]
  %v1935 = vld [vmem:[%s11 + $0x4] sm:$0xf]
  %v1936 = vld [vmem:[%s11 + $0x8] sm:$0xf]
  %v1937 = vld [vmem:[%s11 + $0xc] sm:$0xf]
  %v1938 = vld [vmem:[%s11 + $0x10] sm:$0xf]
  %v1939 = vld [vmem:[%s11 + $0x14] sm:$0xf]
  %v1940 = vld [vmem:[%s11 + $0x18] sm:$0xf]
  %v1941 = vld [vmem:[%s11 + $0x1c] sm:$0xf]
  %v1942 = vld [vmem:[%s11 + $0x20] sm:$0xf]
  %v1943 = vld [vmem:[%s11 + $0x24] sm:$0xf]
  %v1944 = vld [vmem:[%s11 + $0x28] sm:$0xf]
  %v1945 = vld [vmem:[%s11 + $0x2c] sm:$0xf]
  %v1946 = vld [vmem:[%s11 + $0x30] sm:$0xf]
  %v1947 = vld [vmem:[%s11 + $0x34] sm:$0xf]
  %v1948 = vld [vmem:[%s11 + $0x38] sm:$0xf]
  %v1949 = vld [vmem:[%s11 + $0x3c] sm:$0xf]
  %v1950 = vld [vmem:[%s1] sm:$0xf]
  %v1951 = vld [vmem:[%s1 + $0x4] sm:$0xf]
  %v1952 = vld [vmem:[%s12] sm:$0xf]
  %v1953 = vld [vmem:[%s12 + $0x4] sm:$0xf]
  %v1954 = vld [vmem:[%s12 + $0x8] sm:$0xf]
  %v1955 = vld [vmem:[%s12 + $0xc] sm:$0xf]
  %v1956 = vld [vmem:[%s12 + $0x10] sm:$0xf]
  %v1957 = vld [vmem:[%s12 + $0x14] sm:$0xf]
  %v1958 = vld [vmem:[%s12 + $0x18] sm:$0xf]
  %v1959 = vld [vmem:[%s12 + $0x1c] sm:$0xf]
  %v1960 = vld [vmem:[%s12 + $0x20] sm:$0xf]
  %v1961 = vld [vmem:[%s12 + $0x24] sm:$0xf]
  %v1962 = vld [vmem:[%s12 + $0x28] sm:$0xf]
  %v1963 = vld [vmem:[%s12 + $0x2c] sm:$0xf]
  %v1964 = vld [vmem:[%s12 + $0x30] sm:$0xf]
  %v1965 = vld [vmem:[%s12 + $0x34] sm:$0xf]
  %v1966 = vld [vmem:[%s12 + $0x38] sm:$0xf]
  %v1967 = vld [vmem:[%s12 + $0x3c] sm:$0xf]
  %v1970 = vunpack.c.l.b16 %v1950
  %v1971 = vunpack.c.l.b16 %v1951
  %v1972 = vpack.c.b16 %v1971, %v1970
  %v1990 = vunpack.c.l.b16 %v1952
  %v1991 = vunpack.c.l.b16 %v1953
  %v1992 = vunpack.c.l.b16 %v1954
  %v1993 = vunpack.c.l.b16 %v1955
  %v1994 = vunpack.c.l.b16 %v1956
  %v1995 = vunpack.c.l.b16 %v1957
  %v1996 = vunpack.c.l.b16 %v1958
  %v1997 = vunpack.c.l.b16 %v1959
  %v1998 = vunpack.c.l.b16 %v1960
  %v1999 = vunpack.c.l.b16 %v1961
  %v2000 = vunpack.c.l.b16 %v1962
  %v2001 = vunpack.c.l.b16 %v1963
  %v2002 = vunpack.c.l.b16 %v1964
  %v2003 = vunpack.c.l.b16 %v1965
  %v2004 = vunpack.c.l.b16 %v1966
  %v2005 = vunpack.c.l.b16 %v1967
  %v2006 = vpack.c.b16 %v1991, %v1990
  %v2007 = vpack.c.b16 %v1993, %v1992
  %v2008 = vpack.c.b16 %v1995, %v1994
  %v2009 = vpack.c.b16 %v1997, %v1996
  %v2010 = vpack.c.b16 %v1999, %v1998
  %v2011 = vpack.c.b16 %v2001, %v2000
  %v2012 = vpack.c.b16 %v2003, %v2002
  %v2013 = vpack.c.b16 %v2005, %v2004
  %2022 = vmatprep.subr.bf16.mxu0 0
  %2023 = vmatpush1.bf16.msra.mxu0 %v2013
  %2024 = vmatprep.subr.bf16.mxu0 0
  %2025 = vmatpush1.bf16.msra.mxu0 %v2012
  %2026 = vmatprep.subr.bf16.mxu0 0
  %2027 = vmatpush1.bf16.msra.mxu0 %v2011
  %2028 = vmatprep.subr.bf16.mxu0 0
  %2029 = vmatpush1.bf16.msra.mxu0 %v2010
  %2030 = vmatprep.subr.bf16.mxu0 0
  %2031 = vmatpush1.bf16.msra.mxu0 %v2009
  %2032 = vmatprep.subr.bf16.mxu0 0
  %2033 = vmatpush1.bf16.msra.mxu0 %v2008
  %2034 = vmatprep.subr.bf16.mxu0 0
  %2035 = vmatpush1.bf16.msra.mxu0 %v2007
  %2036 = vmatprep.subr.bf16.mxu0 0
  %2037 = vmatpush1.bf16.msra.mxu0 %v2006
  %2038 = vmatprep.subr.bf16.mxu0 0
  %2039 = vmatpush2.bf16.msra.mxu0 0
  %2040 = vmatprep.subr.bf16.mxu0 0
  %2041 = vmatpush2.bf16.msra.mxu0 0
  %2042 = vmatprep.subr.bf16.mxu0 0
  %2043 = vmatpush2.bf16.msra.mxu0 0
  %2044 = vmatprep.subr.bf16.mxu0 0
  %2045 = vmatpush2.bf16.msra.mxu0 0
  %2046 = vmatprep.subr.bf16.mxu0 0
  %2047 = vmatpush2.bf16.msra.mxu0 0
  %2048 = vmatprep.subr.bf16.mxu0 0
  %2049 = vmatpush2.bf16.msra.mxu0 0
  %2050 = vmatprep.subr.bf16.mxu0 0
  %2051 = vmatpush2.bf16.msra.mxu0 0
  %2052 = vmatprep.subr.bf16.mxu0 0
  %2053 = vmatpush2.bf16.msra.mxu0 0
  %2054 = vmatprep.mubr.bf16.mxu0 0
  %2055 = vmatmul.mubr.bf16.gmra.mxu0 %v1972
  %v2056 = vpop.f32.mrf.mxu0
  %v2057 = vadd.f32 0.0, %v2056
  %v2058 = vpop.f32.mrf.mxu0
  %v2059 = vpop.f32.mrf.mxu0
  %v2060 = vadd.f32 0.0, %v2059
  %v2061 = vpop.f32.mrf.mxu0
  %2062 = vdwg.mxu0
  %v2079 = vunpack.c.l.b16 %v1934
  %v2080 = vunpack.c.l.b16 %v1935
  %v2081 = vunpack.c.l.b16 %v1936
  %v2082 = vunpack.c.l.b16 %v1937
  %v2083 = vunpack.c.l.b16 %v1938
  %v2084 = vunpack.c.l.b16 %v1939
  %v2085 = vunpack.c.l.b16 %v1940
  %v2086 = vunpack.c.l.b16 %v1941
  %v2087 = vunpack.c.l.b16 %v1942
  %v2088 = vunpack.c.l.b16 %v1943
  %v2089 = vunpack.c.l.b16 %v1944
  %v2090 = vunpack.c.l.b16 %v1945
  %v2091 = vunpack.c.l.b16 %v1946
  %v2092 = vunpack.c.l.b16 %v1947
  %v2093 = vunpack.c.l.b16 %v1948
  %v2094 = vunpack.c.l.b16 %v1949
  %v2095 = vpack.c.b16 %v2080, %v2079
  %v2096 = vpack.c.b16 %v2082, %v2081
  %v2097 = vpack.c.b16 %v2084, %v2083
  %v2098 = vpack.c.b16 %v2086, %v2085
  %v2099 = vpack.c.b16 %v2088, %v2087
  %v2100 = vpack.c.b16 %v2090, %v2089
  %v2101 = vpack.c.b16 %v2092, %v2091
  %v2102 = vpack.c.b16 %v2094, %v2093
  %2111 = vmatprep.subr.bf16.mxu0 0
  %2112 = vmatpush1.bf16.msra.mxu0 %v2102
  %2113 = vmatprep.subr.bf16.mxu0 0
  %2114 = vmatpush1.bf16.msra.mxu0 %v2101
  %2115 = vmatprep.subr.bf16.mxu0 0
  %2116 = vmatpush1.bf16.msra.mxu0 %v2100
  %2117 = vmatprep.subr.bf16.mxu0 0
  %2118 = vmatpush1.bf16.msra.mxu0 %v2099
  %2119 = vmatprep.subr.bf16.mxu0 0
  %2120 = vmatpush1.bf16.msra.mxu0 %v2098
  %2121 = vmatprep.subr.bf16.mxu0 0
  %2122 = vmatpush1.bf16.msra.mxu0 %v2097
  %2123 = vmatprep.subr.bf16.mxu0 0
  %2124 = vmatpush1.bf16.msra.mxu0 %v2096
  %2125 = vmatprep.subr.bf16.mxu0 0
  %2126 = vmatpush1.bf16.msra.mxu0 %v2095
  %2127 = vmatprep.subr.bf16.mxu0 0
  %2128 = vmatpush2.bf16.msra.mxu0 0
  %2129 = vmatprep.subr.bf16.mxu0 0
  %2130 = vmatpush2.bf16.msra.mxu0 0
  %2131 = vmatprep.subr.bf16.mxu0 0
  %2132 = vmatpush2.bf16.msra.mxu0 0
  %2133 = vmatprep.subr.bf16.mxu0 0
  %2134 = vmatpush2.bf16.msra.mxu0 0
  %2135 = vmatprep.subr.bf16.mxu0 0
  %2136 = vmatpush2.bf16.msra.mxu0 0
  %2137 = vmatprep.subr.bf16.mxu0 0
  %2138 = vmatpush2.bf16.msra.mxu0 0
  %2139 = vmatprep.subr.bf16.mxu0 0
  %2140 = vmatpush2.bf16.msra.mxu0 0
  %2141 = vmatprep.subr.bf16.mxu0 0
  %2142 = vmatpush2.bf16.msra.mxu0 0
  %2143 = vmatprep.mubr.bf16.mxu0 0
  %2144 = vmatmul.mubr.bf16.gmra.mxu0 %v1933
  %v2145 = vpop.f32.mrf.mxu0
  %v2146 = vadd.f32 %v2057, %v2145
  %v2147 = vpop.f32.mrf.mxu0
  %v2148 = vpop.f32.mrf.mxu0
  %v2149 = vadd.f32 %v2060, %v2148
  %v2150 = vpop.f32.mrf.mxu0
  %2151 = vdwg.mxu0
  %v2152 = vld [vmem:[%s2] sm:$0xf]
  %v2153 = vld [vmem:[%s2 + $0x4] sm:$0xf]
  %v2154 = vld [vmem:[%s13] sm:$0xf]
  %v2155 = vld [vmem:[%s13 + $0x4] sm:$0xf]
  %v2156 = vld [vmem:[%s13 + $0x8] sm:$0xf]
  %v2157 = vld [vmem:[%s13 + $0xc] sm:$0xf]
  %v2158 = vld [vmem:[%s13 + $0x10] sm:$0xf]
  %v2159 = vld [vmem:[%s13 + $0x14] sm:$0xf]
  %v2160 = vld [vmem:[%s13 + $0x18] sm:$0x3]
  %v2163 = vunpack.c.l.b16 %v2152
  %v2164 = vunpack.c.l.b16 %v2153
  %v2165 = vpack.c.b16 %v2164, %v2163
  %v2173 = vunpack.c.l.b16 %v2154
  %v2174 = vunpack.c.l.b16 %v2155
  %v2175 = vunpack.c.l.b16 %v2156
  %v2176 = vunpack.c.l.b16 %v2157
  %v2177 = vunpack.c.l.b16 %v2158
  %v2178 = vunpack.c.l.b16 %v2159
  %v2179 = vunpack.c.l.b16 %v2160
  %v2180 = vpack.c.b16 %v2174, %v2173
  %v2181 = vpack.c.b16 %v2176, %v2175
  %v2182 = vpack.c.b16 %v2178, %v2177
  %v2183 = vpack.c.b16 %v2179, %v2179
  %vm2187 = vcmask 424960
  %v2189 = vsel %vm2187, %v2165, 0
  %v2192 = vsel %vm166, %v2183, 0
  %2194 = vmatprep.subr.bf16.mxu0 0
  %2195 = vmatpush1.bf16.msra.mxu0 0
  %2196 = vmatprep.subr.bf16.mxu0 0
  %2197 = vmatpush1.bf16.msra.mxu0 0
  %2198 = vmatprep.subr.bf16.mxu0 0
  %2199 = vmatpush1.bf16.msra.mxu0 0
  %2200 = vmatprep.subr.bf16.mxu0 0
  %2201 = vmatpush1.bf16.msra.mxu0 0
  %2202 = vmatprep.subr.bf16.mxu0 0
  %2203 = vmatpush1.bf16.msra.mxu0 %v2192
  %2204 = vmatprep.subr.bf16.mxu0 0
  %2205 = vmatpush1.bf16.msra.mxu0 %v2182
  %2206 = vmatprep.subr.bf16.mxu0 0
  %2207 = vmatpush1.bf16.msra.mxu0 %v2181
  %2208 = vmatprep.subr.bf16.mxu0 0
  %2209 = vmatpush1.bf16.msra.mxu0 %v2180
  %2210 = vmatprep.subr.bf16.mxu0 0
  %2211 = vmatpush2.bf16.msra.mxu0 0
  %2212 = vmatprep.subr.bf16.mxu0 0
  %2213 = vmatpush2.bf16.msra.mxu0 0
  %2214 = vmatprep.subr.bf16.mxu0 0
  %2215 = vmatpush2.bf16.msra.mxu0 0
  %2216 = vmatprep.subr.bf16.mxu0 0
  %2217 = vmatpush2.bf16.msra.mxu0 0
  %2218 = vmatprep.subr.bf16.mxu0 0
  %2219 = vmatpush2.bf16.msra.mxu0 0
  %2220 = vmatprep.subr.bf16.mxu0 0
  %2221 = vmatpush2.bf16.msra.mxu0 0
  %2222 = vmatprep.subr.bf16.mxu0 0
  %2223 = vmatpush2.bf16.msra.mxu0 0
  %2224 = vmatprep.subr.bf16.mxu0 0
  %2225 = vmatpush2.bf16.msra.mxu0 0
  %2226 = vmatprep.mubr.bf16.mxu0 0
  %2227 = vmatmul.mubr.bf16.gmra.mxu0 %v2189
  %v2228 = vpop.f32.mrf.mxu0
  %v2229 = vadd.f32 0.0, %v2228
  %v2230 = vpop.f32.mrf.mxu0
  %v2231 = vpop.f32.mrf.mxu0
  %v2232 = vadd.f32 0.0, %v2231
  %v2233 = vpop.f32.mrf.mxu0
  %2234 = vdwg.mxu0
  %v2235 = vadd.f32 %v2146, %v2229
  %v2236 = vadd.f32 %v2149, %v2232
  %v2237 = vld [vmem:[%s14] sm:$0x3]
  %v2239 = vsel %vm83, %v145, 0
  %v2242 = vsel %vm166, %v2237, 0
  %2244 = vmatprep.subr.bf16.mxu0 0
  %2245 = vmatpush1.bf16.msra.mxu0 0
  %2246 = vmatprep.subr.bf16.mxu0 0
  %2247 = vmatpush1.bf16.msra.mxu0 0
  %2248 = vmatprep.subr.bf16.mxu0 0
  %2249 = vmatpush1.bf16.msra.mxu0 0
  %2250 = vmatprep.subr.bf16.mxu0 0
  %2251 = vmatpush1.bf16.msra.mxu0 0
  %2252 = vmatprep.subr.bf16.mxu0 0
  %2253 = vmatpush1.bf16.msra.mxu0 0
  %2254 = vmatprep.subr.bf16.mxu0 0
  %2255 = vmatpush1.bf16.msra.mxu0 0
  %2256 = vmatprep.subr.bf16.mxu0 0
  %2257 = vmatpush1.bf16.msra.mxu0 0
  %2258 = vmatprep.subr.bf16.mxu0 0
  %2259 = vmatpush1.bf16.msra.mxu0 %v2242
  %2260 = vmatprep.subr.bf16.mxu0 0
  %2261 = vmatpush2.bf16.msra.mxu0 0
  %2262 = vmatprep.subr.bf16.mxu0 0
  %2263 = vmatpush2.bf16.msra.mxu0 0
  %2264 = vmatprep.subr.bf16.mxu0 0
  %2265 = vmatpush2.bf16.msra.mxu0 0
  %2266 = vmatprep.subr.bf16.mxu0 0
  %2267 = vmatpush2.bf16.msra.mxu0 0
  %2268 = vmatprep.subr.bf16.mxu0 0
  %2269 = vmatpush2.bf16.msra.mxu0 0
  %2270 = vmatprep.subr.bf16.mxu0 0
  %2271 = vmatpush2.bf16.msra.mxu0 0
  %2272 = vmatprep.subr.bf16.mxu0 0
  %2273 = vmatpush2.bf16.msra.mxu0 0
  %2274 = vmatprep.subr.bf16.mxu0 0
  %2275 = vmatpush2.bf16.msra.mxu0 0
  %2276 = vmatprep.mubr.bf16.mxu0 0
  %2277 = vmatmul.mubr.bf16.gmra.mxu0 %v2239
  %v2278 = vpop.f32.mrf.mxu0
  %v2279 = vadd.f32 0.0, %v2278
  %v2280 = vpop.f32.mrf.mxu0
  %v2281 = vpop.f32.mrf.mxu0
  %v2282 = vadd.f32 0.0, %v2281
  %v2283 = vpop.f32.mrf.mxu0
  %2284 = vdwg.mxu0
  %v2285 = vadd.f32 %v2235, %v2279
  %v2286 = vadd.f32 %v2236, %v2282
  %v2287 = vld [vmem:[%s15] sm:$0x1]
  %v2289 = vlaneseq
  %v2290 = vshrl.u32 %v2289, 7
  %v2291 = vsub.s32 0, %v2290
  %v2292 = vrot.slane %v2287, %v2291
  %v2294 = vadd.f32 %v2285, %v2292
  %v2295 = vadd.f32 %v2286, %v2292
  %v2296 = vpack.c.bf16 %v2295, %v2294
  %v2297 = vld [vmem:[%s16] sm:$0xf]
  %v2298 = vld [vmem:[%s16 + $0x4] sm:$0xf]
  %v2299 = vld [vmem:[%s16 + $0x8] sm:$0xf]
  %v2300 = vld [vmem:[%s16 + $0xc] sm:$0xf]
  %v2301 = vld [vmem:[%s17] sm:$0x1]
  %v2303 = vlaneseq
  %v2304 = vshrl.u32 %v2303, 7
  %v2305 = vsub.s32 0, %v2304
  %v2306 = vrot.slane %v2301, %v2305
  %v2312 = vunpack.c.l.b16 %v2297
  %v2313 = vunpack.c.l.b16 %v2298
  %v2314 = vunpack.c.l.b16 %v2299
  %v2315 = vunpack.c.l.b16 %v2300
  %v2316 = vpack.c.b16 %v2313, %v2312
  %v2317 = vpack.c.b16 %v2315, %v2314
  %v2321 = vsel %vm493, %v2296, 0
  %2323 = vmatprep.subr.bf16.mxu0 0
  %2324 = vmatpush1.bf16.msra.mxu0 0
  %2325 = vmatprep.subr.bf16.mxu0 0
  %2326 = vmatpush1.bf16.msra.mxu0 0
  %2327 = vmatprep.subr.bf16.mxu0 0
  %2328 = vmatpush1.bf16.msra.mxu0 0
  %2329 = vmatprep.subr.bf16.mxu0 0
  %2330 = vmatpush1.bf16.msra.mxu0 0
  %2331 = vmatprep.subr.bf16.mxu0 0
  %2332 = vmatpush1.bf16.msra.mxu0 0
  %2333 = vmatprep.subr.bf16.mxu0 0
  %2334 = vmatpush1.bf16.msra.mxu0 0
  %2335 = vmatprep.subr.bf16.mxu0 0
  %2336 = vmatpush1.bf16.msra.mxu0 %v2317
  %2337 = vmatprep.subr.bf16.mxu0 0
  %2338 = vmatpush1.bf16.msra.mxu0 %v2316
  %2339 = vmatprep.subr.bf16.mxu0 0
  %2340 = vmatpush2.bf16.msra.mxu0 0
  %2341 = vmatprep.subr.bf16.mxu0 0
  %2342 = vmatpush2.bf16.msra.mxu0 0
  %2343 = vmatprep.subr.bf16.mxu0 0
  %2344 = vmatpush2.bf16.msra.mxu0 0
  %2345 = vmatprep.subr.bf16.mxu0 0
  %2346 = vmatpush2.bf16.msra.mxu0 0
  %2347 = vmatprep.subr.bf16.mxu0 0
  %2348 = vmatpush2.bf16.msra.mxu0 0
  %2349 = vmatprep.subr.bf16.mxu0 0
  %2350 = vmatpush2.bf16.msra.mxu0 0
  %2351 = vmatprep.subr.bf16.mxu0 0
  %2352 = vmatpush2.bf16.msra.mxu0 0
  %2353 = vmatprep.subr.bf16.mxu0 0
  %2354 = vmatpush2.bf16.msra.mxu0 0
  %2355 = vmatprep.mubr.bf16.mxu0 0
  %2356 = vmatmul.mubr.bf16.gmra.mxu0 %v2321
  %v2357 = vpop.f32.mrf.mxu0
  %v2358 = vadd.f32 %v2306, %v2357
  %v2359 = vpop.f32.mrf.mxu0
  %v2360 = vpop.f32.mrf.mxu0
  %v2361 = vadd.f32 %v2306, %v2360
  %v2362 = vpop.f32.mrf.mxu0
  %2363 = vdwg.mxu0
  %v2364 = vpack.c.bf16 %v2361, %v2358
  %v2365 = vld [vmem:[%s18] sm:$0xff]
  %v2366 = vld [vmem:[%s18 + $0x8] sm:$0xff]
  %2368 = vrot.lane.b32.xlu0 %v2364, 96
  %v2369 = vpop.permute.xlu0 %2368
  %vm2370 = vcmask 64512
  %v2372 = vsel %vm2370, %v2364, 0
  %v2375 = vsel %vm2370, %v2369, 0
  %2377 = vmatprep.subr.bf16.mxu0 0
  %2378 = vmatpush1.bf16.xpose.msra.mxu0 0
  %2379 = vmatprep.subr.bf16.mxu0 0
  %2380 = vmatpush1.bf16.xpose.msra.mxu0 0
  %2381 = vmatprep.subr.bf16.mxu0 0
  %2382 = vmatpush1.bf16.xpose.msra.mxu0 0
  %2383 = vmatprep.subr.bf16.mxu0 0
  %2384 = vmatpush1.bf16.xpose.msra.mxu0 0
  %2385 = vmatprep.subr.bf16.mxu0 0
  %2386 = vmatpush1.bf16.xpose.msra.mxu0 0
  %2387 = vmatprep.subr.bf16.mxu0 0
  %2388 = vmatpush1.bf16.xpose.msra.mxu0 0
  %2389 = vmatprep.subr.bf16.mxu0 0
  %2390 = vmatpush1.bf16.xpose.msra.mxu0 0
  %2391 = vmatprep.subr.bf16.mxu0 0
  %2392 = vmatpush1.bf16.xpose.msra.mxu0 %v2375
  %2393 = vmatprep.subr.bf16.mxu0 0
  %2394 = vmatpush2.bf16.xpose.msra.mxu0 0
  %2395 = vmatprep.subr.bf16.mxu0 0
  %2396 = vmatpush2.bf16.xpose.msra.mxu0 0
  %2397 = vmatprep.subr.bf16.mxu0 0
  %2398 = vmatpush2.bf16.xpose.msra.mxu0 0
  %2399 = vmatprep.subr.bf16.mxu0 0
  %2400 = vmatpush2.bf16.xpose.msra.mxu0 0
  %2401 = vmatprep.subr.bf16.mxu0 0
  %2402 = vmatpush2.bf16.xpose.msra.mxu0 0
  %2403 = vmatprep.subr.bf16.mxu0 0
  %2404 = vmatpush2.bf16.xpose.msra.mxu0 0
  %2405 = vmatprep.subr.bf16.mxu0 0
  %2406 = vmatpush2.bf16.xpose.msra.mxu0 0
  %2407 = vmatprep.subr.bf16.mxu0 0
  %2408 = vmatpush2.bf16.xpose.msra.mxu0 0
  %2409 = vmatprep.mubr.bf16.mxu0 0
  %2410 = vmatmul.mubr.bf16.gmra.mxu0 %v2372
  %v2411 = vpop.f32.mrf.mxu0
  %v2412 = vadd.f32 %v2365, %v2411
  %v2413 = vpop.f32.mrf.mxu0
  %v2414 = vpop.f32.mrf.mxu0
  %v2415 = vadd.f32 %v2366, %v2414
  %v2416 = vpop.f32.mrf.mxu0
  %2417 = vdwg.mxu0
  %v2418 = vsel %vm411, %v2412, -inf
  %2419 = vmax.xlane.f32.xlu0 %v2418
  %v2420 = vpop.xlane.xlu0 %2419
  %v2421 = vsel %vm411, %v2415, -inf
  %2422 = vmax.xlane.f32.xlu0 %v2421
  %v2423 = vpop.xlane.xlu0 %2422
  %v2424 = vsub.f32 %v2412, %v2420
  %v2425 = vsub.f32 %v2415, %v2423
  %v2426 = vmul.f32 %v2424, 1.442695
  %v2427 = vpow.pop %v2426
  %v2428 = vmul.f32 %v2425, 1.442695
  %v2429 = vpow.pop %v2428
  %v2430 = vsel %vm411, %v2427, 0.0
  %2431 = vadd.xlane.f32.xlu0 %v2430
  %v2432 = vpop.xlane.xlu0 %2431
  %v2433 = vsel %vm411, %v2429, 0.0
  %2434 = vadd.xlane.f32.xlu0 %v2433
  %v2435 = vpop.xlane.xlu0 %2434
  %v2436 = vrcp.pop %v2432
  %v2437 = vrcp.pop %v2435
  %v2438 = vmul.f32 %v2427, %v2436
  %v2439 = vmul.f32 %v2429, %v2437
  %v2440 = vpack.c.bf16 %v2439, %v2438
  %2441 = vrot.lane.b32.xlu0 %v2364, 64
  %v2442 = vpop.permute.xlu0 %2441
  %v2445 = vsel %vm411, %v2440, 0
  %2447 = vmatprep.subr.bf16.mxu0 0
  %2448 = vmatpush1.bf16.msra.mxu0 0
  %2449 = vmatprep.subr.bf16.mxu0 0
  %2450 = vmatpush1.bf16.msra.mxu0 0
  %2451 = vmatprep.subr.bf16.mxu0 0
  %2452 = vmatpush1.bf16.msra.mxu0 0
  %2453 = vmatprep.subr.bf16.mxu0 0
  %2454 = vmatpush1.bf16.msra.mxu0 0
  %2455 = vmatprep.subr.bf16.mxu0 0
  %2456 = vmatpush1.bf16.msra.mxu0 0
  %2457 = vmatprep.subr.bf16.mxu0 0
  %2458 = vmatpush1.bf16.msra.mxu0 0
  %2459 = vmatprep.subr.bf16.mxu0 0
  %2460 = vmatpush1.bf16.msra.mxu0 0
  %2461 = vmatprep.subr.bf16.mxu0 0
  %2462 = vmatpush1.bf16.msra.mxu0 %v2442
  %2463 = vmatprep.subr.bf16.mxu0 0
  %2464 = vmatpush2.bf16.msra.mxu0 0
  %2465 = vmatprep.subr.bf16.mxu0 0
  %2466 = vmatpush2.bf16.msra.mxu0 0
  %2467 = vmatprep.subr.bf16.mxu0 0
  %2468 = vmatpush2.bf16.msra.mxu0 0
  %2469 = vmatprep.subr.bf16.mxu0 0
  %2470 = vmatpush2.bf16.msra.mxu0 0
  %2471 = vmatprep.subr.bf16.mxu0 0
  %2472 = vmatpush2.bf16.msra.mxu0 0
  %2473 = vmatprep.subr.bf16.mxu0 0
  %2474 = vmatpush2.bf16.msra.mxu0 0
  %2475 = vmatprep.subr.bf16.mxu0 0
  %2476 = vmatpush2.bf16.msra.mxu0 0
  %2477 = vmatprep.subr.bf16.mxu0 0
  %2478 = vmatpush2.bf16.msra.mxu0 0
  %2479 = vmatprep.mubr.bf16.mxu0 0
  %2480 = vmatmul.mubr.bf16.gmra.mxu0 %v2445
  %v2481 = vpop.f32.mrf.mxu0
  %v2482 = vadd.f32 0.0, %v2481
  %v2483 = vpop.f32.mrf.mxu0
  %v2484 = vpop.f32.mrf.mxu0
  %v2485 = vadd.f32 0.0, %v2484
  %v2486 = vpop.f32.mrf.mxu0
  %2487 = vdwg.mxu0
  %2488 = vrot.lane.b32.xlu0 %v2364, 120
  %v2489 = vpop.permute.xlu0 %2488
  %2490 = vrot.lane.b32.xlu0 %v2364, 88
  %v2491 = vpop.permute.xlu0 %2490
  %v2493 = vsel %vm2370, %v2489, 0
  %v2496 = vsel %vm2370, %v2491, 0
  %2498 = vmatprep.subr.bf16.mxu0 0
  %2499 = vmatpush1.bf16.xpose.msra.mxu0 0
  %2500 = vmatprep.subr.bf16.mxu0 0
  %2501 = vmatpush1.bf16.xpose.msra.mxu0 0
  %2502 = vmatprep.subr.bf16.mxu0 0
  %2503 = vmatpush1.bf16.xpose.msra.mxu0 0
  %2504 = vmatprep.subr.bf16.mxu0 0
  %2505 = vmatpush1.bf16.xpose.msra.mxu0 0
  %2506 = vmatprep.subr.bf16.mxu0 0
  %2507 = vmatpush1.bf16.xpose.msra.mxu0 0
  %2508 = vmatprep.subr.bf16.mxu0 0
  %2509 = vmatpush1.bf16.xpose.msra.mxu0 0
  %2510 = vmatprep.subr.bf16.mxu0 0
  %2511 = vmatpush1.bf16.xpose.msra.mxu0 0
  %2512 = vmatprep.subr.bf16.mxu0 0
  %2513 = vmatpush1.bf16.xpose.msra.mxu0 %v2496
  %2514 = vmatprep.subr.bf16.mxu0 0
  %2515 = vmatpush2.bf16.xpose.msra.mxu0 0
  %2516 = vmatprep.subr.bf16.mxu0 0
  %2517 = vmatpush2.bf16.xpose.msra.mxu0 0
  %2518 = vmatprep.subr.bf16.mxu0 0
  %2519 = vmatpush2.bf16.xpose.msra.mxu0 0
  %2520 = vmatprep.subr.bf16.mxu0 0
  %2521 = vmatpush2.bf16.xpose.msra.mxu0 0
  %2522 = vmatprep.subr.bf16.mxu0 0
  %2523 = vmatpush2.bf16.xpose.msra.mxu0 0
  %2524 = vmatprep.subr.bf16.mxu0 0
  %2525 = vmatpush2.bf16.xpose.msra.mxu0 0
  %2526 = vmatprep.subr.bf16.mxu0 0
  %2527 = vmatpush2.bf16.xpose.msra.mxu0 0
  %2528 = vmatprep.subr.bf16.mxu0 0
  %2529 = vmatpush2.bf16.xpose.msra.mxu0 0
  %2530 = vmatprep.mubr.bf16.mxu0 0
  %2531 = vmatmul.mubr.bf16.gmra.mxu0 %v2493
  %v2532 = vpop.f32.mrf.mxu0
  %v2533 = vadd.f32 %v2365, %v2532
  %v2534 = vpop.f32.mrf.mxu0
  %v2535 = vpop.f32.mrf.mxu0
  %v2536 = vadd.f32 %v2366, %v2535
  %v2537 = vpop.f32.mrf.mxu0
  %2538 = vdwg.mxu0
  %v2539 = vsel %vm411, %v2533, -inf
  %2540 = vmax.xlane.f32.xlu0 %v2539
  %v2541 = vpop.xlane.xlu0 %2540
  %v2542 = vsel %vm411, %v2536, -inf
  %2543 = vmax.xlane.f32.xlu0 %v2542
  %v2544 = vpop.xlane.xlu0 %2543
  %v2545 = vsub.f32 %v2533, %v2541
  %v2546 = vsub.f32 %v2536, %v2544
  %v2547 = vmul.f32 %v2545, 1.442695
  %v2548 = vpow.pop %v2547
  %v2549 = vmul.f32 %v2546, 1.442695
  %v2550 = vpow.pop %v2549
  %v2551 = vsel %vm411, %v2548, 0.0
  %2552 = vadd.xlane.f32.xlu0 %v2551
  %v2553 = vpop.xlane.xlu0 %2552
  %v2554 = vsel %vm411, %v2550, 0.0
  %2555 = vadd.xlane.f32.xlu0 %v2554
  %v2556 = vpop.xlane.xlu0 %2555
  %v2557 = vrcp.pop %v2553
  %v2558 = vrcp.pop %v2556
  %v2559 = vmul.f32 %v2548, %v2557
  %v2560 = vmul.f32 %v2550, %v2558
  %v2561 = vpack.c.bf16 %v2560, %v2559
  %2562 = vrot.lane.b32.xlu0 %v2364, 56
  %v2563 = vpop.permute.xlu0 %2562
  %v2566 = vsel %vm411, %v2561, 0
  %2568 = vmatprep.subr.bf16.mxu0 0
  %2569 = vmatpush1.bf16.msra.mxu0 0
  %2570 = vmatprep.subr.bf16.mxu0 0
  %2571 = vmatpush1.bf16.msra.mxu0 0
  %2572 = vmatprep.subr.bf16.mxu0 0
  %2573 = vmatpush1.bf16.msra.mxu0 0
  %2574 = vmatprep.subr.bf16.mxu0 0
  %2575 = vmatpush1.bf16.msra.mxu0 0
  %2576 = vmatprep.subr.bf16.mxu0 0
  %2577 = vmatpush1.bf16.msra.mxu0 0
  %2578 = vmatprep.subr.bf16.mxu0 0
  %2579 = vmatpush1.bf16.msra.mxu0 0
  %2580 = vmatprep.subr.bf16.mxu0 0
  %2581 = vmatpush1.bf16.msra.mxu0 0
  %2582 = vmatprep.subr.bf16.mxu0 0
  %2583 = vmatpush1.bf16.msra.mxu0 %v2563
  %2584 = vmatprep.subr.bf16.mxu0 0
  %2585 = vmatpush2.bf16.msra.mxu0 0
  %2586 = vmatprep.subr.bf16.mxu0 0
  %2587 = vmatpush2.bf16.msra.mxu0 0
  %2588 = vmatprep.subr.bf16.mxu0 0
  %2589 = vmatpush2.bf16.msra.mxu0 0
  %2590 = vmatprep.subr.bf16.mxu0 0
  %2591 = vmatpush2.bf16.msra.mxu0 0
  %2592 = vmatprep.subr.bf16.mxu0 0
  %2593 = vmatpush2.bf16.msra.mxu0 0
  %2594 = vmatprep.subr.bf16.mxu0 0
  %2595 = vmatpush2.bf16.msra.mxu0 0
  %2596 = vmatprep.subr.bf16.mxu0 0
  %2597 = vmatpush2.bf16.msra.mxu0 0
  %2598 = vmatprep.subr.bf16.mxu0 0
  %2599 = vmatpush2.bf16.msra.mxu0 0
  %2600 = vmatprep.mubr.bf16.mxu0 0
  %2601 = vmatmul.mubr.bf16.gmra.mxu0 %v2566
  %v2602 = vpop.f32.mrf.mxu0
  %v2603 = vadd.f32 0.0, %v2602
  %v2604 = vpop.f32.mrf.mxu0
  %v2605 = vpop.f32.mrf.mxu0
  %v2606 = vadd.f32 0.0, %v2605
  %v2607 = vpop.f32.mrf.mxu0
  %2608 = vdwg.mxu0
  %2609 = vrot.lane.b32.xlu0 %v2364, 112
  %v2610 = vpop.permute.xlu0 %2609
  %2611 = vrot.lane.b32.xlu0 %v2364, 80
  %v2612 = vpop.permute.xlu0 %2611
  %v2614 = vsel %vm2370, %v2610, 0
  %v2617 = vsel %vm2370, %v2612, 0
  %2619 = vmatprep.subr.bf16.mxu0 0
  %2620 = vmatpush1.bf16.xpose.msra.mxu0 0
  %2621 = vmatprep.subr.bf16.mxu0 0
  %2622 = vmatpush1.bf16.xpose.msra.mxu0 0
  %2623 = vmatprep.subr.bf16.mxu0 0
  %2624 = vmatpush1.bf16.xpose.msra.mxu0 0
  %2625 = vmatprep.subr.bf16.mxu0 0
  %2626 = vmatpush1.bf16.xpose.msra.mxu0 0
  %2627 = vmatprep.subr.bf16.mxu0 0
  %2628 = vmatpush1.bf16.xpose.msra.mxu0 0
  %2629 = vmatprep.subr.bf16.mxu0 0
  %2630 = vmatpush1.bf16.xpose.msra.mxu0 0
  %2631 = vmatprep.subr.bf16.mxu0 0
  %2632 = vmatpush1.bf16.xpose.msra.mxu0 0
  %2633 = vmatprep.subr.bf16.mxu0 0
  %2634 = vmatpush1.bf16.xpose.msra.mxu0 %v2617
  %2635 = vmatprep.subr.bf16.mxu0 0
  %2636 = vmatpush2.bf16.xpose.msra.mxu0 0
  %2637 = vmatprep.subr.bf16.mxu0 0
  %2638 = vmatpush2.bf16.xpose.msra.mxu0 0
  %2639 = vmatprep.subr.bf16.mxu0 0
  %2640 = vmatpush2.bf16.xpose.msra.mxu0 0
  %2641 = vmatprep.subr.bf16.mxu0 0
  %2642 = vmatpush2.bf16.xpose.msra.mxu0 0
  %2643 = vmatprep.subr.bf16.mxu0 0
  %2644 = vmatpush2.bf16.xpose.msra.mxu0 0
  %2645 = vmatprep.subr.bf16.mxu0 0
  %2646 = vmatpush2.bf16.xpose.msra.mxu0 0
  %2647 = vmatprep.subr.bf16.mxu0 0
  %2648 = vmatpush2.bf16.xpose.msra.mxu0 0
  %2649 = vmatprep.subr.bf16.mxu0 0
  %2650 = vmatpush2.bf16.xpose.msra.mxu0 0
  %2651 = vmatprep.mubr.bf16.mxu0 0
  %2652 = vmatmul.mubr.bf16.gmra.mxu0 %v2614
  %v2653 = vpop.f32.mrf.mxu0
  %v2654 = vadd.f32 %v2365, %v2653
  %v2655 = vpop.f32.mrf.mxu0
  %v2656 = vpop.f32.mrf.mxu0
  %v2657 = vadd.f32 %v2366, %v2656
  %v2658 = vpop.f32.mrf.mxu0
  %2659 = vdwg.mxu0
  %v2660 = vsel %vm411, %v2654, -inf
  %2661 = vmax.xlane.f32.xlu0 %v2660
  %v2662 = vpop.xlane.xlu0 %2661
  %v2663 = vsel %vm411, %v2657, -inf
  %2664 = vmax.xlane.f32.xlu0 %v2663
  %v2665 = vpop.xlane.xlu0 %2664
  %v2666 = vsub.f32 %v2654, %v2662
  %v2667 = vsub.f32 %v2657, %v2665
  %v2668 = vmul.f32 %v2666, 1.442695
  %v2669 = vpow.pop %v2668
  %v2670 = vmul.f32 %v2667, 1.442695
  %v2671 = vpow.pop %v2670
  %v2672 = vsel %vm411, %v2669, 0.0
  %2673 = vadd.xlane.f32.xlu0 %v2672
  %v2674 = vpop.xlane.xlu0 %2673
  %v2675 = vsel %vm411, %v2671, 0.0
  %2676 = vadd.xlane.f32.xlu0 %v2675
  %v2677 = vpop.xlane.xlu0 %2676
  %v2678 = vrcp.pop %v2674
  %v2679 = vrcp.pop %v2677
  %v2680 = vmul.f32 %v2669, %v2678
  %v2681 = vmul.f32 %v2671, %v2679
  %v2682 = vpack.c.bf16 %v2681, %v2680
  %2683 = vrot.lane.b32.xlu0 %v2364, 48
  %v2684 = vpop.permute.xlu0 %2683
  %v2687 = vsel %vm411, %v2682, 0
  %2689 = vmatprep.subr.bf16.mxu0 0
  %2690 = vmatpush1.bf16.msra.mxu0 0
  %2691 = vmatprep.subr.bf16.mxu0 0
  %2692 = vmatpush1.bf16.msra.mxu0 0
  %2693 = vmatprep.subr.bf16.mxu0 0
  %2694 = vmatpush1.bf16.msra.mxu0 0
  %2695 = vmatprep.subr.bf16.mxu0 0
  %2696 = vmatpush1.bf16.msra.mxu0 0
  %2697 = vmatprep.subr.bf16.mxu0 0
  %2698 = vmatpush1.bf16.msra.mxu0 0
  %2699 = vmatprep.subr.bf16.mxu0 0
  %2700 = vmatpush1.bf16.msra.mxu0 0
  %2701 = vmatprep.subr.bf16.mxu0 0
  %2702 = vmatpush1.bf16.msra.mxu0 0
  %2703 = vmatprep.subr.bf16.mxu0 0
  %2704 = vmatpush1.bf16.msra.mxu0 %v2684
  %2705 = vmatprep.subr.bf16.mxu0 0
  %2706 = vmatpush2.bf16.msra.mxu0 0
  %2707 = vmatprep.subr.bf16.mxu0 0
  %2708 = vmatpush2.bf16.msra.mxu0 0
  %2709 = vmatprep.subr.bf16.mxu0 0
  %2710 = vmatpush2.bf16.msra.mxu0 0
  %2711 = vmatprep.subr.bf16.mxu0 0
  %2712 = vmatpush2.bf16.msra.mxu0 0
  %2713 = vmatprep.subr.bf16.mxu0 0
  %2714 = vmatpush2.bf16.msra.mxu0 0
  %2715 = vmatprep.subr.bf16.mxu0 0
  %2716 = vmatpush2.bf16.msra.mxu0 0
  %2717 = vmatprep.subr.bf16.mxu0 0
  %2718 = vmatpush2.bf16.msra.mxu0 0
  %2719 = vmatprep.subr.bf16.mxu0 0
  %2720 = vmatpush2.bf16.msra.mxu0 0
  %2721 = vmatprep.mubr.bf16.mxu0 0
  %2722 = vmatmul.mubr.bf16.gmra.mxu0 %v2687
  %v2723 = vpop.f32.mrf.mxu0
  %v2724 = vadd.f32 0.0, %v2723
  %v2725 = vpop.f32.mrf.mxu0
  %v2726 = vpop.f32.mrf.mxu0
  %v2727 = vadd.f32 0.0, %v2726
  %v2728 = vpop.f32.mrf.mxu0
  %2729 = vdwg.mxu0
  %2730 = vrot.lane.b32.xlu0 %v2364, 104
  %v2731 = vpop.permute.xlu0 %2730
  %2732 = vrot.lane.b32.xlu0 %v2364, 72
  %v2733 = vpop.permute.xlu0 %2732
  %v2735 = vsel %vm2370, %v2731, 0
  %v2738 = vsel %vm2370, %v2733, 0
  %2740 = vmatprep.subr.bf16.mxu0 0
  %2741 = vmatpush1.bf16.xpose.msra.mxu0 0
  %2742 = vmatprep.subr.bf16.mxu0 0
  %2743 = vmatpush1.bf16.xpose.msra.mxu0 0
  %2744 = vmatprep.subr.bf16.mxu0 0
  %2745 = vmatpush1.bf16.xpose.msra.mxu0 0
  %2746 = vmatprep.subr.bf16.mxu0 0
  %2747 = vmatpush1.bf16.xpose.msra.mxu0 0
  %2748 = vmatprep.subr.bf16.mxu0 0
  %2749 = vmatpush1.bf16.xpose.msra.mxu0 0
  %2750 = vmatprep.subr.bf16.mxu0 0
  %2751 = vmatpush1.bf16.xpose.msra.mxu0 0
  %2752 = vmatprep.subr.bf16.mxu0 0
  %2753 = vmatpush1.bf16.xpose.msra.mxu0 0
  %2754 = vmatprep.subr.bf16.mxu0 0
  %2755 = vmatpush1.bf16.xpose.msra.mxu0 %v2738
  %2756 = vmatprep.subr.bf16.mxu0 0
  %2757 = vmatpush2.bf16.xpose.msra.mxu0 0
  %2758 = vmatprep.subr.bf16.mxu0 0
  %2759 = vmatpush2.bf16.xpose.msra.mxu0 0
  %2760 = vmatprep.subr.bf16.mxu0 0
  %2761 = vmatpush2.bf16.xpose.msra.mxu0 0
  %2762 = vmatprep.subr.bf16.mxu0 0
  %2763 = vmatpush2.bf16.xpose.msra.mxu0 0
  %2764 = vmatprep.subr.bf16.mxu0 0
  %2765 = vmatpush2.bf16.xpose.msra.mxu0 0
  %2766 = vmatprep.subr.bf16.mxu0 0
  %2767 = vmatpush2.bf16.xpose.msra.mxu0 0
  %2768 = vmatprep.subr.bf16.mxu0 0
  %2769 = vmatpush2.bf16.xpose.msra.mxu0 0
  %2770 = vmatprep.subr.bf16.mxu0 0
  %2771 = vmatpush2.bf16.xpose.msra.mxu0 0
  %2772 = vmatprep.mubr.bf16.mxu0 0
  %2773 = vmatmul.mubr.bf16.gmra.mxu0 %v2735
  %v2774 = vpop.f32.mrf.mxu0
  %v2775 = vadd.f32 %v2365, %v2774
  %v2776 = vpop.f32.mrf.mxu0
  %v2777 = vpop.f32.mrf.mxu0
  %v2778 = vadd.f32 %v2366, %v2777
  %v2779 = vpop.f32.mrf.mxu0
  %2780 = vdwg.mxu0
  %v2781 = vsel %vm411, %v2775, -inf
  %2782 = vmax.xlane.f32.xlu0 %v2781
  %v2783 = vpop.xlane.xlu0 %2782
  %v2784 = vsel %vm411, %v2778, -inf
  %2785 = vmax.xlane.f32.xlu0 %v2784
  %v2786 = vpop.xlane.xlu0 %2785
  %v2787 = vsub.f32 %v2775, %v2783
  %v2788 = vsub.f32 %v2778, %v2786
  %v2789 = vmul.f32 %v2787, 1.442695
  %v2790 = vpow.pop %v2789
  %v2791 = vmul.f32 %v2788, 1.442695
  %v2792 = vpow.pop %v2791
  %v2793 = vsel %vm411, %v2790, 0.0
  %2794 = vadd.xlane.f32.xlu0 %v2793
  %v2795 = vpop.xlane.xlu0 %2794
  %v2796 = vsel %vm411, %v2792, 0.0
  %2797 = vadd.xlane.f32.xlu0 %v2796
  %v2798 = vpop.xlane.xlu0 %2797
  %v2799 = vrcp.pop %v2795
  %v2800 = vrcp.pop %v2798
  %v2801 = vmul.f32 %v2790, %v2799
  %v2802 = vmul.f32 %v2792, %v2800
  %v2803 = vpack.c.bf16 %v2802, %v2801
  %2804 = vrot.lane.b32.xlu0 %v2364, 40
  %v2805 = vpop.permute.xlu0 %2804
  %v2808 = vsel %vm411, %v2803, 0
  %2810 = vmatprep.subr.bf16.mxu0 0
  %2811 = vmatpush1.bf16.msra.mxu0 0
  %2812 = vmatprep.subr.bf16.mxu0 0
  %2813 = vmatpush1.bf16.msra.mxu0 0
  %2814 = vmatprep.subr.bf16.mxu0 0
  %2815 = vmatpush1.bf16.msra.mxu0 0
  %2816 = vmatprep.subr.bf16.mxu0 0
  %2817 = vmatpush1.bf16.msra.mxu0 0
  %2818 = vmatprep.subr.bf16.mxu0 0
  %2819 = vmatpush1.bf16.msra.mxu0 0
  %2820 = vmatprep.subr.bf16.mxu0 0
  %2821 = vmatpush1.bf16.msra.mxu0 0
  %2822 = vmatprep.subr.bf16.mxu0 0
  %2823 = vmatpush1.bf16.msra.mxu0 0
  %2824 = vmatprep.subr.bf16.mxu0 0
  %2825 = vmatpush1.bf16.msra.mxu0 %v2805
  %2826 = vmatprep.subr.bf16.mxu0 0
  %2827 = vmatpush2.bf16.msra.mxu0 0
  %2828 = vmatprep.subr.bf16.mxu0 0
  %2829 = vmatpush2.bf16.msra.mxu0 0
  %2830 = vmatprep.subr.bf16.mxu0 0
  %2831 = vmatpush2.bf16.msra.mxu0 0
  %2832 = vmatprep.subr.bf16.mxu0 0
  %2833 = vmatpush2.bf16.msra.mxu0 0
  %2834 = vmatprep.subr.bf16.mxu0 0
  %2835 = vmatpush2.bf16.msra.mxu0 0
  %2836 = vmatprep.subr.bf16.mxu0 0
  %2837 = vmatpush2.bf16.msra.mxu0 0
  %2838 = vmatprep.subr.bf16.mxu0 0
  %2839 = vmatpush2.bf16.msra.mxu0 0
  %2840 = vmatprep.subr.bf16.mxu0 0
  %2841 = vmatpush2.bf16.msra.mxu0 0
  %2842 = vmatprep.mubr.bf16.mxu0 0
  %2843 = vmatmul.mubr.bf16.gmra.mxu0 %v2808
  %v2844 = vpop.f32.mrf.mxu0
  %v2845 = vadd.f32 0.0, %v2844
  %v2846 = vpop.f32.mrf.mxu0
  %v2847 = vpop.f32.mrf.mxu0
  %v2848 = vadd.f32 0.0, %v2847
  %v2849 = vpop.f32.mrf.mxu0
  %2850 = vdwg.mxu0
  %2853 = vrot.lane.b32.xlu0 %v2603, 8
  %v2854 = vpop.permute.xlu0 %2853
  %2855 = vrot.lane.b32.xlu0 %v2606, 8
  %v2856 = vpop.permute.xlu0 %2855
  %2861 = vrot.lane.b32.xlu0 %v2724, 16
  %v2862 = vpop.permute.xlu0 %2861
  %2863 = vrot.lane.b32.xlu0 %v2727, 16
  %v2864 = vpop.permute.xlu0 %2863
  %2869 = vrot.lane.b32.xlu0 %v2845, 24
  %v2870 = vpop.permute.xlu0 %2869
  %2871 = vrot.lane.b32.xlu0 %v2848, 24
  %v2872 = vpop.permute.xlu0 %2871
  %v2875 = vsel %vm2370, %v2482, %v2854
  %v2876 = vsel %vm2370, %v2485, %v2856
  %v2877 = vsel %vm411, %v2875, %v2862
  %v2878 = vsel %vm411, %v2876, %v2864
  %vm2879 = vcmask 195584
  %v2880 = vsel %vm2879, %v2877, %v2870
  %v2881 = vsel %vm2879, %v2878, %v2872
  %v2882 = vpack.c.bf16 %v2881, %v2880
  %v2883 = vld [vmem:[%s19] sm:$0xf]
  %v2884 = vld [vmem:[%s19 + $0x4] sm:$0xf]
  %v2885 = vld [vmem:[%s19 + $0x8] sm:$0xf]
  %v2886 = vld [vmem:[%s19 + $0xc] sm:$0xf]
  %v2887 = vld [vmem:[%s20] sm:$0x1]
  %v2889 = vlaneseq
  %v2890 = vshrl.u32 %v2889, 7
  %v2891 = vsub.s32 0, %v2890
  %v2892 = vrot.slane %v2887, %v2891
  %v2898 = vunpack.c.l.b16 %v2883
  %v2899 = vunpack.c.l.b16 %v2884
  %v2900 = vunpack.c.l.b16 %v2885
  %v2901 = vunpack.c.l.b16 %v2886
  %v2902 = vpack.c.b16 %v2899, %v2898
  %v2903 = vpack.c.b16 %v2901, %v2900
  %v2907 = vsel %vm493, %v2882, 0
  %2909 = vmatprep.subr.bf16.mxu0 0
  %2910 = vmatpush1.bf16.msra.mxu0 0
  %2911 = vmatprep.subr.bf16.mxu0 0
  %2912 = vmatpush1.bf16.msra.mxu0 0
  %2913 = vmatprep.subr.bf16.mxu0 0
  %2914 = vmatpush1.bf16.msra.mxu0 0
  %2915 = vmatprep.subr.bf16.mxu0 0
  %2916 = vmatpush1.bf16.msra.mxu0 0
  %2917 = vmatprep.subr.bf16.mxu0 0
  %2918 = vmatpush1.bf16.msra.mxu0 0
  %2919 = vmatprep.subr.bf16.mxu0 0
  %2920 = vmatpush1.bf16.msra.mxu0 0
  %2921 = vmatprep.subr.bf16.mxu0 0
  %2922 = vmatpush1.bf16.msra.mxu0 %v2903
  %2923 = vmatprep.subr.bf16.mxu0 0
  %2924 = vmatpush1.bf16.msra.mxu0 %v2902
  %2925 = vmatprep.subr.bf16.mxu0 0
  %2926 = vmatpush2.bf16.msra.mxu0 0
  %2927 = vmatprep.subr.bf16.mxu0 0
  %2928 = vmatpush2.bf16.msra.mxu0 0
  %2929 = vmatprep.subr.bf16.mxu0 0
  %2930 = vmatpush2.bf16.msra.mxu0 0
  %2931 = vmatprep.subr.bf16.mxu0 0
  %2932 = vmatpush2.bf16.msra.mxu0 0
  %2933 = vmatprep.subr.bf16.mxu0 0
  %2934 = vmatpush2.bf16.msra.mxu0 0
  %2935 = vmatprep.subr.bf16.mxu0 0
  %2936 = vmatpush2.bf16.msra.mxu0 0
  %2937 = vmatprep.subr.bf16.mxu0 0
  %2938 = vmatpush2.bf16.msra.mxu0 0
  %2939 = vmatprep.subr.bf16.mxu0 0
  %2940 = vmatpush2.bf16.msra.mxu0 0
  %2941 = vmatprep.mubr.bf16.mxu0 0
  %2942 = vmatmul.mubr.bf16.gmra.mxu0 %v2907
  %v2943 = vpop.f32.mrf.mxu0
  %v2944 = vadd.f32 %v2892, %v2943
  %v2945 = vpop.f32.mrf.mxu0
  %v2946 = vpop.f32.mrf.mxu0
  %v2947 = vadd.f32 %v2892, %v2946
  %v2948 = vpop.f32.mrf.mxu0
  %2949 = vdwg.mxu0
  %v2950 = vadd.f32 %v2294, %v2944
  %v2951 = vadd.f32 %v2295, %v2947
  %v2952 = vsel %vm493, %v2950, 0.0
  %2953 = vadd.xlane.f32.xlu0 %v2952
  %v2954 = vpop.xlane.xlu0 %2953
  %v2955 = vsel %vm493, %v2951, 0.0
  %2956 = vadd.xlane.f32.xlu0 %v2955
  %v2957 = vpop.xlane.xlu0 %2956
  %v2958 = vrcp.pop 32.0
  %v2959 = vmul.f32 %v2954, %v2958
  %v2960 = vmul.f32 %v2957, %v2958
  %v2961 = vsub.f32 %v2950, %v2959
  %v2962 = vsub.f32 %v2951, %v2960
  %v2963 = vmul.f32 %v2961, %v2961
  %v2964 = vmul.f32 %v2962, %v2962
  %v2965 = vsel %vm493, %v2963, 0.0
  %2966 = vadd.xlane.f32.xlu0 %v2965
  %v2967 = vpop.xlane.xlu0 %2966
  %v2968 = vsel %vm493, %v2964, 0.0
  %2969 = vadd.xlane.f32.xlu0 %v2968
  %v2970 = vpop.xlane.xlu0 %2969
  %v2971 = vmul.f32 %v2967, %v2958
  %v2972 = vmul.f32 %v2970, %v2958
  %v2973 = vadd.f32 %v2971, 1e-05
  %v2974 = vadd.f32 %v2972, 1e-05
  %v2975 = vrsqrt.pop %v2973
  %v2976 = vrsqrt.pop %v2974
  %v2977 = vmul.f32 %v2961, %v2975
  %v2978 = vmul.f32 %v2962, %v2976
  %v2979 = vld [vmem:[%s21] sm:$0x1]
  %v2981 = vlaneseq
  %v2982 = vshrl.u32 %v2981, 7
  %v2983 = vsub.s32 0, %v2982
  %v2984 = vrot.slane %v2979, %v2983
  %v2986 = vmul.f32 %v2977, %v2984
  %v2987 = vmul.f32 %v2978, %v2984
  %v2988 = vld [vmem:[%s22] sm:$0x1]
  %v2990 = vlaneseq
  %v2991 = vshrl.u32 %v2990, 7
  %v2992 = vsub.s32 0, %v2991
  %v2993 = vrot.slane %v2988, %v2992
  %v2995 = vadd.f32 %v2986, %v2993
  %v2996 = vadd.f32 %v2987, %v2993
  %v2997 = vpack.c.bf16 %v2996, %v2995
  %v2998 = vld [vmem:[%s23] sm:$0xf]
  %v2999 = vld [vmem:[%s23 + $0x4] sm:$0xf]
  %v3000 = vld [vmem:[%s23 + $0x8] sm:$0xf]
  %v3001 = vld [vmem:[%s23 + $0xc] sm:$0xf]
  %v3002 = vld [vmem:[%s24] sm:$0x1]
  %v3004 = vlaneseq
  %v3005 = vshrl.u32 %v3004, 7
  %v3006 = vsub.s32 0, %v3005
  %v3007 = vrot.slane %v3002, %v3006
  %v3013 = vunpack.c.l.b16 %v2998
  %v3014 = vunpack.c.l.b16 %v2999
  %v3015 = vunpack.c.l.b16 %v3000
  %v3016 = vunpack.c.l.b16 %v3001
  %v3017 = vpack.c.b16 %v3014, %v3013
  %v3018 = vpack.c.b16 %v3016, %v3015
  %v3022 = vsel %vm493, %v2997, 0
  %3024 = vmatprep.subr.bf16.mxu0 0
  %3025 = vmatpush1.bf16.msra.mxu0 0
  %3026 = vmatprep.subr.bf16.mxu0 0
  %3027 = vmatpush1.bf16.msra.mxu0 0
  %3028 = vmatprep.subr.bf16.mxu0 0
  %3029 = vmatpush1.bf16.msra.mxu0 0
  %3030 = vmatprep.subr.bf16.mxu0 0
  %3031 = vmatpush1.bf16.msra.mxu0 0
  %3032 = vmatprep.subr.bf16.mxu0 0
  %3033 = vmatpush1.bf16.msra.mxu0 0
  %3034 = vmatprep.subr.bf16.mxu0 0
  %3035 = vmatpush1.bf16.msra.mxu0 0
  %3036 = vmatprep.subr.bf16.mxu0 0
  %3037 = vmatpush1.bf16.msra.mxu0 %v3018
  %3038 = vmatprep.subr.bf16.mxu0 0
  %3039 = vmatpush1.bf16.msra.mxu0 %v3017
  %3040 = vmatprep.subr.bf16.mxu0 0
  %3041 = vmatpush2.bf16.msra.mxu0 0
  %3042 = vmatprep.subr.bf16.mxu0 0
  %3043 = vmatpush2.bf16.msra.mxu0 0
  %3044 = vmatprep.subr.bf16.mxu0 0
  %3045 = vmatpush2.bf16.msra.mxu0 0
  %3046 = vmatprep.subr.bf16.mxu0 0
  %3047 = vmatpush2.bf16.msra.mxu0 0
  %3048 = vmatprep.subr.bf16.mxu0 0
  %3049 = vmatpush2.bf16.msra.mxu0 0
  %3050 = vmatprep.subr.bf16.mxu0 0
  %3051 = vmatpush2.bf16.msra.mxu0 0
  %3052 = vmatprep.subr.bf16.mxu0 0
  %3053 = vmatpush2.bf16.msra.mxu0 0
  %3054 = vmatprep.subr.bf16.mxu0 0
  %3055 = vmatpush2.bf16.msra.mxu0 0
  %3056 = vmatprep.mubr.bf16.mxu0 0
  %3057 = vmatmul.mubr.bf16.gmra.mxu0 %v3022
  %v3058 = vpop.f32.mrf.mxu0
  %v3059 = vadd.f32 %v3007, %v3058
  %v3060 = vpop.f32.mrf.mxu0
  %v3061 = vpop.f32.mrf.mxu0
  %v3062 = vadd.f32 %v3007, %v3061
  %v3063 = vpop.f32.mrf.mxu0
  %3064 = vdwg.mxu0
  %v3065 = vmul.f32 %v3059, %v110
  %v3066 = vmul.f32 %v3062, %v140
  %v3067 = vadd.f32 %v3065, %v92
  %v3068 = vadd.f32 %v3066, %v122
  %3069 = vst.msk [vmem:[%s25] sm:$0xff] %vm83, %v3067
  %3070 = vst.msk [vmem:[%s25 + $0x8] sm:$0xff] %vm83, %v3068
  // Predicated region
  $region102: #{model_forward.1} parent=0 // pred_check
    _
  $region103: #{model_forward.1} parent=0 // pred_check_branch
    %3072 = sbr.rel (0) target = $region105
  $region104: #{model_forward.1} parent=0 // pred_region
    _
  $region105: #{model_forward.1} parent=0 // pred_fallthru
    _
  // Predicated region
  $region106: #{model_forward.1} parent=0 // pred_check
    _
  $region107: #{model_forward.1} parent=0 // pred_check_branch
    %3074 = sbr.rel (0) target = $region109
  $region108: #{model_forward.1} parent=0 // pred_region
    _
  $region109: #{model_forward.1} parent=0 // pred_fallthru
    _

</llo_original>
